<compile_context>
chip_gen: v6e
topology: v6e:2x2x1
jax: 0.10.0
libtpu: 0.0.40
codegen_flags: <defaults>
</compile_context>

<pallas_src>
import functools

import jax
import jax.numpy as jnp
from jax.experimental import pallas as pl
from jax.experimental.pallas import tpu as pltpu

# nn_u.net = Linear(2,30) Tanh (Linear(30,30) Tanh)*6 Linear(30,1)
LAYER_DIMS = [2, 30, 30, 30, 30, 30, 30, 30, 1]   # 8 Linear layers
N_LAYERS = len(LAYER_DIMS) - 1
PAD = 32                                          # hidden-feature padding (sublanes)
XPAD = 8                                          # input-feature padding (sublanes)


def mlp_kernel(x_ref, w_ref, b_ref, o_ref):
    """x_ref: (8, tm)  w_ref: (8, 32, 32)  b_ref: (8, 32, 1)  o_ref: (1, tm).

    Activations live as [feature, batch] (batch on lanes), so tanh, bias adds
    and the final store are lane-dense; every layer runs on the MXU.
    """
    # ---- Layer 0 (2 -> 30): padded to K=8 on the MXU (weight cols 2..7 = 0) --
    h = jnp.dot(w_ref[0][:, :XPAD], x_ref[...],
                preferred_element_type=jnp.float32) + b_ref[0]
    h = jnp.tanh(h)

    # ---- Hidden layers 1..6 (30 -> 30) and final layer 7 (30 -> 1) ----------
    for l in range(1, N_LAYERS):
        h = jnp.dot(w_ref[l], h, preferred_element_type=jnp.float32) + b_ref[l]
        if l < N_LAYERS - 1:
            h = jnp.tanh(h)

    # Final layer has dout = 1 (row 0 of the padded 32-row result): store the
    # lane-dense (1, tm) block (unmasked vst).
    o_ref[...] = h[0:1, :].astype(o_ref.dtype)


def init_params(key):
    """Deterministic init matching PyTorch nn.Linear (U(-1/sqrt(fan_in), +))."""
    params = []
    for din, dout in zip(LAYER_DIMS[:-1], LAYER_DIMS[1:]):
        key, kw, kb = jax.random.split(key, 3)
        bound = 1.0 / jnp.sqrt(jnp.float32(din))
        w = jax.random.uniform(kw, (din, dout), jnp.float32, -bound, bound)
        b = jax.random.uniform(kb, (1, dout), jnp.float32, -bound, bound)
        params.append((w, b))
    return params


def pack_params(params):
    """Pack weights (transposed, zero-padded) and biases into two slabs.

    Zero-padding of both W and b keeps the padded feature rows exactly zero
    through every layer.
    """
    w_pack = jnp.zeros((N_LAYERS, PAD, PAD), jnp.float32)
    b_pack = jnp.zeros((N_LAYERS, PAD, 1), jnp.float32)
    for l, (w, b) in enumerate(params):
        din, dout = w.shape
        w_pack = w_pack.at[l, :dout, :din].set(w.T)       # (dout, din)
        b_pack = b_pack.at[l, :dout, 0].set(b.reshape(-1))
    return w_pack, b_pack


def _num_tensorcores():
    """2 on v7x (2 TCs/chip), 1 on v5e/v6e (and anything unknown)."""
    try:
        kind = jax.devices()[0].device_kind.lower()
    except Exception:
        return 1
    return 2 if "v7" in kind else 1


@functools.partial(jax.jit, static_argnames=("tm", "core_parallel"))
def _nn_u_pallas(x_fm, w_pack, b_pack, tm, core_parallel):
    """x_fm: (8, n_pad) feature-major input -> (1, n_pad) output."""
    n_pad = x_fm.shape[1]
    n_tiles = n_pad // tm

    # Advisory cost hint for the XLA scheduler.
    flops_per_pt = 2 * (XPAD * 30 + 6 * 30 * 30 + 30 * 1) + 8 * 30
    cost = pl.CostEstimate(
        flops=flops_per_pt * n_pad,
        transcendentals=7 * 30 * n_pad,                     # tanh
        bytes_accessed=(XPAD + 1) * 4 * n_pad + 4 * (w_pack.size + b_pack.size),
    )

    if n_tiles == 1:
        sem = ("arbitrary",)                                # single TC, 1 step
    elif core_parallel and hasattr(pltpu, "CORE_PARALLEL"):
        sem = (pltpu.CORE_PARALLEL,)                        # force 2-TC split (v7x)
    else:
        sem = ("parallel",)

    # TODO(synk): weight/bias specs could use pipeline_mode=pl.Buffered(1)
    # (constant index_map) to drop the second resident buffer; left default
    # for maximum lowering compatibility.
    return pl.pallas_call(
        mlp_kernel,
        out_shape=jax.ShapeDtypeStruct((1, n_pad), x_fm.dtype),
        grid=(n_tiles,),
        in_specs=[
            pl.BlockSpec((XPAD, tm), lambda i: (0, i)),                   # x
            pl.BlockSpec((N_LAYERS, PAD, PAD), lambda i: (0, 0, 0)),      # weights
            pl.BlockSpec((N_LAYERS, PAD, 1), lambda i: (0, 0, 0)),        # biases
        ],
        out_specs=pl.BlockSpec((1, tm), lambda i: (0, i)),
        compiler_params=pltpu.CompilerParams(dimension_semantics=sem),
        cost_estimate=cost,
    )(x_fm, w_pack, b_pack)


def nn_u_forward_feature_major(x_fm, w_pack, b_pack, tm=None):
    """Hot path: x_fm already (8, n_pad) feature-major (rows 2..7 zero).

    Returns the raw (1, n_pad) kernel output — no pre/post XLA dispatches.
    """
    n_pad = x_fm.shape[1]
    if tm is None:
        tm = n_pad // _num_tensorcores()
    return _nn_u_pallas(x_fm, w_pack, b_pack, tm, n_pad // tm > 1)


def nn_u_forward(x, params, tm=None):
    """Module-shaped API: x (N, 2) -> (N, 1). Pads/transposes around the kernel."""
    w_pack, b_pack = pack_params(params)
    N = x.shape[0]
    n_tiles = _num_tensorcores()
    if tm is None:
        tm = max(128, -(-N // (n_tiles * 128)) * 128)       # multiple of 128
    n_pad = -(-N // tm) * tm
    x_fm = jnp.zeros((XPAD, n_pad), x.dtype).at[:2, :N].set(x.T)
    out = _nn_u_pallas(x_fm, w_pack, b_pack, tm, n_pad // tm > 1)
    return out[0, :N, None]                                  # (N, 1)


def nn_u_reference(x, params):
    h = x
    for i, (w, b) in enumerate(params):
        h = h @ w + b
        if i < N_LAYERS - 1:
            h = jnp.tanh(h)
    return h


if __name__ == "__main__":
    key = jax.random.PRNGKey(0)
    kx, kp = jax.random.split(key)

    # Collocation points for the PINN; 1024 = 2 equal tiles of 512 on v7x, or
    # one 1024-wide tile on single-TC v5e/v6e.
    N = 1024

    params = init_params(kp)
    w_pack, b_pack = pack_params(params)

    # a1 is a registered nn.Parameter in the PyTorch module but is NOT used in
    # forward(); kept only for shape fidelity.
    # TODO(synk): a1 is unused in forward(), so it is not passed to the kernel.
    a1 = jnp.float32(1.0)
    _ = a1

    # Generate collocation points directly in the kernel's feature-major,
    # pre-padded layout (2 real feature rows + 6 zero rows, batch on lanes) so
    # the pallas_call is the only dispatch on the hot path.
    x_fm = jnp.zeros((XPAD, N), jnp.float32).at[:2].set(
        jax.random.normal(kx, (2, N), jnp.float32))

    out_fm = jax.block_until_ready(
        nn_u_forward_feature_major(x_fm, w_pack, b_pack))    # (1, N)

    # Also exercise the (N, 2) -> (N, 1) module-shaped API once.
    x_nd = x_fm[:2].T                                        # (N, 2)
    out_nd = jax.block_until_ready(nn_u_forward(x_nd, params))

    ref = nn_u_reference(x_nd, params)                       # (N, 1)
    assert out_fm.shape == (1, N)
    assert out_nd.shape == (N, 1)
    assert jnp.allclose(out_fm[0], ref[:, 0], atol=1e-4, rtol=1e-4)
    assert jnp.allclose(out_nd, ref, atol=1e-4, rtol=1e-4)

    print("KERNEL_OK")
</pallas_src>

<mosaic_0001>
module attributes {stable_mosaic.version = 11 : i64} {
  func.func @mlp_kernel(%arg0: i32, %arg1: memref<8x1024xf32, #tpu.memory_space<vmem>>, %arg2: memref<8x32x32xf32, #tpu.memory_space<vmem>>, %arg3: memref<8x32x1xf32, #tpu.memory_space<vmem>>, %arg4: memref<1x1024xf32, #tpu.memory_space<vmem>>) attributes {dimension_semantics = [#tpu.dimension_semantics<arbitrary>], iteration_bounds = array<i64: 1>, scalar_prefetch = 0 : i64, scratch_operands = 0 : i64, tpu.core_type = #tpu.core_type<tc>, window_params = [{transform_indices = @transform_0, window_bounds = array<i64: 8, 1024>}, {pipeline_mode = #tpu.pipeline_mode<synchronous>, transform_indices = @transform_1, window_bounds = array<i64: 8, 32, 32>}, {pipeline_mode = #tpu.pipeline_mode<synchronous>, transform_indices = @transform_2, window_bounds = array<i64: 8, 32, 1>}, {transform_indices = @transform_3, window_bounds = array<i64: 1, 1024>}]} {
    %c0 = arith.constant 0 : index
    %c0_0 = arith.constant 0 : index
    %c0_1 = arith.constant 0 : index
    %0 = vector.load %arg2[%c0, %c0_0, %c0_1] : memref<8x32x32xf32, #tpu.memory_space<vmem>>, vector<1x32x32xf32>
    %1 = vector.shape_cast %0 : vector<1x32x32xf32> to vector<32x32xf32>
    %2 = vector.extract_strided_slice %1 {offsets = [0, 0], sizes = [32, 8], strides = [1, 1]} : vector<32x32xf32> to vector<32x8xf32>
    %c0_2 = arith.constant 0 : index
    %c0_3 = arith.constant 0 : index
    %3 = vector.load %arg1[%c0_2, %c0_3] : memref<8x1024xf32, #tpu.memory_space<vmem>>, vector<8x1024xf32>
    %cst = arith.constant dense<0.000000e+00> : vector<32x1024xf32>
    %4 = tpu.matmul %2, %3, %cst {dimension_numbers = #tpu.dot_dimension_numbers<[1], [0], [0], [1], [0, 0, 1, 1], [], []>} : vector<32x8xf32>, vector<8x1024xf32>, vector<32x1024xf32> -> vector<32x1024xf32>
    %c0_4 = arith.constant 0 : index
    %c0_5 = arith.constant 0 : index
    %c0_6 = arith.constant 0 : index
    %5 = vector.load %arg3[%c0_4, %c0_5, %c0_6] : memref<8x32x1xf32, #tpu.memory_space<vmem>>, vector<1x32x1xf32>
    %6 = vector.shape_cast %5 : vector<1x32x1xf32> to vector<32x1xf32>
    %7 = vector.broadcast %6 : vector<32x1xf32> to vector<32x1024xf32>
    %8 = arith.addf %4, %7 : vector<32x1024xf32>
    %9 = math.tanh %8 : vector<32x1024xf32>
    %c1 = arith.constant 1 : index
    %c0_7 = arith.constant 0 : index
    %c0_8 = arith.constant 0 : index
    %10 = vector.load %arg2[%c1, %c0_7, %c0_8] : memref<8x32x32xf32, #tpu.memory_space<vmem>>, vector<1x32x32xf32>
    %11 = vector.shape_cast %10 : vector<1x32x32xf32> to vector<32x32xf32>
    %cst_9 = arith.constant dense<0.000000e+00> : vector<32x1024xf32>
    %12 = tpu.matmul %11, %9, %cst_9 {dimension_numbers = #tpu.dot_dimension_numbers<[1], [0], [0], [1], [0, 0, 1, 1], [], []>} : vector<32x32xf32>, vector<32x1024xf32>, vector<32x1024xf32> -> vector<32x1024xf32>
    %c1_10 = arith.constant 1 : index
    %c0_11 = arith.constant 0 : index
    %c0_12 = arith.constant 0 : index
    %13 = vector.load %arg3[%c1_10, %c0_11, %c0_12] : memref<8x32x1xf32, #tpu.memory_space<vmem>>, vector<1x32x1xf32>
    %14 = vector.shape_cast %13 : vector<1x32x1xf32> to vector<32x1xf32>
    %15 = vector.broadcast %14 : vector<32x1xf32> to vector<32x1024xf32>
    %16 = arith.addf %12, %15 : vector<32x1024xf32>
    %17 = math.tanh %16 : vector<32x1024xf32>
    %c2 = arith.constant 2 : index
    %c0_13 = arith.constant 0 : index
    %c0_14 = arith.constant 0 : index
    %18 = vector.load %arg2[%c2, %c0_13, %c0_14] : memref<8x32x32xf32, #tpu.memory_space<vmem>>, vector<1x32x32xf32>
    %19 = vector.shape_cast %18 : vector<1x32x32xf32> to vector<32x32xf32>
    %cst_15 = arith.constant dense<0.000000e+00> : vector<32x1024xf32>
    %20 = tpu.matmul %19, %17, %cst_15 {dimension_numbers = #tpu.dot_dimension_numbers<[1], [0], [0], [1], [0, 0, 1, 1], [], []>} : vector<32x32xf32>, vector<32x1024xf32>, vector<32x1024xf32> -> vector<32x1024xf32>
    %c2_16 = arith.constant 2 : index
    %c0_17 = arith.constant 0 : index
    %c0_18 = arith.constant 0 : index
    %21 = vector.load %arg3[%c2_16, %c0_17, %c0_18] : memref<8x32x1xf32, #tpu.memory_space<vmem>>, vector<1x32x1xf32>
    %22 = vector.shape_cast %21 : vector<1x32x1xf32> to vector<32x1xf32>
    %23 = vector.broadcast %22 : vector<32x1xf32> to vector<32x1024xf32>
    %24 = arith.addf %20, %23 : vector<32x1024xf32>
    %25 = math.tanh %24 : vector<32x1024xf32>
    %c3 = arith.constant 3 : index
    %c0_19 = arith.constant 0 : index
    %c0_20 = arith.constant 0 : index
    %26 = vector.load %arg2[%c3, %c0_19, %c0_20] : memref<8x32x32xf32, #tpu.memory_space<vmem>>, vector<1x32x32xf32>
    %27 = vector.shape_cast %26 : vector<1x32x32xf32> to vector<32x32xf32>
    %cst_21 = arith.constant dense<0.000000e+00> : vector<32x1024xf32>
    %28 = tpu.matmul %27, %25, %cst_21 {dimension_numbers = #tpu.dot_dimension_numbers<[1], [0], [0], [1], [0, 0, 1, 1], [], []>} : vector<32x32xf32>, vector<32x1024xf32>, vector<32x1024xf32> -> vector<32x1024xf32>
    %c3_22 = arith.constant 3 : index
    %c0_23 = arith.constant 0 : index
    %c0_24 = arith.constant 0 : index
    %29 = vector.load %arg3[%c3_22, %c0_23, %c0_24] : memref<8x32x1xf32, #tpu.memory_space<vmem>>, vector<1x32x1xf32>
    %30 = vector.shape_cast %29 : vector<1x32x1xf32> to vector<32x1xf32>
    %31 = vector.broadcast %30 : vector<32x1xf32> to vector<32x1024xf32>
    %32 = arith.addf %28, %31 : vector<32x1024xf32>
    %33 = math.tanh %32 : vector<32x1024xf32>
    %c4 = arith.constant 4 : index
    %c0_25 = arith.constant 0 : index
    %c0_26 = arith.constant 0 : index
    %34 = vector.load %arg2[%c4, %c0_25, %c0_26] : memref<8x32x32xf32, #tpu.memory_space<vmem>>, vector<1x32x32xf32>
    %35 = vector.shape_cast %34 : vector<1x32x32xf32> to vector<32x32xf32>
    %cst_27 = arith.constant dense<0.000000e+00> : vector<32x1024xf32>
    %36 = tpu.matmul %35, %33, %cst_27 {dimension_numbers = #tpu.dot_dimension_numbers<[1], [0], [0], [1], [0, 0, 1, 1], [], []>} : vector<32x32xf32>, vector<32x1024xf32>, vector<32x1024xf32> -> vector<32x1024xf32>
    %c4_28 = arith.constant 4 : index
    %c0_29 = arith.constant 0 : index
    %c0_30 = arith.constant 0 : index
    %37 = vector.load %arg3[%c4_28, %c0_29, %c0_30] : memref<8x32x1xf32, #tpu.memory_space<vmem>>, vector<1x32x1xf32>
    %38 = vector.shape_cast %37 : vector<1x32x1xf32> to vector<32x1xf32>
    %39 = vector.broadcast %38 : vector<32x1xf32> to vector<32x1024xf32>
    %40 = arith.addf %36, %39 : vector<32x1024xf32>
    %41 = math.tanh %40 : vector<32x1024xf32>
    %c5 = arith.constant 5 : index
    %c0_31 = arith.constant 0 : index
    %c0_32 = arith.constant 0 : index
    %42 = vector.load %arg2[%c5, %c0_31, %c0_32] : memref<8x32x32xf32, #tpu.memory_space<vmem>>, vector<1x32x32xf32>
    %43 = vector.shape_cast %42 : vector<1x32x32xf32> to vector<32x32xf32>
    %cst_33 = arith.constant dense<0.000000e+00> : vector<32x1024xf32>
    %44 = tpu.matmul %43, %41, %cst_33 {dimension_numbers = #tpu.dot_dimension_numbers<[1], [0], [0], [1], [0, 0, 1, 1], [], []>} : vector<32x32xf32>, vector<32x1024xf32>, vector<32x1024xf32> -> vector<32x1024xf32>
    %c5_34 = arith.constant 5 : index
    %c0_35 = arith.constant 0 : index
    %c0_36 = arith.constant 0 : index
    %45 = vector.load %arg3[%c5_34, %c0_35, %c0_36] : memref<8x32x1xf32, #tpu.memory_space<vmem>>, vector<1x32x1xf32>
    %46 = vector.shape_cast %45 : vector<1x32x1xf32> to vector<32x1xf32>
    %47 = vector.broadcast %46 : vector<32x1xf32> to vector<32x1024xf32>
    %48 = arith.addf %44, %47 : vector<32x1024xf32>
    %49 = math.tanh %48 : vector<32x1024xf32>
    %c6 = arith.constant 6 : index
    %c0_37 = arith.constant 0 : index
    %c0_38 = arith.constant 0 : index
    %50 = vector.load %arg2[%c6, %c0_37, %c0_38] : memref<8x32x32xf32, #tpu.memory_space<vmem>>, vector<1x32x32xf32>
    %51 = vector.shape_cast %50 : vector<1x32x32xf32> to vector<32x32xf32>
    %cst_39 = arith.constant dense<0.000000e+00> : vector<32x1024xf32>
    %52 = tpu.matmul %51, %49, %cst_39 {dimension_numbers = #tpu.dot_dimension_numbers<[1], [0], [0], [1], [0, 0, 1, 1], [], []>} : vector<32x32xf32>, vector<32x1024xf32>, vector<32x1024xf32> -> vector<32x1024xf32>
    %c6_40 = arith.constant 6 : index
    %c0_41 = arith.constant 0 : index
    %c0_42 = arith.constant 0 : index
    %53 = vector.load %arg3[%c6_40, %c0_41, %c0_42] : memref<8x32x1xf32, #tpu.memory_space<vmem>>, vector<1x32x1xf32>
    %54 = vector.shape_cast %53 : vector<1x32x1xf32> to vector<32x1xf32>
    %55 = vector.broadcast %54 : vector<32x1xf32> to vector<32x1024xf32>
    %56 = arith.addf %52, %55 : vector<32x1024xf32>
    %57 = math.tanh %56 : vector<32x1024xf32>
    %c7 = arith.constant 7 : index
    %c0_43 = arith.constant 0 : index
    %c0_44 = arith.constant 0 : index
    %58 = vector.load %arg2[%c7, %c0_43, %c0_44] : memref<8x32x32xf32, #tpu.memory_space<vmem>>, vector<1x32x32xf32>
    %59 = vector.shape_cast %58 : vector<1x32x32xf32> to vector<32x32xf32>
    %cst_45 = arith.constant dense<0.000000e+00> : vector<32x1024xf32>
    %60 = tpu.matmul %59, %57, %cst_45 {dimension_numbers = #tpu.dot_dimension_numbers<[1], [0], [0], [1], [0, 0, 1, 1], [], []>} : vector<32x32xf32>, vector<32x1024xf32>, vector<32x1024xf32> -> vector<32x1024xf32>
    %c7_46 = arith.constant 7 : index
    %c0_47 = arith.constant 0 : index
    %c0_48 = arith.constant 0 : index
    %61 = vector.load %arg3[%c7_46, %c0_47, %c0_48] : memref<8x32x1xf32, #tpu.memory_space<vmem>>, vector<1x32x1xf32>
    %62 = vector.shape_cast %61 : vector<1x32x1xf32> to vector<32x1xf32>
    %63 = vector.broadcast %62 : vector<32x1xf32> to vector<32x1024xf32>
    %64 = arith.addf %60, %63 : vector<32x1024xf32>
    %65 = vector.extract_strided_slice %64 {offsets = [0, 0], sizes = [1, 1024], strides = [1, 1]} : vector<32x1024xf32> to vector<1x1024xf32>
    %c0_49 = arith.constant 0 : index
    %c0_50 = arith.constant 0 : index
    %66 = vector.load %arg4[%c0_49, %c0_50] : memref<1x1024xf32, #tpu.memory_space<vmem>>, vector<1x1024xf32>
    tpu.vector_store %arg4[%c0_49, %c0_50], %65 {strides = array<i32>} : memref<1x1024xf32, #tpu.memory_space<vmem>>, vector<1x1024xf32>,
    return
  }
  func.func @transform_0(%arg0: i32) -> (i32, i32) {
    %c0_i32 = arith.constant 0 : i32
    %c0_i32_0 = arith.constant 0 : i32
    return %c0_i32, %arg0 : i32, i32
  }
  func.func @transform_1(%arg0: i32) -> (i32, i32, i32) {
    %c0_i32 = arith.constant 0 : i32
    %c0_i32_0 = arith.constant 0 : i32
    %c0_i32_1 = arith.constant 0 : i32
    %c0_i32_2 = arith.constant 0 : i32
    return %c0_i32, %c0_i32_0, %c0_i32_1 : i32, i32, i32
  }
  func.func @transform_2(%arg0: i32) -> (i32, i32, i32) {
    %c0_i32 = arith.constant 0 : i32
    %c0_i32_0 = arith.constant 0 : i32
    %c0_i32_1 = arith.constant 0 : i32
    %c0_i32_2 = arith.constant 0 : i32
    return %c0_i32, %c0_i32_0, %c0_i32_1 : i32, i32, i32
  }
  func.func @transform_3(%arg0: i32) -> (i32, i32) {
    %c0_i32 = arith.constant 0 : i32
    %c0_i32_0 = arith.constant 0 : i32
    return %c0_i32, %arg0 : i32, i32
  }
}

</mosaic_0001>

<llo_original>
// kernel: _nn_u_pallas.1
$region0: #{_nn_u_pallas.1}
  #allocation0 [shape = 'u32[]', space=smem, size = 0x4, offset = 0x4, fixed_abs, tag = 'smem constant byte address 0x4 - core index']
  #allocation1 [shape = 'u32[144,128]{1,0:T(1,128)}', space=vmem, size = 0x12000, scoped, tag = 'internal scratch']
  %s0 = inlined_call_operand.hbm [shape: f32[8,1024], index: 0, kind: input, shape index: {}]
  %s1 = inlined_call_operand.vmem [shape: f32[8,32,32], index: 1, kind: input, shape index: {}]
  %s2 = inlined_call_operand.vmem [shape: f32[8,32,1], index: 2, kind: input, shape index: {}]
  %s3 = inlined_call_operand.hbm [shape: f32[1,1024], index: 3, kind: output, shape index: {}]
  %s4 = sld [smem:[#allocation0]]
  $region26: #{_nn_u_pallas.1} parent=0
    _
  %s6 = ssub.s32 1, %s4
  %s7 = scalar_select 0, %s6, %s4
  $region1: #{_nn_u_pallas.1} parent=0
    #allocation2 [shape = 'u8[32768]{0}', space=vmem, size = 0x8000, scoped, tag = 'input window, operand 0, single buffered']
    #allocation3 [shape = 's32[1]{0}', space=sflag, size = 0x4, scoped, tag = 'scoped memory for _nn_u_pallas.1']
    #allocation4 [shape = 's32[1]{0}', space=sflag, size = 0x4, scoped, tag = 'scoped memory for _nn_u_pallas.1']
    #allocation5 [shape = 'u8[4096]{0}', space=vmem, size = 0x1000, scoped, tag = 'output window, operand 0, single buffered']
    %8 = vsyncpa [#allocation3], 0
    %9 = vsyncpa [#allocation4], 0
    // Predicated region
    $region2: #{_nn_u_pallas.1} parent=1 // pred_check
      _
    $region3: #{_nn_u_pallas.1} parent=1 // pred_check_branch
      %11 = sbr.rel (0) target = $region5
    $region4: #{_nn_u_pallas.1} parent=1 // pred_region
      %s13 = ssub.s32 1024, 1024
      %14 = vsyncadd [#allocation3], %s13
      %s16 = sshll.u32 [#allocation2], 4
      %s17 = int_to_ptr.vmem [resolvable:$true] %s16
      %19 = dma.hbm_to_vmem [thread:$0]  %s0, 1024, %s17, [#allocation3]
    $region5: #{_nn_u_pallas.1} parent=1 // pred_fallthru
      _
    // Predicated region
    $region6: #{_nn_u_pallas.1} parent=1 // pred_check
      _
    $region7: #{_nn_u_pallas.1} parent=1 // pred_check_branch
      %21 = sbr.rel (0) target = $region9
    $region8: #{_nn_u_pallas.1} parent=1 // pred_region
      _
    $region9: #{_nn_u_pallas.1} parent=1 // pred_fallthru
      _
    // Predicated region
    $region10: #{_nn_u_pallas.1} parent=1 // pred_check
      _
    $region11: #{_nn_u_pallas.1} parent=1 // pred_check_branch
      %23 = sbr.rel (0) target = $region13
    $region12: #{_nn_u_pallas.1} parent=1 // pred_region
      _
    $region13: #{_nn_u_pallas.1} parent=1 // pred_fallthru
      _
    // Predicated region
    $region14: #{_nn_u_pallas.1} parent=1 // pred_check
      _
    $region15: #{_nn_u_pallas.1} parent=1 // pred_check_branch
      %25 = sbr.rel (0) target = $region17
    $region16: #{_nn_u_pallas.1} parent=1 // pred_region
      %26 = dma.done [#allocation3], 1024
    $region17: #{_nn_u_pallas.1} parent=1 // pred_fallthru
      _
    %v27 = vld [vmem:[%s1] sm:$0xff]
    %v28 = vld [vmem:[%s1 + $0x8] sm:$0xff]
    %v29 = vld [vmem:[%s1 + $0x10] sm:$0xff]
    %v30 = vld [vmem:[%s1 + $0x18] sm:$0xff]
    %v31 = vld [vmem:[#allocation2] sm:$0xff]
    %v32 = vld [vmem:[#allocation2 + $0x8] sm:$0xff]
    %v33 = vld [vmem:[#allocation2 + $0x10] sm:$0xff]
    %v34 = vld [vmem:[#allocation2 + $0x18] sm:$0xff]
    %v35 = vld [vmem:[#allocation2 + $0x20] sm:$0xff]
    %v36 = vld [vmem:[#allocation2 + $0x28] sm:$0xff]
    %v37 = vld [vmem:[#allocation2 + $0x30] sm:$0xff]
    %v38 = vld [vmem:[#allocation2 + $0x38] sm:$0xff]
    %v39 = vld [vmem:[%s2] sm:$0xff]
    %v40 = vld [vmem:[%s2 + $0x8] sm:$0xff]
    %v41 = vld [vmem:[%s2 + $0x10] sm:$0xff]
    %v42 = vld [vmem:[%s2 + $0x18] sm:$0xff]
    %44 = vset.pattern.permute.xlu0 0
    %45 = vperm.xlu0 %44, %v39
    %v46 = vpop.permute.xlu0 %45
    %49 = vset.pattern.permute.xlu0 0
    %50 = vperm.xlu0 %49, %v40
    %v51 = vpop.permute.xlu0 %50
    %54 = vset.pattern.permute.xlu0 0
    %55 = vperm.xlu0 %54, %v41
    %v56 = vpop.permute.xlu0 %55
    %59 = vset.pattern.permute.xlu0 0
    %60 = vperm.xlu0 %59, %v42
    %v61 = vpop.permute.xlu0 %60
    %vm63 = vcmask 64512
    %v65 = vsel %vm63, %v27, 0
    %v68 = vsel %vm63, %v28, 0
    %v71 = vsel %vm63, %v29, 0
    %v74 = vsel %vm63, %v30, 0
    %76 = vmatprep.subr.mxu0 0.0
    %77 = vmatpush1.msra.mxu0 0.0
    %78 = vmatprep.subr.mxu0 0.0
    %79 = vmatpush1.msra.mxu0 0.0
    %80 = vmatprep.subr.mxu0 0.0
    %81 = vmatpush1.msra.mxu0 0.0
    %82 = vmatprep.subr.mxu0 0.0
    %83 = vmatpush1.msra.mxu0 0.0
    %84 = vmatprep.subr.mxu0 0.0
    %85 = vmatpush1.msra.mxu0 0.0
    %86 = vmatprep.subr.mxu0 0.0
    %87 = vmatpush1.msra.mxu0 0.0
    %88 = vmatprep.subr.mxu0 0.0
    %89 = vmatpush1.msra.mxu0 0.0
    %90 = vmatprep.subr.mxu0 0.0
    %91 = vmatpush1.msra.mxu0 0.0
    %92 = vmatprep.subr.mxu0 0.0
    %93 = vmatpush1.msra.mxu0 0.0
    %94 = vmatprep.subr.mxu0 0.0
    %95 = vmatpush1.msra.mxu0 0.0
    %96 = vmatprep.subr.mxu0 0.0
    %97 = vmatpush1.msra.mxu0 0.0
    %98 = vmatprep.subr.mxu0 0.0
    %99 = vmatpush1.msra.mxu0 0.0
    %100 = vmatprep.subr.mxu0 0.0
    %101 = vmatpush1.msra.mxu0 0.0
    %102 = vmatprep.subr.mxu0 0.0
    %103 = vmatpush1.msra.mxu0 0.0
    %104 = vmatprep.subr.mxu0 0.0
    %105 = vmatpush1.msra.mxu0 0.0
    %106 = vmatprep.subr.mxu0 %v32
    %107 = vmatpush1.msra.mxu0 %v31
    %108 = vmatprep.subr.mxu0 0.0
    %109 = vmatpush2.msra.mxu0 0.0
    %110 = vmatprep.subr.mxu0 0.0
    %111 = vmatpush2.msra.mxu0 0.0
    %112 = vmatprep.subr.mxu0 0.0
    %113 = vmatpush2.msra.mxu0 0.0
    %114 = vmatprep.subr.mxu0 0.0
    %115 = vmatpush2.msra.mxu0 0.0
    %116 = vmatprep.subr.mxu0 0.0
    %117 = vmatpush2.msra.mxu0 0.0
    %118 = vmatprep.subr.mxu0 0.0
    %119 = vmatpush2.msra.mxu0 0.0
    %120 = vmatprep.subr.mxu0 0.0
    %121 = vmatpush2.msra.mxu0 0.0
    %122 = vmatprep.subr.mxu0 0.0
    %123 = vmatpush2.msra.mxu0 0.0
    %124 = vmatprep.subr.mxu0 0.0
    %125 = vmatpush2.msra.mxu0 0.0
    %126 = vmatprep.subr.mxu0 0.0
    %127 = vmatpush2.msra.mxu0 0.0
    %128 = vmatprep.subr.mxu0 0.0
    %129 = vmatpush2.msra.mxu0 0.0
    %130 = vmatprep.subr.mxu0 0.0
    %131 = vmatpush2.msra.mxu0 0.0
    %132 = vmatprep.subr.mxu0 0.0
    %133 = vmatpush2.msra.mxu0 0.0
    %134 = vmatprep.subr.mxu0 0.0
    %135 = vmatpush2.msra.mxu0 0.0
    %136 = vmatprep.subr.mxu0 0.0
    %137 = vmatpush2.msra.mxu0 0.0
    %138 = vmatprep.subr.mxu0 0.0
    %139 = vmatpush2.msra.mxu0 0.0
    %140 = vmatprep.mubr.f32.mxu0 0.0
    %141 = vmatmul.mubr.f32.gmra.mxu0 %v65
    %v142 = vpop.f32.mrf.mxu0
    %v143 = vadd.f32 %v46, %v142
    %v144 = vpop.f32.mrf.mxu0
    %v145 = vadd.f32 %v46, %v144
    %146 = vmatprep.mubr.f32.mxu0 0.0
    %147 = vmatmul.mubr.f32.gmra.mxu0 %v68
    %v148 = vpop.f32.mrf.mxu0
    %v149 = vadd.f32 %v51, %v148
    %v150 = vpop.f32.mrf.mxu0
    %v151 = vadd.f32 %v51, %v150
    %152 = vmatprep.mubr.f32.mxu0 0.0
    %153 = vmatmul.mubr.f32.gmra.mxu0 %v71
    %v154 = vpop.f32.mrf.mxu0
    %v155 = vadd.f32 %v56, %v154
    %v156 = vpop.f32.mrf.mxu0
    %v157 = vadd.f32 %v56, %v156
    %158 = vmatprep.mubr.f32.mxu0 0.0
    %159 = vmatmul.mubr.f32.gmra.mxu0 %v74
    %v160 = vpop.f32.mrf.mxu0
    %v161 = vadd.f32 %v61, %v160
    %v162 = vpop.f32.mrf.mxu0
    %v163 = vadd.f32 %v61, %v162
    %164 = vdwg.mxu0
    %165 = vmatprep.subr.mxu0 0.0
    %166 = vmatpush1.msra.mxu0 0.0
    %167 = vmatprep.subr.mxu0 0.0
    %168 = vmatpush1.msra.mxu0 0.0
    %169 = vmatprep.subr.mxu0 0.0
    %170 = vmatpush1.msra.mxu0 0.0
    %171 = vmatprep.subr.mxu0 0.0
    %172 = vmatpush1.msra.mxu0 0.0
    %173 = vmatprep.subr.mxu0 0.0
    %174 = vmatpush1.msra.mxu0 0.0
    %175 = vmatprep.subr.mxu0 0.0
    %176 = vmatpush1.msra.mxu0 0.0
    %177 = vmatprep.subr.mxu0 0.0
    %178 = vmatpush1.msra.mxu0 0.0
    %179 = vmatprep.subr.mxu0 0.0
    %180 = vmatpush1.msra.mxu0 0.0
    %181 = vmatprep.subr.mxu0 0.0
    %182 = vmatpush1.msra.mxu0 0.0
    %183 = vmatprep.subr.mxu0 0.0
    %184 = vmatpush1.msra.mxu0 0.0
    %185 = vmatprep.subr.mxu0 0.0
    %186 = vmatpush1.msra.mxu0 0.0
    %187 = vmatprep.subr.mxu0 0.0
    %188 = vmatpush1.msra.mxu0 0.0
    %189 = vmatprep.subr.mxu0 0.0
    %190 = vmatpush1.msra.mxu0 0.0
    %191 = vmatprep.subr.mxu0 0.0
    %192 = vmatpush1.msra.mxu0 0.0
    %193 = vmatprep.subr.mxu0 0.0
    %194 = vmatpush1.msra.mxu0 0.0
    %195 = vmatprep.subr.mxu0 %v34
    %196 = vmatpush1.msra.mxu0 %v33
    %197 = vmatprep.subr.mxu0 0.0
    %198 = vmatpush2.msra.mxu0 0.0
    %199 = vmatprep.subr.mxu0 0.0
    %200 = vmatpush2.msra.mxu0 0.0
    %201 = vmatprep.subr.mxu0 0.0
    %202 = vmatpush2.msra.mxu0 0.0
    %203 = vmatprep.subr.mxu0 0.0
    %204 = vmatpush2.msra.mxu0 0.0
    %205 = vmatprep.subr.mxu0 0.0
    %206 = vmatpush2.msra.mxu0 0.0
    %207 = vmatprep.subr.mxu0 0.0
    %208 = vmatpush2.msra.mxu0 0.0
    %209 = vmatprep.subr.mxu0 0.0
    %210 = vmatpush2.msra.mxu0 0.0
    %211 = vmatprep.subr.mxu0 0.0
    %212 = vmatpush2.msra.mxu0 0.0
    %213 = vmatprep.subr.mxu0 0.0
    %214 = vmatpush2.msra.mxu0 0.0
    %215 = vmatprep.subr.mxu0 0.0
    %216 = vmatpush2.msra.mxu0 0.0
    %217 = vmatprep.subr.mxu0 0.0
    %218 = vmatpush2.msra.mxu0 0.0
    %219 = vmatprep.subr.mxu0 0.0
    %220 = vmatpush2.msra.mxu0 0.0
    %221 = vmatprep.subr.mxu0 0.0
    %222 = vmatpush2.msra.mxu0 0.0
    %223 = vmatprep.subr.mxu0 0.0
    %224 = vmatpush2.msra.mxu0 0.0
    %225 = vmatprep.subr.mxu0 0.0
    %226 = vmatpush2.msra.mxu0 0.0
    %227 = vmatprep.subr.mxu0 0.0
    %228 = vmatpush2.msra.mxu0 0.0
    %229 = vmatprep.mubr.f32.mxu0 0.0
    %230 = vmatmul.mubr.f32.gmra.mxu0 %v65
    %v231 = vpop.f32.mrf.mxu0
    %v232 = vadd.f32 %v46, %v231
    %v233 = vpop.f32.mrf.mxu0
    %v234 = vadd.f32 %v46, %v233
    %235 = vmatprep.mubr.f32.mxu0 0.0
    %236 = vmatmul.mubr.f32.gmra.mxu0 %v68
    %v237 = vpop.f32.mrf.mxu0
    %v238 = vadd.f32 %v51, %v237
    %v239 = vpop.f32.mrf.mxu0
    %v240 = vadd.f32 %v51, %v239
    %241 = vmatprep.mubr.f32.mxu0 0.0
    %242 = vmatmul.mubr.f32.gmra.mxu0 %v71
    %v243 = vpop.f32.mrf.mxu0
    %v244 = vadd.f32 %v56, %v243
    %v245 = vpop.f32.mrf.mxu0
    %v246 = vadd.f32 %v56, %v245
    %247 = vmatprep.mubr.f32.mxu0 0.0
    %248 = vmatmul.mubr.f32.gmra.mxu0 %v74
    %v249 = vpop.f32.mrf.mxu0
    %v250 = vadd.f32 %v61, %v249
    %v251 = vpop.f32.mrf.mxu0
    %v252 = vadd.f32 %v61, %v251
    %253 = vdwg.mxu0
    %254 = vmatprep.subr.mxu0 0.0
    %255 = vmatpush1.msra.mxu0 0.0
    %256 = vmatprep.subr.mxu0 0.0
    %257 = vmatpush1.msra.mxu0 0.0
    %258 = vmatprep.subr.mxu0 0.0
    %259 = vmatpush1.msra.mxu0 0.0
    %260 = vmatprep.subr.mxu0 0.0
    %261 = vmatpush1.msra.mxu0 0.0
    %262 = vmatprep.subr.mxu0 0.0
    %263 = vmatpush1.msra.mxu0 0.0
    %264 = vmatprep.subr.mxu0 0.0
    %265 = vmatpush1.msra.mxu0 0.0
    %266 = vmatprep.subr.mxu0 0.0
    %267 = vmatpush1.msra.mxu0 0.0
    %268 = vmatprep.subr.mxu0 0.0
    %269 = vmatpush1.msra.mxu0 0.0
    %270 = vmatprep.subr.mxu0 0.0
    %271 = vmatpush1.msra.mxu0 0.0
    %272 = vmatprep.subr.mxu0 0.0
    %273 = vmatpush1.msra.mxu0 0.0
    %274 = vmatprep.subr.mxu0 0.0
    %275 = vmatpush1.msra.mxu0 0.0
    %276 = vmatprep.subr.mxu0 0.0
    %277 = vmatpush1.msra.mxu0 0.0
    %278 = vmatprep.subr.mxu0 0.0
    %279 = vmatpush1.msra.mxu0 0.0
    %280 = vmatprep.subr.mxu0 0.0
    %281 = vmatpush1.msra.mxu0 0.0
    %282 = vmatprep.subr.mxu0 0.0
    %283 = vmatpush1.msra.mxu0 0.0
    %284 = vmatprep.subr.mxu0 %v36
    %285 = vmatpush1.msra.mxu0 %v35
    %286 = vmatprep.subr.mxu0 0.0
    %287 = vmatpush2.msra.mxu0 0.0
    %288 = vmatprep.subr.mxu0 0.0
    %289 = vmatpush2.msra.mxu0 0.0
    %290 = vmatprep.subr.mxu0 0.0
    %291 = vmatpush2.msra.mxu0 0.0
    %292 = vmatprep.subr.mxu0 0.0
    %293 = vmatpush2.msra.mxu0 0.0
    %294 = vmatprep.subr.mxu0 0.0
    %295 = vmatpush2.msra.mxu0 0.0
    %296 = vmatprep.subr.mxu0 0.0
    %297 = vmatpush2.msra.mxu0 0.0
    %298 = vmatprep.subr.mxu0 0.0
    %299 = vmatpush2.msra.mxu0 0.0
    %300 = vmatprep.subr.mxu0 0.0
    %301 = vmatpush2.msra.mxu0 0.0
    %302 = vmatprep.subr.mxu0 0.0
    %303 = vmatpush2.msra.mxu0 0.0
    %304 = vmatprep.subr.mxu0 0.0
    %305 = vmatpush2.msra.mxu0 0.0
    %306 = vmatprep.subr.mxu0 0.0
    %307 = vmatpush2.msra.mxu0 0.0
    %308 = vmatprep.subr.mxu0 0.0
    %309 = vmatpush2.msra.mxu0 0.0
    %310 = vmatprep.subr.mxu0 0.0
    %311 = vmatpush2.msra.mxu0 0.0
    %312 = vmatprep.subr.mxu0 0.0
    %313 = vmatpush2.msra.mxu0 0.0
    %314 = vmatprep.subr.mxu0 0.0
    %315 = vmatpush2.msra.mxu0 0.0
    %316 = vmatprep.subr.mxu0 0.0
    %317 = vmatpush2.msra.mxu0 0.0
    %318 = vmatprep.mubr.f32.mxu0 0.0
    %319 = vmatmul.mubr.f32.gmra.mxu0 %v65
    %v320 = vpop.f32.mrf.mxu0
    %v321 = vadd.f32 %v46, %v320
    %v322 = vpop.f32.mrf.mxu0
    %v323 = vadd.f32 %v46, %v322
    %324 = vmatprep.mubr.f32.mxu0 0.0
    %325 = vmatmul.mubr.f32.gmra.mxu0 %v68
    %v326 = vpop.f32.mrf.mxu0
    %v327 = vadd.f32 %v51, %v326
    %v328 = vpop.f32.mrf.mxu0
    %v329 = vadd.f32 %v51, %v328
    %330 = vmatprep.mubr.f32.mxu0 0.0
    %331 = vmatmul.mubr.f32.gmra.mxu0 %v71
    %v332 = vpop.f32.mrf.mxu0
    %v333 = vadd.f32 %v56, %v332
    %v334 = vpop.f32.mrf.mxu0
    %v335 = vadd.f32 %v56, %v334
    %336 = vmatprep.mubr.f32.mxu0 0.0
    %337 = vmatmul.mubr.f32.gmra.mxu0 %v74
    %v338 = vpop.f32.mrf.mxu0
    %v339 = vadd.f32 %v61, %v338
    %v340 = vpop.f32.mrf.mxu0
    %v341 = vadd.f32 %v61, %v340
    %342 = vdwg.mxu0
    %343 = vmatprep.subr.mxu0 0.0
    %344 = vmatpush1.msra.mxu0 0.0
    %345 = vmatprep.subr.mxu0 0.0
    %346 = vmatpush1.msra.mxu0 0.0
    %347 = vmatprep.subr.mxu0 0.0
    %348 = vmatpush1.msra.mxu0 0.0
    %349 = vmatprep.subr.mxu0 0.0
    %350 = vmatpush1.msra.mxu0 0.0
    %351 = vmatprep.subr.mxu0 0.0
    %352 = vmatpush1.msra.mxu0 0.0
    %353 = vmatprep.subr.mxu0 0.0
    %354 = vmatpush1.msra.mxu0 0.0
    %355 = vmatprep.subr.mxu0 0.0
    %356 = vmatpush1.msra.mxu0 0.0
    %357 = vmatprep.subr.mxu0 0.0
    %358 = vmatpush1.msra.mxu0 0.0
    %359 = vmatprep.subr.mxu0 0.0
    %360 = vmatpush1.msra.mxu0 0.0
    %361 = vmatprep.subr.mxu0 0.0
    %362 = vmatpush1.msra.mxu0 0.0
    %363 = vmatprep.subr.mxu0 0.0
    %364 = vmatpush1.msra.mxu0 0.0
    %365 = vmatprep.subr.mxu0 0.0
    %366 = vmatpush1.msra.mxu0 0.0
    %367 = vmatprep.subr.mxu0 0.0
    %368 = vmatpush1.msra.mxu0 0.0
    %369 = vmatprep.subr.mxu0 0.0
    %370 = vmatpush1.msra.mxu0 0.0
    %371 = vmatprep.subr.mxu0 0.0
    %372 = vmatpush1.msra.mxu0 0.0
    %373 = vmatprep.subr.mxu0 %v38
    %374 = vmatpush1.msra.mxu0 %v37
    %375 = vmatprep.subr.mxu0 0.0
    %376 = vmatpush2.msra.mxu0 0.0
    %377 = vmatprep.subr.mxu0 0.0
    %378 = vmatpush2.msra.mxu0 0.0
    %379 = vmatprep.subr.mxu0 0.0
    %380 = vmatpush2.msra.mxu0 0.0
    %381 = vmatprep.subr.mxu0 0.0
    %382 = vmatpush2.msra.mxu0 0.0
    %383 = vmatprep.subr.mxu0 0.0
    %384 = vmatpush2.msra.mxu0 0.0
    %385 = vmatprep.subr.mxu0 0.0
    %386 = vmatpush2.msra.mxu0 0.0
    %387 = vmatprep.subr.mxu0 0.0
    %388 = vmatpush2.msra.mxu0 0.0
    %389 = vmatprep.subr.mxu0 0.0
    %390 = vmatpush2.msra.mxu0 0.0
    %391 = vmatprep.subr.mxu0 0.0
    %392 = vmatpush2.msra.mxu0 0.0
    %393 = vmatprep.subr.mxu0 0.0
    %394 = vmatpush2.msra.mxu0 0.0
    %395 = vmatprep.subr.mxu0 0.0
    %396 = vmatpush2.msra.mxu0 0.0
    %397 = vmatprep.subr.mxu0 0.0
    %398 = vmatpush2.msra.mxu0 0.0
    %399 = vmatprep.subr.mxu0 0.0
    %400 = vmatpush2.msra.mxu0 0.0
    %401 = vmatprep.subr.mxu0 0.0
    %402 = vmatpush2.msra.mxu0 0.0
    %403 = vmatprep.subr.mxu0 0.0
    %404 = vmatpush2.msra.mxu0 0.0
    %405 = vmatprep.subr.mxu0 0.0
    %406 = vmatpush2.msra.mxu0 0.0
    %407 = vmatprep.mubr.f32.mxu0 0.0
    %408 = vmatmul.mubr.f32.gmra.mxu0 %v65
    %v409 = vpop.f32.mrf.mxu0
    %v410 = vadd.f32 %v46, %v409
    %v411 = vpop.f32.mrf.mxu0
    %v412 = vadd.f32 %v46, %v411
    %413 = vmatprep.mubr.f32.mxu0 0.0
    %414 = vmatmul.mubr.f32.gmra.mxu0 %v68
    %v415 = vpop.f32.mrf.mxu0
    %v416 = vadd.f32 %v51, %v415
    %v417 = vpop.f32.mrf.mxu0
    %v418 = vadd.f32 %v51, %v417
    %419 = vmatprep.mubr.f32.mxu0 0.0
    %420 = vmatmul.mubr.f32.gmra.mxu0 %v71
    %v421 = vpop.f32.mrf.mxu0
    %v422 = vadd.f32 %v56, %v421
    %v423 = vpop.f32.mrf.mxu0
    %v424 = vadd.f32 %v56, %v423
    %425 = vmatprep.mubr.f32.mxu0 0.0
    %426 = vmatmul.mubr.f32.gmra.mxu0 %v74
    %v427 = vpop.f32.mrf.mxu0
    %v428 = vadd.f32 %v61, %v427
    %v429 = vpop.f32.mrf.mxu0
    %v430 = vadd.f32 %v61, %v429
    %431 = vdwg.mxu0
    %v432 = vtanh.pop %v143
    %v433 = vtanh.pop %v145
    %v434 = vtanh.pop %v232
    %v435 = vtanh.pop %v234
    %v436 = vtanh.pop %v321
    %v437 = vtanh.pop %v323
    %v438 = vtanh.pop %v410
    %v439 = vtanh.pop %v412
    %v440 = vtanh.pop %v149
    %v441 = vtanh.pop %v151
    %v442 = vtanh.pop %v238
    %v443 = vtanh.pop %v240
    %v444 = vtanh.pop %v327
    %v445 = vtanh.pop %v329
    %v446 = vtanh.pop %v416
    %v447 = vtanh.pop %v418
    %v448 = vtanh.pop %v155
    %v449 = vtanh.pop %v157
    %v450 = vtanh.pop %v244
    %v451 = vtanh.pop %v246
    %v452 = vtanh.pop %v333
    %v453 = vtanh.pop %v335
    %v454 = vtanh.pop %v422
    %v455 = vtanh.pop %v424
    %v456 = vtanh.pop %v161
    %v457 = vtanh.pop %v163
    %v458 = vtanh.pop %v250
    %v459 = vtanh.pop %v252
    %v460 = vtanh.pop %v339
    %v461 = vtanh.pop %v341
    %v462 = vtanh.pop %v428
    %v463 = vtanh.pop %v430
    %s464 = scalar_lea.vmem %s1, 32
    %v465 = vld [vmem:[%s464] sm:$0xff]
    %v466 = vld [vmem:[%s464 + $0x8] sm:$0xff]
    %v467 = vld [vmem:[%s464 + $0x10] sm:$0xff]
    %v468 = vld [vmem:[%s464 + $0x18] sm:$0xff]
    %s469 = scalar_lea.vmem %s2, 32
    %v470 = vld [vmem:[%s469] sm:$0xff]
    %v471 = vld [vmem:[%s469 + $0x8] sm:$0xff]
    %v472 = vld [vmem:[%s469 + $0x10] sm:$0xff]
    %v473 = vld [vmem:[%s469 + $0x18] sm:$0xff]
    %475 = vset.pattern.permute.xlu0 0
    %476 = vperm.xlu0 %475, %v470
    %v477 = vpop.permute.xlu0 %476
    %480 = vset.pattern.permute.xlu0 0
    %481 = vperm.xlu0 %480, %v471
    %v482 = vpop.permute.xlu0 %481
    %485 = vset.pattern.permute.xlu0 0
    %486 = vperm.xlu0 %485, %v472
    %v487 = vpop.permute.xlu0 %486
    %490 = vset.pattern.permute.xlu0 0
    %491 = vperm.xlu0 %490, %v473
    %v492 = vpop.permute.xlu0 %491
    %vm494 = vcmask 261120
    %v496 = vsel %vm494, %v465, 0
    %v499 = vsel %vm494, %v466, 0
    %v502 = vsel %vm494, %v467, 0
    %v505 = vsel %vm494, %v468, 0
    %507 = vmatprep.subr.mxu0 0.0
    %508 = vmatpush1.msra.mxu0 0.0
    %509 = vmatprep.subr.mxu0 0.0
    %510 = vmatpush1.msra.mxu0 0.0
    %511 = vmatprep.subr.mxu0 0.0
    %512 = vmatpush1.msra.mxu0 0.0
    %513 = vmatprep.subr.mxu0 0.0
    %514 = vmatpush1.msra.mxu0 0.0
    %515 = vmatprep.subr.mxu0 0.0
    %516 = vmatpush1.msra.mxu0 0.0
    %517 = vmatprep.subr.mxu0 0.0
    %518 = vmatpush1.msra.mxu0 0.0
    %519 = vmatprep.subr.mxu0 0.0
    %520 = vmatpush1.msra.mxu0 0.0
    %521 = vmatprep.subr.mxu0 0.0
    %522 = vmatpush1.msra.mxu0 0.0
    %523 = vmatprep.subr.mxu0 0.0
    %524 = vmatpush1.msra.mxu0 0.0
    %525 = vmatprep.subr.mxu0 0.0
    %526 = vmatpush1.msra.mxu0 0.0
    %527 = vmatprep.subr.mxu0 0.0
    %528 = vmatpush1.msra.mxu0 0.0
    %529 = vmatprep.subr.mxu0 0.0
    %530 = vmatpush1.msra.mxu0 0.0
    %531 = vmatprep.subr.mxu0 %v457
    %532 = vmatpush1.msra.mxu0 %v456
    %533 = vmatprep.subr.mxu0 %v449
    %534 = vmatpush1.msra.mxu0 %v448
    %535 = vmatprep.subr.mxu0 %v441
    %536 = vmatpush1.msra.mxu0 %v440
    %537 = vmatprep.subr.mxu0 %v433
    %538 = vmatpush1.msra.mxu0 %v432
    %539 = vmatprep.subr.mxu0 0.0
    %540 = vmatpush2.msra.mxu0 0.0
    %541 = vmatprep.subr.mxu0 0.0
    %542 = vmatpush2.msra.mxu0 0.0
    %543 = vmatprep.subr.mxu0 0.0
    %544 = vmatpush2.msra.mxu0 0.0
    %545 = vmatprep.subr.mxu0 0.0
    %546 = vmatpush2.msra.mxu0 0.0
    %547 = vmatprep.subr.mxu0 0.0
    %548 = vmatpush2.msra.mxu0 0.0
    %549 = vmatprep.subr.mxu0 0.0
    %550 = vmatpush2.msra.mxu0 0.0
    %551 = vmatprep.subr.mxu0 0.0
    %552 = vmatpush2.msra.mxu0 0.0
    %553 = vmatprep.subr.mxu0 0.0
    %554 = vmatpush2.msra.mxu0 0.0
    %555 = vmatprep.subr.mxu0 0.0
    %556 = vmatpush2.msra.mxu0 0.0
    %557 = vmatprep.subr.mxu0 0.0
    %558 = vmatpush2.msra.mxu0 0.0
    %559 = vmatprep.subr.mxu0 0.0
    %560 = vmatpush2.msra.mxu0 0.0
    %561 = vmatprep.subr.mxu0 0.0
    %562 = vmatpush2.msra.mxu0 0.0
    %563 = vmatprep.subr.mxu0 0.0
    %564 = vmatpush2.msra.mxu0 0.0
    %565 = vmatprep.subr.mxu0 0.0
    %566 = vmatpush2.msra.mxu0 0.0
    %567 = vmatprep.subr.mxu0 0.0
    %568 = vmatpush2.msra.mxu0 0.0
    %569 = vmatprep.subr.mxu0 0.0
    %570 = vmatpush2.msra.mxu0 0.0
    %571 = vmatprep.mubr.f32.mxu0 0.0
    %572 = vmatmul.mubr.f32.gmra.mxu0 %v496
    %v573 = vpop.f32.mrf.mxu0
    %v574 = vadd.f32 %v477, %v573
    %v575 = vpop.f32.mrf.mxu0
    %v576 = vadd.f32 %v477, %v575
    %577 = vmatprep.mubr.f32.mxu0 0.0
    %578 = vmatmul.mubr.f32.gmra.mxu0 %v499
    %v579 = vpop.f32.mrf.mxu0
    %v580 = vadd.f32 %v482, %v579
    %v581 = vpop.f32.mrf.mxu0
    %v582 = vadd.f32 %v482, %v581
    %583 = vmatprep.mubr.f32.mxu0 0.0
    %584 = vmatmul.mubr.f32.gmra.mxu0 %v502
    %v585 = vpop.f32.mrf.mxu0
    %v586 = vadd.f32 %v487, %v585
    %v587 = vpop.f32.mrf.mxu0
    %v588 = vadd.f32 %v487, %v587
    %589 = vmatprep.mubr.f32.mxu0 0.0
    %590 = vmatmul.mubr.f32.gmra.mxu0 %v505
    %v591 = vpop.f32.mrf.mxu0
    %v592 = vadd.f32 %v492, %v591
    %v593 = vpop.f32.mrf.mxu0
    %v594 = vadd.f32 %v492, %v593
    %595 = vdwg.mxu0
    %596 = vmatprep.subr.mxu0 0.0
    %597 = vmatpush1.msra.mxu0 0.0
    %598 = vmatprep.subr.mxu0 0.0
    %599 = vmatpush1.msra.mxu0 0.0
    %600 = vmatprep.subr.mxu0 0.0
    %601 = vmatpush1.msra.mxu0 0.0
    %602 = vmatprep.subr.mxu0 0.0
    %603 = vmatpush1.msra.mxu0 0.0
    %604 = vmatprep.subr.mxu0 0.0
    %605 = vmatpush1.msra.mxu0 0.0
    %606 = vmatprep.subr.mxu0 0.0
    %607 = vmatpush1.msra.mxu0 0.0
    %608 = vmatprep.subr.mxu0 0.0
    %609 = vmatpush1.msra.mxu0 0.0
    %610 = vmatprep.subr.mxu0 0.0
    %611 = vmatpush1.msra.mxu0 0.0
    %612 = vmatprep.subr.mxu0 0.0
    %613 = vmatpush1.msra.mxu0 0.0
    %614 = vmatprep.subr.mxu0 0.0
    %615 = vmatpush1.msra.mxu0 0.0
    %616 = vmatprep.subr.mxu0 0.0
    %617 = vmatpush1.msra.mxu0 0.0
    %618 = vmatprep.subr.mxu0 0.0
    %619 = vmatpush1.msra.mxu0 0.0
    %620 = vmatprep.subr.mxu0 %v459
    %621 = vmatpush1.msra.mxu0 %v458
    %622 = vmatprep.subr.mxu0 %v451
    %623 = vmatpush1.msra.mxu0 %v450
    %624 = vmatprep.subr.mxu0 %v443
    %625 = vmatpush1.msra.mxu0 %v442
    %626 = vmatprep.subr.mxu0 %v435
    %627 = vmatpush1.msra.mxu0 %v434
    %628 = vmatprep.subr.mxu0 0.0
    %629 = vmatpush2.msra.mxu0 0.0
    %630 = vmatprep.subr.mxu0 0.0
    %631 = vmatpush2.msra.mxu0 0.0
    %632 = vmatprep.subr.mxu0 0.0
    %633 = vmatpush2.msra.mxu0 0.0
    %634 = vmatprep.subr.mxu0 0.0
    %635 = vmatpush2.msra.mxu0 0.0
    %636 = vmatprep.subr.mxu0 0.0
    %637 = vmatpush2.msra.mxu0 0.0
    %638 = vmatprep.subr.mxu0 0.0
    %639 = vmatpush2.msra.mxu0 0.0
    %640 = vmatprep.subr.mxu0 0.0
    %641 = vmatpush2.msra.mxu0 0.0
    %642 = vmatprep.subr.mxu0 0.0
    %643 = vmatpush2.msra.mxu0 0.0
    %644 = vmatprep.subr.mxu0 0.0
    %645 = vmatpush2.msra.mxu0 0.0
    %646 = vmatprep.subr.mxu0 0.0
    %647 = vmatpush2.msra.mxu0 0.0
    %648 = vmatprep.subr.mxu0 0.0
    %649 = vmatpush2.msra.mxu0 0.0
    %650 = vmatprep.subr.mxu0 0.0
    %651 = vmatpush2.msra.mxu0 0.0
    %652 = vmatprep.subr.mxu0 0.0
    %653 = vmatpush2.msra.mxu0 0.0
    %654 = vmatprep.subr.mxu0 0.0
    %655 = vmatpush2.msra.mxu0 0.0
    %656 = vmatprep.subr.mxu0 0.0
    %657 = vmatpush2.msra.mxu0 0.0
    %658 = vmatprep.subr.mxu0 0.0
    %659 = vmatpush2.msra.mxu0 0.0
    %660 = vmatprep.mubr.f32.mxu0 0.0
    %661 = vmatmul.mubr.f32.gmra.mxu0 %v496
    %v662 = vpop.f32.mrf.mxu0
    %v663 = vadd.f32 %v477, %v662
    %v664 = vpop.f32.mrf.mxu0
    %v665 = vadd.f32 %v477, %v664
    %666 = vmatprep.mubr.f32.mxu0 0.0
    %667 = vmatmul.mubr.f32.gmra.mxu0 %v499
    %v668 = vpop.f32.mrf.mxu0
    %v669 = vadd.f32 %v482, %v668
    %v670 = vpop.f32.mrf.mxu0
    %v671 = vadd.f32 %v482, %v670
    %672 = vmatprep.mubr.f32.mxu0 0.0
    %673 = vmatmul.mubr.f32.gmra.mxu0 %v502
    %v674 = vpop.f32.mrf.mxu0
    %v675 = vadd.f32 %v487, %v674
    %v676 = vpop.f32.mrf.mxu0
    %v677 = vadd.f32 %v487, %v676
    %678 = vmatprep.mubr.f32.mxu0 0.0
    %679 = vmatmul.mubr.f32.gmra.mxu0 %v505
    %v680 = vpop.f32.mrf.mxu0
    %v681 = vadd.f32 %v492, %v680
    %v682 = vpop.f32.mrf.mxu0
    %v683 = vadd.f32 %v492, %v682
    %684 = vdwg.mxu0
    %685 = vmatprep.subr.mxu0 0.0
    %686 = vmatpush1.msra.mxu0 0.0
    %687 = vmatprep.subr.mxu0 0.0
    %688 = vmatpush1.msra.mxu0 0.0
    %689 = vmatprep.subr.mxu0 0.0
    %690 = vmatpush1.msra.mxu0 0.0
    %691 = vmatprep.subr.mxu0 0.0
    %692 = vmatpush1.msra.mxu0 0.0
    %693 = vmatprep.subr.mxu0 0.0
    %694 = vmatpush1.msra.mxu0 0.0
    %695 = vmatprep.subr.mxu0 0.0
    %696 = vmatpush1.msra.mxu0 0.0
    %697 = vmatprep.subr.mxu0 0.0
    %698 = vmatpush1.msra.mxu0 0.0
    %699 = vmatprep.subr.mxu0 0.0
    %700 = vmatpush1.msra.mxu0 0.0
    %701 = vmatprep.subr.mxu0 0.0
    %702 = vmatpush1.msra.mxu0 0.0
    %703 = vmatprep.subr.mxu0 0.0
    %704 = vmatpush1.msra.mxu0 0.0
    %705 = vmatprep.subr.mxu0 0.0
    %706 = vmatpush1.msra.mxu0 0.0
    %707 = vmatprep.subr.mxu0 0.0
    %708 = vmatpush1.msra.mxu0 0.0
    %709 = vmatprep.subr.mxu0 %v461
    %710 = vmatpush1.msra.mxu0 %v460
    %711 = vmatprep.subr.mxu0 %v453
    %712 = vmatpush1.msra.mxu0 %v452
    %713 = vmatprep.subr.mxu0 %v445
    %714 = vmatpush1.msra.mxu0 %v444
    %715 = vmatprep.subr.mxu0 %v437
    %716 = vmatpush1.msra.mxu0 %v436
    %717 = vmatprep.subr.mxu0 0.0
    %718 = vmatpush2.msra.mxu0 0.0
    %719 = vmatprep.subr.mxu0 0.0
    %720 = vmatpush2.msra.mxu0 0.0
    %721 = vmatprep.subr.mxu0 0.0
    %722 = vmatpush2.msra.mxu0 0.0
    %723 = vmatprep.subr.mxu0 0.0
    %724 = vmatpush2.msra.mxu0 0.0
    %725 = vmatprep.subr.mxu0 0.0
    %726 = vmatpush2.msra.mxu0 0.0
    %727 = vmatprep.subr.mxu0 0.0
    %728 = vmatpush2.msra.mxu0 0.0
    %729 = vmatprep.subr.mxu0 0.0
    %730 = vmatpush2.msra.mxu0 0.0
    %731 = vmatprep.subr.mxu0 0.0
    %732 = vmatpush2.msra.mxu0 0.0
    %733 = vmatprep.subr.mxu0 0.0
    %734 = vmatpush2.msra.mxu0 0.0
    %735 = vmatprep.subr.mxu0 0.0
    %736 = vmatpush2.msra.mxu0 0.0
    %737 = vmatprep.subr.mxu0 0.0
    %738 = vmatpush2.msra.mxu0 0.0
    %739 = vmatprep.subr.mxu0 0.0
    %740 = vmatpush2.msra.mxu0 0.0
    %741 = vmatprep.subr.mxu0 0.0
    %742 = vmatpush2.msra.mxu0 0.0
    %743 = vmatprep.subr.mxu0 0.0
    %744 = vmatpush2.msra.mxu0 0.0
    %745 = vmatprep.subr.mxu0 0.0
    %746 = vmatpush2.msra.mxu0 0.0
    %747 = vmatprep.subr.mxu0 0.0
    %748 = vmatpush2.msra.mxu0 0.0
    %749 = vmatprep.mubr.f32.mxu0 0.0
    %750 = vmatmul.mubr.f32.gmra.mxu0 %v496
    %v751 = vpop.f32.mrf.mxu0
    %v752 = vadd.f32 %v477, %v751
    %v753 = vpop.f32.mrf.mxu0
    %v754 = vadd.f32 %v477, %v753
    %755 = vmatprep.mubr.f32.mxu0 0.0
    %756 = vmatmul.mubr.f32.gmra.mxu0 %v499
    %v757 = vpop.f32.mrf.mxu0
    %v758 = vadd.f32 %v482, %v757
    %v759 = vpop.f32.mrf.mxu0
    %v760 = vadd.f32 %v482, %v759
    %761 = vmatprep.mubr.f32.mxu0 0.0
    %762 = vmatmul.mubr.f32.gmra.mxu0 %v502
    %v763 = vpop.f32.mrf.mxu0
    %v764 = vadd.f32 %v487, %v763
    %v765 = vpop.f32.mrf.mxu0
    %v766 = vadd.f32 %v487, %v765
    %767 = vmatprep.mubr.f32.mxu0 0.0
    %768 = vmatmul.mubr.f32.gmra.mxu0 %v505
    %v769 = vpop.f32.mrf.mxu0
    %v770 = vadd.f32 %v492, %v769
    %v771 = vpop.f32.mrf.mxu0
    %v772 = vadd.f32 %v492, %v771
    %773 = vdwg.mxu0
    %774 = vmatprep.subr.mxu0 0.0
    %775 = vmatpush1.msra.mxu0 0.0
    %776 = vmatprep.subr.mxu0 0.0
    %777 = vmatpush1.msra.mxu0 0.0
    %778 = vmatprep.subr.mxu0 0.0
    %779 = vmatpush1.msra.mxu0 0.0
    %780 = vmatprep.subr.mxu0 0.0
    %781 = vmatpush1.msra.mxu0 0.0
    %782 = vmatprep.subr.mxu0 0.0
    %783 = vmatpush1.msra.mxu0 0.0
    %784 = vmatprep.subr.mxu0 0.0
    %785 = vmatpush1.msra.mxu0 0.0
    %786 = vmatprep.subr.mxu0 0.0
    %787 = vmatpush1.msra.mxu0 0.0
    %788 = vmatprep.subr.mxu0 0.0
    %789 = vmatpush1.msra.mxu0 0.0
    %790 = vmatprep.subr.mxu0 0.0
    %791 = vmatpush1.msra.mxu0 0.0
    %792 = vmatprep.subr.mxu0 0.0
    %793 = vmatpush1.msra.mxu0 0.0
    %794 = vmatprep.subr.mxu0 0.0
    %795 = vmatpush1.msra.mxu0 0.0
    %796 = vmatprep.subr.mxu0 0.0
    %797 = vmatpush1.msra.mxu0 0.0
    %798 = vmatprep.subr.mxu0 %v463
    %799 = vmatpush1.msra.mxu0 %v462
    %800 = vmatprep.subr.mxu0 %v455
    %801 = vmatpush1.msra.mxu0 %v454
    %802 = vmatprep.subr.mxu0 %v447
    %803 = vmatpush1.msra.mxu0 %v446
    %804 = vmatprep.subr.mxu0 %v439
    %805 = vmatpush1.msra.mxu0 %v438
    %806 = vmatprep.subr.mxu0 0.0
    %807 = vmatpush2.msra.mxu0 0.0
    %808 = vmatprep.subr.mxu0 0.0
    %809 = vmatpush2.msra.mxu0 0.0
    %810 = vmatprep.subr.mxu0 0.0
    %811 = vmatpush2.msra.mxu0 0.0
    %812 = vmatprep.subr.mxu0 0.0
    %813 = vmatpush2.msra.mxu0 0.0
    %814 = vmatprep.subr.mxu0 0.0
    %815 = vmatpush2.msra.mxu0 0.0
    %816 = vmatprep.subr.mxu0 0.0
    %817 = vmatpush2.msra.mxu0 0.0
    %818 = vmatprep.subr.mxu0 0.0
    %819 = vmatpush2.msra.mxu0 0.0
    %820 = vmatprep.subr.mxu0 0.0
    %821 = vmatpush2.msra.mxu0 0.0
    %822 = vmatprep.subr.mxu0 0.0
    %823 = vmatpush2.msra.mxu0 0.0
    %824 = vmatprep.subr.mxu0 0.0
    %825 = vmatpush2.msra.mxu0 0.0
    %826 = vmatprep.subr.mxu0 0.0
    %827 = vmatpush2.msra.mxu0 0.0
    %828 = vmatprep.subr.mxu0 0.0
    %829 = vmatpush2.msra.mxu0 0.0
    %830 = vmatprep.subr.mxu0 0.0
    %831 = vmatpush2.msra.mxu0 0.0
    %832 = vmatprep.subr.mxu0 0.0
    %833 = vmatpush2.msra.mxu0 0.0
    %834 = vmatprep.subr.mxu0 0.0
    %835 = vmatpush2.msra.mxu0 0.0
    %836 = vmatprep.subr.mxu0 0.0
    %837 = vmatpush2.msra.mxu0 0.0
    %838 = vmatprep.mubr.f32.mxu0 0.0
    %839 = vmatmul.mubr.f32.gmra.mxu0 %v496
    %v840 = vpop.f32.mrf.mxu0
    %v841 = vadd.f32 %v477, %v840
    %v842 = vpop.f32.mrf.mxu0
    %v843 = vadd.f32 %v477, %v842
    %844 = vmatprep.mubr.f32.mxu0 0.0
    %845 = vmatmul.mubr.f32.gmra.mxu0 %v499
    %v846 = vpop.f32.mrf.mxu0
    %v847 = vadd.f32 %v482, %v846
    %v848 = vpop.f32.mrf.mxu0
    %v849 = vadd.f32 %v482, %v848
    %850 = vmatprep.mubr.f32.mxu0 0.0
    %851 = vmatmul.mubr.f32.gmra.mxu0 %v502
    %v852 = vpop.f32.mrf.mxu0
    %v853 = vadd.f32 %v487, %v852
    %v854 = vpop.f32.mrf.mxu0
    %v855 = vadd.f32 %v487, %v854
    %856 = vmatprep.mubr.f32.mxu0 0.0
    %857 = vmatmul.mubr.f32.gmra.mxu0 %v505
    %v858 = vpop.f32.mrf.mxu0
    %v859 = vadd.f32 %v492, %v858
    %v860 = vpop.f32.mrf.mxu0
    %v861 = vadd.f32 %v492, %v860
    %862 = vdwg.mxu0
    %v863 = vtanh.pop %v574
    %v864 = vtanh.pop %v576
    %v865 = vtanh.pop %v663
    %v866 = vtanh.pop %v665
    %v867 = vtanh.pop %v752
    %v868 = vtanh.pop %v754
    %v869 = vtanh.pop %v841
    %v870 = vtanh.pop %v843
    %v871 = vtanh.pop %v580
    %v872 = vtanh.pop %v582
    %v873 = vtanh.pop %v669
    %v874 = vtanh.pop %v671
    %v875 = vtanh.pop %v758
    %v876 = vtanh.pop %v760
    %v877 = vtanh.pop %v847
    %v878 = vtanh.pop %v849
    %v879 = vtanh.pop %v586
    %v880 = vtanh.pop %v588
    %v881 = vtanh.pop %v675
    %v882 = vtanh.pop %v677
    %v883 = vtanh.pop %v764
    %v884 = vtanh.pop %v766
    %v885 = vtanh.pop %v853
    %v886 = vtanh.pop %v855
    %v887 = vtanh.pop %v592
    %v888 = vtanh.pop %v594
    %v889 = vtanh.pop %v681
    %v890 = vtanh.pop %v683
    %v891 = vtanh.pop %v770
    %v892 = vtanh.pop %v772
    %v893 = vtanh.pop %v859
    %v894 = vtanh.pop %v861
    %s895 = scalar_lea.vmem %s1, 64
    %v896 = vld [vmem:[%s895] sm:$0xff]
    %v897 = vld [vmem:[%s895 + $0x8] sm:$0xff]
    %v898 = vld [vmem:[%s895 + $0x10] sm:$0xff]
    %v899 = vld [vmem:[%s895 + $0x18] sm:$0xff]
    %s900 = scalar_lea.vmem %s2, 64
    %v901 = vld [vmem:[%s900] sm:$0xff]
    %v902 = vld [vmem:[%s900 + $0x8] sm:$0xff]
    %v903 = vld [vmem:[%s900 + $0x10] sm:$0xff]
    %v904 = vld [vmem:[%s900 + $0x18] sm:$0xff]
    %906 = vset.pattern.permute.xlu0 0
    %907 = vperm.xlu0 %906, %v901
    %v908 = vpop.permute.xlu0 %907
    %911 = vset.pattern.permute.xlu0 0
    %912 = vperm.xlu0 %911, %v902
    %v913 = vpop.permute.xlu0 %912
    %916 = vset.pattern.permute.xlu0 0
    %917 = vperm.xlu0 %916, %v903
    %v918 = vpop.permute.xlu0 %917
    %921 = vset.pattern.permute.xlu0 0
    %922 = vperm.xlu0 %921, %v904
    %v923 = vpop.permute.xlu0 %922
    %v926 = vsel %vm494, %v896, 0
    %v929 = vsel %vm494, %v897, 0
    %v932 = vsel %vm494, %v898, 0
    %v935 = vsel %vm494, %v899, 0
    %937 = vmatprep.subr.mxu0 0.0
    %938 = vmatpush1.msra.mxu0 0.0
    %939 = vmatprep.subr.mxu0 0.0
    %940 = vmatpush1.msra.mxu0 0.0
    %941 = vmatprep.subr.mxu0 0.0
    %942 = vmatpush1.msra.mxu0 0.0
    %943 = vmatprep.subr.mxu0 0.0
    %944 = vmatpush1.msra.mxu0 0.0
    %945 = vmatprep.subr.mxu0 0.0
    %946 = vmatpush1.msra.mxu0 0.0
    %947 = vmatprep.subr.mxu0 0.0
    %948 = vmatpush1.msra.mxu0 0.0
    %949 = vmatprep.subr.mxu0 0.0
    %950 = vmatpush1.msra.mxu0 0.0
    %951 = vmatprep.subr.mxu0 0.0
    %952 = vmatpush1.msra.mxu0 0.0
    %953 = vmatprep.subr.mxu0 0.0
    %954 = vmatpush1.msra.mxu0 0.0
    %955 = vmatprep.subr.mxu0 0.0
    %956 = vmatpush1.msra.mxu0 0.0
    %957 = vmatprep.subr.mxu0 0.0
    %958 = vmatpush1.msra.mxu0 0.0
    %959 = vmatprep.subr.mxu0 0.0
    %960 = vmatpush1.msra.mxu0 0.0
    %961 = vmatprep.subr.mxu0 %v888
    %962 = vmatpush1.msra.mxu0 %v887
    %963 = vmatprep.subr.mxu0 %v880
    %964 = vmatpush1.msra.mxu0 %v879
    %965 = vmatprep.subr.mxu0 %v872
    %966 = vmatpush1.msra.mxu0 %v871
    %967 = vmatprep.subr.mxu0 %v864
    %968 = vmatpush1.msra.mxu0 %v863
    %969 = vmatprep.subr.mxu0 0.0
    %970 = vmatpush2.msra.mxu0 0.0
    %971 = vmatprep.subr.mxu0 0.0
    %972 = vmatpush2.msra.mxu0 0.0
    %973 = vmatprep.subr.mxu0 0.0
    %974 = vmatpush2.msra.mxu0 0.0
    %975 = vmatprep.subr.mxu0 0.0
    %976 = vmatpush2.msra.mxu0 0.0
    %977 = vmatprep.subr.mxu0 0.0
    %978 = vmatpush2.msra.mxu0 0.0
    %979 = vmatprep.subr.mxu0 0.0
    %980 = vmatpush2.msra.mxu0 0.0
    %981 = vmatprep.subr.mxu0 0.0
    %982 = vmatpush2.msra.mxu0 0.0
    %983 = vmatprep.subr.mxu0 0.0
    %984 = vmatpush2.msra.mxu0 0.0
    %985 = vmatprep.subr.mxu0 0.0
    %986 = vmatpush2.msra.mxu0 0.0
    %987 = vmatprep.subr.mxu0 0.0
    %988 = vmatpush2.msra.mxu0 0.0
    %989 = vmatprep.subr.mxu0 0.0
    %990 = vmatpush2.msra.mxu0 0.0
    %991 = vmatprep.subr.mxu0 0.0
    %992 = vmatpush2.msra.mxu0 0.0
    %993 = vmatprep.subr.mxu0 0.0
    %994 = vmatpush2.msra.mxu0 0.0
    %995 = vmatprep.subr.mxu0 0.0
    %996 = vmatpush2.msra.mxu0 0.0
    %997 = vmatprep.subr.mxu0 0.0
    %998 = vmatpush2.msra.mxu0 0.0
    %999 = vmatprep.subr.mxu0 0.0
    %1000 = vmatpush2.msra.mxu0 0.0
    %1001 = vmatprep.mubr.f32.mxu0 0.0
    %1002 = vmatmul.mubr.f32.gmra.mxu0 %v926
    %v1003 = vpop.f32.mrf.mxu0
    %v1004 = vadd.f32 %v908, %v1003
    %v1005 = vpop.f32.mrf.mxu0
    %v1006 = vadd.f32 %v908, %v1005
    %1007 = vmatprep.mubr.f32.mxu0 0.0
    %1008 = vmatmul.mubr.f32.gmra.mxu0 %v929
    %v1009 = vpop.f32.mrf.mxu0
    %v1010 = vadd.f32 %v913, %v1009
    %v1011 = vpop.f32.mrf.mxu0
    %v1012 = vadd.f32 %v913, %v1011
    %1013 = vmatprep.mubr.f32.mxu0 0.0
    %1014 = vmatmul.mubr.f32.gmra.mxu0 %v932
    %v1015 = vpop.f32.mrf.mxu0
    %v1016 = vadd.f32 %v918, %v1015
    %v1017 = vpop.f32.mrf.mxu0
    %v1018 = vadd.f32 %v918, %v1017
    %1019 = vmatprep.mubr.f32.mxu0 0.0
    %1020 = vmatmul.mubr.f32.gmra.mxu0 %v935
    %v1021 = vpop.f32.mrf.mxu0
    %v1022 = vadd.f32 %v923, %v1021
    %v1023 = vpop.f32.mrf.mxu0
    %v1024 = vadd.f32 %v923, %v1023
    %1025 = vdwg.mxu0
    %1026 = vmatprep.subr.mxu0 0.0
    %1027 = vmatpush1.msra.mxu0 0.0
    %1028 = vmatprep.subr.mxu0 0.0
    %1029 = vmatpush1.msra.mxu0 0.0
    %1030 = vmatprep.subr.mxu0 0.0
    %1031 = vmatpush1.msra.mxu0 0.0
    %1032 = vmatprep.subr.mxu0 0.0
    %1033 = vmatpush1.msra.mxu0 0.0
    %1034 = vmatprep.subr.mxu0 0.0
    %1035 = vmatpush1.msra.mxu0 0.0
    %1036 = vmatprep.subr.mxu0 0.0
    %1037 = vmatpush1.msra.mxu0 0.0
    %1038 = vmatprep.subr.mxu0 0.0
    %1039 = vmatpush1.msra.mxu0 0.0
    %1040 = vmatprep.subr.mxu0 0.0
    %1041 = vmatpush1.msra.mxu0 0.0
    %1042 = vmatprep.subr.mxu0 0.0
    %1043 = vmatpush1.msra.mxu0 0.0
    %1044 = vmatprep.subr.mxu0 0.0
    %1045 = vmatpush1.msra.mxu0 0.0
    %1046 = vmatprep.subr.mxu0 0.0
    %1047 = vmatpush1.msra.mxu0 0.0
    %1048 = vmatprep.subr.mxu0 0.0
    %1049 = vmatpush1.msra.mxu0 0.0
    %1050 = vmatprep.subr.mxu0 %v890
    %1051 = vmatpush1.msra.mxu0 %v889
    %1052 = vmatprep.subr.mxu0 %v882
    %1053 = vmatpush1.msra.mxu0 %v881
    %1054 = vmatprep.subr.mxu0 %v874
    %1055 = vmatpush1.msra.mxu0 %v873
    %1056 = vmatprep.subr.mxu0 %v866
    %1057 = vmatpush1.msra.mxu0 %v865
    %1058 = vmatprep.subr.mxu0 0.0
    %1059 = vmatpush2.msra.mxu0 0.0
    %1060 = vmatprep.subr.mxu0 0.0
    %1061 = vmatpush2.msra.mxu0 0.0
    %1062 = vmatprep.subr.mxu0 0.0
    %1063 = vmatpush2.msra.mxu0 0.0
    %1064 = vmatprep.subr.mxu0 0.0
    %1065 = vmatpush2.msra.mxu0 0.0
    %1066 = vmatprep.subr.mxu0 0.0
    %1067 = vmatpush2.msra.mxu0 0.0
    %1068 = vmatprep.subr.mxu0 0.0
    %1069 = vmatpush2.msra.mxu0 0.0
    %1070 = vmatprep.subr.mxu0 0.0
    %1071 = vmatpush2.msra.mxu0 0.0
    %1072 = vmatprep.subr.mxu0 0.0
    %1073 = vmatpush2.msra.mxu0 0.0
    %1074 = vmatprep.subr.mxu0 0.0
    %1075 = vmatpush2.msra.mxu0 0.0
    %1076 = vmatprep.subr.mxu0 0.0
    %1077 = vmatpush2.msra.mxu0 0.0
    %1078 = vmatprep.subr.mxu0 0.0
    %1079 = vmatpush2.msra.mxu0 0.0
    %1080 = vmatprep.subr.mxu0 0.0
    %1081 = vmatpush2.msra.mxu0 0.0
    %1082 = vmatprep.subr.mxu0 0.0
    %1083 = vmatpush2.msra.mxu0 0.0
    %1084 = vmatprep.subr.mxu0 0.0
    %1085 = vmatpush2.msra.mxu0 0.0
    %1086 = vmatprep.subr.mxu0 0.0
    %1087 = vmatpush2.msra.mxu0 0.0
    %1088 = vmatprep.subr.mxu0 0.0
    %1089 = vmatpush2.msra.mxu0 0.0
    %1090 = vmatprep.mubr.f32.mxu0 0.0
    %1091 = vmatmul.mubr.f32.gmra.mxu0 %v926
    %v1092 = vpop.f32.mrf.mxu0
    %v1093 = vadd.f32 %v908, %v1092
    %v1094 = vpop.f32.mrf.mxu0
    %v1095 = vadd.f32 %v908, %v1094
    %1096 = vmatprep.mubr.f32.mxu0 0.0
    %1097 = vmatmul.mubr.f32.gmra.mxu0 %v929
    %v1098 = vpop.f32.mrf.mxu0
    %v1099 = vadd.f32 %v913, %v1098
    %v1100 = vpop.f32.mrf.mxu0
    %v1101 = vadd.f32 %v913, %v1100
    %1102 = vmatprep.mubr.f32.mxu0 0.0
    %1103 = vmatmul.mubr.f32.gmra.mxu0 %v932
    %v1104 = vpop.f32.mrf.mxu0
    %v1105 = vadd.f32 %v918, %v1104
    %v1106 = vpop.f32.mrf.mxu0
    %v1107 = vadd.f32 %v918, %v1106
    %1108 = vmatprep.mubr.f32.mxu0 0.0
    %1109 = vmatmul.mubr.f32.gmra.mxu0 %v935
    %v1110 = vpop.f32.mrf.mxu0
    %v1111 = vadd.f32 %v923, %v1110
    %v1112 = vpop.f32.mrf.mxu0
    %v1113 = vadd.f32 %v923, %v1112
    %1114 = vdwg.mxu0
    %1115 = vmatprep.subr.mxu0 0.0
    %1116 = vmatpush1.msra.mxu0 0.0
    %1117 = vmatprep.subr.mxu0 0.0
    %1118 = vmatpush1.msra.mxu0 0.0
    %1119 = vmatprep.subr.mxu0 0.0
    %1120 = vmatpush1.msra.mxu0 0.0
    %1121 = vmatprep.subr.mxu0 0.0
    %1122 = vmatpush1.msra.mxu0 0.0
    %1123 = vmatprep.subr.mxu0 0.0
    %1124 = vmatpush1.msra.mxu0 0.0
    %1125 = vmatprep.subr.mxu0 0.0
    %1126 = vmatpush1.msra.mxu0 0.0
    %1127 = vmatprep.subr.mxu0 0.0
    %1128 = vmatpush1.msra.mxu0 0.0
    %1129 = vmatprep.subr.mxu0 0.0
    %1130 = vmatpush1.msra.mxu0 0.0
    %1131 = vmatprep.subr.mxu0 0.0
    %1132 = vmatpush1.msra.mxu0 0.0
    %1133 = vmatprep.subr.mxu0 0.0
    %1134 = vmatpush1.msra.mxu0 0.0
    %1135 = vmatprep.subr.mxu0 0.0
    %1136 = vmatpush1.msra.mxu0 0.0
    %1137 = vmatprep.subr.mxu0 0.0
    %1138 = vmatpush1.msra.mxu0 0.0
    %1139 = vmatprep.subr.mxu0 %v892
    %1140 = vmatpush1.msra.mxu0 %v891
    %1141 = vmatprep.subr.mxu0 %v884
    %1142 = vmatpush1.msra.mxu0 %v883
    %1143 = vmatprep.subr.mxu0 %v876
    %1144 = vmatpush1.msra.mxu0 %v875
    %1145 = vmatprep.subr.mxu0 %v868
    %1146 = vmatpush1.msra.mxu0 %v867
    %1147 = vmatprep.subr.mxu0 0.0
    %1148 = vmatpush2.msra.mxu0 0.0
    %1149 = vmatprep.subr.mxu0 0.0
    %1150 = vmatpush2.msra.mxu0 0.0
    %1151 = vmatprep.subr.mxu0 0.0
    %1152 = vmatpush2.msra.mxu0 0.0
    %1153 = vmatprep.subr.mxu0 0.0
    %1154 = vmatpush2.msra.mxu0 0.0
    %1155 = vmatprep.subr.mxu0 0.0
    %1156 = vmatpush2.msra.mxu0 0.0
    %1157 = vmatprep.subr.mxu0 0.0
    %1158 = vmatpush2.msra.mxu0 0.0
    %1159 = vmatprep.subr.mxu0 0.0
    %1160 = vmatpush2.msra.mxu0 0.0
    %1161 = vmatprep.subr.mxu0 0.0
    %1162 = vmatpush2.msra.mxu0 0.0
    %1163 = vmatprep.subr.mxu0 0.0
    %1164 = vmatpush2.msra.mxu0 0.0
    %1165 = vmatprep.subr.mxu0 0.0
    %1166 = vmatpush2.msra.mxu0 0.0
    %1167 = vmatprep.subr.mxu0 0.0
    %1168 = vmatpush2.msra.mxu0 0.0
    %1169 = vmatprep.subr.mxu0 0.0
    %1170 = vmatpush2.msra.mxu0 0.0
    %1171 = vmatprep.subr.mxu0 0.0
    %1172 = vmatpush2.msra.mxu0 0.0
    %1173 = vmatprep.subr.mxu0 0.0
    %1174 = vmatpush2.msra.mxu0 0.0
    %1175 = vmatprep.subr.mxu0 0.0
    %1176 = vmatpush2.msra.mxu0 0.0
    %1177 = vmatprep.subr.mxu0 0.0
    %1178 = vmatpush2.msra.mxu0 0.0
    %1179 = vmatprep.mubr.f32.mxu0 0.0
    %1180 = vmatmul.mubr.f32.gmra.mxu0 %v926
    %v1181 = vpop.f32.mrf.mxu0
    %v1182 = vadd.f32 %v908, %v1181
    %v1183 = vpop.f32.mrf.mxu0
    %v1184 = vadd.f32 %v908, %v1183
    %1185 = vmatprep.mubr.f32.mxu0 0.0
    %1186 = vmatmul.mubr.f32.gmra.mxu0 %v929
    %v1187 = vpop.f32.mrf.mxu0
    %v1188 = vadd.f32 %v913, %v1187
    %v1189 = vpop.f32.mrf.mxu0
    %v1190 = vadd.f32 %v913, %v1189
    %1191 = vmatprep.mubr.f32.mxu0 0.0
    %1192 = vmatmul.mubr.f32.gmra.mxu0 %v932
    %v1193 = vpop.f32.mrf.mxu0
    %v1194 = vadd.f32 %v918, %v1193
    %v1195 = vpop.f32.mrf.mxu0
    %v1196 = vadd.f32 %v918, %v1195
    %1197 = vmatprep.mubr.f32.mxu0 0.0
    %1198 = vmatmul.mubr.f32.gmra.mxu0 %v935
    %v1199 = vpop.f32.mrf.mxu0
    %v1200 = vadd.f32 %v923, %v1199
    %v1201 = vpop.f32.mrf.mxu0
    %v1202 = vadd.f32 %v923, %v1201
    %1203 = vdwg.mxu0
    %1204 = vmatprep.subr.mxu0 0.0
    %1205 = vmatpush1.msra.mxu0 0.0
    %1206 = vmatprep.subr.mxu0 0.0
    %1207 = vmatpush1.msra.mxu0 0.0
    %1208 = vmatprep.subr.mxu0 0.0
    %1209 = vmatpush1.msra.mxu0 0.0
    %1210 = vmatprep.subr.mxu0 0.0
    %1211 = vmatpush1.msra.mxu0 0.0
    %1212 = vmatprep.subr.mxu0 0.0
    %1213 = vmatpush1.msra.mxu0 0.0
    %1214 = vmatprep.subr.mxu0 0.0
    %1215 = vmatpush1.msra.mxu0 0.0
    %1216 = vmatprep.subr.mxu0 0.0
    %1217 = vmatpush1.msra.mxu0 0.0
    %1218 = vmatprep.subr.mxu0 0.0
    %1219 = vmatpush1.msra.mxu0 0.0
    %1220 = vmatprep.subr.mxu0 0.0
    %1221 = vmatpush1.msra.mxu0 0.0
    %1222 = vmatprep.subr.mxu0 0.0
    %1223 = vmatpush1.msra.mxu0 0.0
    %1224 = vmatprep.subr.mxu0 0.0
    %1225 = vmatpush1.msra.mxu0 0.0
    %1226 = vmatprep.subr.mxu0 0.0
    %1227 = vmatpush1.msra.mxu0 0.0
    %1228 = vmatprep.subr.mxu0 %v894
    %1229 = vmatpush1.msra.mxu0 %v893
    %1230 = vmatprep.subr.mxu0 %v886
    %1231 = vmatpush1.msra.mxu0 %v885
    %1232 = vmatprep.subr.mxu0 %v878
    %1233 = vmatpush1.msra.mxu0 %v877
    %1234 = vmatprep.subr.mxu0 %v870
    %1235 = vmatpush1.msra.mxu0 %v869
    %1236 = vmatprep.subr.mxu0 0.0
    %1237 = vmatpush2.msra.mxu0 0.0
    %1238 = vmatprep.subr.mxu0 0.0
    %1239 = vmatpush2.msra.mxu0 0.0
    %1240 = vmatprep.subr.mxu0 0.0
    %1241 = vmatpush2.msra.mxu0 0.0
    %1242 = vmatprep.subr.mxu0 0.0
    %1243 = vmatpush2.msra.mxu0 0.0
    %1244 = vmatprep.subr.mxu0 0.0
    %1245 = vmatpush2.msra.mxu0 0.0
    %1246 = vmatprep.subr.mxu0 0.0
    %1247 = vmatpush2.msra.mxu0 0.0
    %1248 = vmatprep.subr.mxu0 0.0
    %1249 = vmatpush2.msra.mxu0 0.0
    %1250 = vmatprep.subr.mxu0 0.0
    %1251 = vmatpush2.msra.mxu0 0.0
    %1252 = vmatprep.subr.mxu0 0.0
    %1253 = vmatpush2.msra.mxu0 0.0
    %1254 = vmatprep.subr.mxu0 0.0
    %1255 = vmatpush2.msra.mxu0 0.0
    %1256 = vmatprep.subr.mxu0 0.0
    %1257 = vmatpush2.msra.mxu0 0.0
    %1258 = vmatprep.subr.mxu0 0.0
    %1259 = vmatpush2.msra.mxu0 0.0
    %1260 = vmatprep.subr.mxu0 0.0
    %1261 = vmatpush2.msra.mxu0 0.0
    %1262 = vmatprep.subr.mxu0 0.0
    %1263 = vmatpush2.msra.mxu0 0.0
    %1264 = vmatprep.subr.mxu0 0.0
    %1265 = vmatpush2.msra.mxu0 0.0
    %1266 = vmatprep.subr.mxu0 0.0
    %1267 = vmatpush2.msra.mxu0 0.0
    %1268 = vmatprep.mubr.f32.mxu0 0.0
    %1269 = vmatmul.mubr.f32.gmra.mxu0 %v926
    %v1270 = vpop.f32.mrf.mxu0
    %v1271 = vadd.f32 %v908, %v1270
    %v1272 = vpop.f32.mrf.mxu0
    %v1273 = vadd.f32 %v908, %v1272
    %1274 = vmatprep.mubr.f32.mxu0 0.0
    %1275 = vmatmul.mubr.f32.gmra.mxu0 %v929
    %v1276 = vpop.f32.mrf.mxu0
    %v1277 = vadd.f32 %v913, %v1276
    %v1278 = vpop.f32.mrf.mxu0
    %v1279 = vadd.f32 %v913, %v1278
    %1280 = vmatprep.mubr.f32.mxu0 0.0
    %1281 = vmatmul.mubr.f32.gmra.mxu0 %v932
    %v1282 = vpop.f32.mrf.mxu0
    %v1283 = vadd.f32 %v918, %v1282
    %v1284 = vpop.f32.mrf.mxu0
    %v1285 = vadd.f32 %v918, %v1284
    %1286 = vmatprep.mubr.f32.mxu0 0.0
    %1287 = vmatmul.mubr.f32.gmra.mxu0 %v935
    %v1288 = vpop.f32.mrf.mxu0
    %v1289 = vadd.f32 %v923, %v1288
    %v1290 = vpop.f32.mrf.mxu0
    %v1291 = vadd.f32 %v923, %v1290
    %1292 = vdwg.mxu0
    %v1293 = vtanh.pop %v1004
    %v1294 = vtanh.pop %v1006
    %v1295 = vtanh.pop %v1093
    %v1296 = vtanh.pop %v1095
    %v1297 = vtanh.pop %v1182
    %v1298 = vtanh.pop %v1184
    %v1299 = vtanh.pop %v1271
    %v1300 = vtanh.pop %v1273
    %v1301 = vtanh.pop %v1010
    %v1302 = vtanh.pop %v1012
    %v1303 = vtanh.pop %v1099
    %v1304 = vtanh.pop %v1101
    %v1305 = vtanh.pop %v1188
    %v1306 = vtanh.pop %v1190
    %v1307 = vtanh.pop %v1277
    %v1308 = vtanh.pop %v1279
    %v1309 = vtanh.pop %v1016
    %v1310 = vtanh.pop %v1018
    %v1311 = vtanh.pop %v1105
    %v1312 = vtanh.pop %v1107
    %v1313 = vtanh.pop %v1194
    %v1314 = vtanh.pop %v1196
    %v1315 = vtanh.pop %v1283
    %v1316 = vtanh.pop %v1285
    %v1317 = vtanh.pop %v1022
    %v1318 = vtanh.pop %v1024
    %v1319 = vtanh.pop %v1111
    %v1320 = vtanh.pop %v1113
    %v1321 = vtanh.pop %v1200
    %v1322 = vtanh.pop %v1202
    %v1323 = vtanh.pop %v1289
    %v1324 = vtanh.pop %v1291
    %s1325 = scalar_lea.vmem %s1, 96
    %v1326 = vld [vmem:[%s1325] sm:$0xff]
    %v1327 = vld [vmem:[%s1325 + $0x8] sm:$0xff]
    %v1328 = vld [vmem:[%s1325 + $0x10] sm:$0xff]
    %v1329 = vld [vmem:[%s1325 + $0x18] sm:$0xff]
    %s1330 = scalar_lea.vmem %s2, 96
    %v1331 = vld [vmem:[%s1330] sm:$0xff]
    %v1332 = vld [vmem:[%s1330 + $0x8] sm:$0xff]
    %v1333 = vld [vmem:[%s1330 + $0x10] sm:$0xff]
    %v1334 = vld [vmem:[%s1330 + $0x18] sm:$0xff]
    %1336 = vset.pattern.permute.xlu0 0
    %1337 = vperm.xlu0 %1336, %v1331
    %v1338 = vpop.permute.xlu0 %1337
    %1341 = vset.pattern.permute.xlu0 0
    %1342 = vperm.xlu0 %1341, %v1332
    %v1343 = vpop.permute.xlu0 %1342
    %1346 = vset.pattern.permute.xlu0 0
    %1347 = vperm.xlu0 %1346, %v1333
    %v1348 = vpop.permute.xlu0 %1347
    %1351 = vset.pattern.permute.xlu0 0
    %1352 = vperm.xlu0 %1351, %v1334
    %v1353 = vpop.permute.xlu0 %1352
    %v1356 = vsel %vm494, %v1326, 0
    %v1359 = vsel %vm494, %v1327, 0
    %v1362 = vsel %vm494, %v1328, 0
    %v1365 = vsel %vm494, %v1329, 0
    %1367 = vmatprep.subr.mxu0 0.0
    %1368 = vmatpush1.msra.mxu0 0.0
    %1369 = vmatprep.subr.mxu0 0.0
    %1370 = vmatpush1.msra.mxu0 0.0
    %1371 = vmatprep.subr.mxu0 0.0
    %1372 = vmatpush1.msra.mxu0 0.0
    %1373 = vmatprep.subr.mxu0 0.0
    %1374 = vmatpush1.msra.mxu0 0.0
    %1375 = vmatprep.subr.mxu0 0.0
    %1376 = vmatpush1.msra.mxu0 0.0
    %1377 = vmatprep.subr.mxu0 0.0
    %1378 = vmatpush1.msra.mxu0 0.0
    %1379 = vmatprep.subr.mxu0 0.0
    %1380 = vmatpush1.msra.mxu0 0.0
    %1381 = vmatprep.subr.mxu0 0.0
    %1382 = vmatpush1.msra.mxu0 0.0
    %1383 = vmatprep.subr.mxu0 0.0
    %1384 = vmatpush1.msra.mxu0 0.0
    %1385 = vmatprep.subr.mxu0 0.0
    %1386 = vmatpush1.msra.mxu0 0.0
    %1387 = vmatprep.subr.mxu0 0.0
    %1388 = vmatpush1.msra.mxu0 0.0
    %1389 = vmatprep.subr.mxu0 0.0
    %1390 = vmatpush1.msra.mxu0 0.0
    %1391 = vmatprep.subr.mxu0 %v1318
    %1392 = vmatpush1.msra.mxu0 %v1317
    %1393 = vmatprep.subr.mxu0 %v1310
    %1394 = vmatpush1.msra.mxu0 %v1309
    %1395 = vmatprep.subr.mxu0 %v1302
    %1396 = vmatpush1.msra.mxu0 %v1301
    %1397 = vmatprep.subr.mxu0 %v1294
    %1398 = vmatpush1.msra.mxu0 %v1293
    %1399 = vmatprep.subr.mxu0 0.0
    %1400 = vmatpush2.msra.mxu0 0.0
    %1401 = vmatprep.subr.mxu0 0.0
    %1402 = vmatpush2.msra.mxu0 0.0
    %1403 = vmatprep.subr.mxu0 0.0
    %1404 = vmatpush2.msra.mxu0 0.0
    %1405 = vmatprep.subr.mxu0 0.0
    %1406 = vmatpush2.msra.mxu0 0.0
    %1407 = vmatprep.subr.mxu0 0.0
    %1408 = vmatpush2.msra.mxu0 0.0
    %1409 = vmatprep.subr.mxu0 0.0
    %1410 = vmatpush2.msra.mxu0 0.0
    %1411 = vmatprep.subr.mxu0 0.0
    %1412 = vmatpush2.msra.mxu0 0.0
    %1413 = vmatprep.subr.mxu0 0.0
    %1414 = vmatpush2.msra.mxu0 0.0
    %1415 = vmatprep.subr.mxu0 0.0
    %1416 = vmatpush2.msra.mxu0 0.0
    %1417 = vmatprep.subr.mxu0 0.0
    %1418 = vmatpush2.msra.mxu0 0.0
    %1419 = vmatprep.subr.mxu0 0.0
    %1420 = vmatpush2.msra.mxu0 0.0
    %1421 = vmatprep.subr.mxu0 0.0
    %1422 = vmatpush2.msra.mxu0 0.0
    %1423 = vmatprep.subr.mxu0 0.0
    %1424 = vmatpush2.msra.mxu0 0.0
    %1425 = vmatprep.subr.mxu0 0.0
    %1426 = vmatpush2.msra.mxu0 0.0
    %1427 = vmatprep.subr.mxu0 0.0
    %1428 = vmatpush2.msra.mxu0 0.0
    %1429 = vmatprep.subr.mxu0 0.0
    %1430 = vmatpush2.msra.mxu0 0.0
    %1431 = vmatprep.mubr.f32.mxu0 0.0
    %1432 = vmatmul.mubr.f32.gmra.mxu0 %v1356
    %v1433 = vpop.f32.mrf.mxu0
    %v1434 = vadd.f32 %v1338, %v1433
    %v1435 = vpop.f32.mrf.mxu0
    %v1436 = vadd.f32 %v1338, %v1435
    %1437 = vmatprep.mubr.f32.mxu0 0.0
    %1438 = vmatmul.mubr.f32.gmra.mxu0 %v1359
    %v1439 = vpop.f32.mrf.mxu0
    %v1440 = vadd.f32 %v1343, %v1439
    %v1441 = vpop.f32.mrf.mxu0
    %v1442 = vadd.f32 %v1343, %v1441
    %1443 = vmatprep.mubr.f32.mxu0 0.0
    %1444 = vmatmul.mubr.f32.gmra.mxu0 %v1362
    %v1445 = vpop.f32.mrf.mxu0
    %v1446 = vadd.f32 %v1348, %v1445
    %v1447 = vpop.f32.mrf.mxu0
    %v1448 = vadd.f32 %v1348, %v1447
    %1449 = vmatprep.mubr.f32.mxu0 0.0
    %1450 = vmatmul.mubr.f32.gmra.mxu0 %v1365
    %v1451 = vpop.f32.mrf.mxu0
    %v1452 = vadd.f32 %v1353, %v1451
    %v1453 = vpop.f32.mrf.mxu0
    %v1454 = vadd.f32 %v1353, %v1453
    %1455 = vdwg.mxu0
    %1456 = vmatprep.subr.mxu0 0.0
    %1457 = vmatpush1.msra.mxu0 0.0
    %1458 = vmatprep.subr.mxu0 0.0
    %1459 = vmatpush1.msra.mxu0 0.0
    %1460 = vmatprep.subr.mxu0 0.0
    %1461 = vmatpush1.msra.mxu0 0.0
    %1462 = vmatprep.subr.mxu0 0.0
    %1463 = vmatpush1.msra.mxu0 0.0
    %1464 = vmatprep.subr.mxu0 0.0
    %1465 = vmatpush1.msra.mxu0 0.0
    %1466 = vmatprep.subr.mxu0 0.0
    %1467 = vmatpush1.msra.mxu0 0.0
    %1468 = vmatprep.subr.mxu0 0.0
    %1469 = vmatpush1.msra.mxu0 0.0
    %1470 = vmatprep.subr.mxu0 0.0
    %1471 = vmatpush1.msra.mxu0 0.0
    %1472 = vmatprep.subr.mxu0 0.0
    %1473 = vmatpush1.msra.mxu0 0.0
    %1474 = vmatprep.subr.mxu0 0.0
    %1475 = vmatpush1.msra.mxu0 0.0
    %1476 = vmatprep.subr.mxu0 0.0
    %1477 = vmatpush1.msra.mxu0 0.0
    %1478 = vmatprep.subr.mxu0 0.0
    %1479 = vmatpush1.msra.mxu0 0.0
    %1480 = vmatprep.subr.mxu0 %v1320
    %1481 = vmatpush1.msra.mxu0 %v1319
    %1482 = vmatprep.subr.mxu0 %v1312
    %1483 = vmatpush1.msra.mxu0 %v1311
    %1484 = vmatprep.subr.mxu0 %v1304
    %1485 = vmatpush1.msra.mxu0 %v1303
    %1486 = vmatprep.subr.mxu0 %v1296
    %1487 = vmatpush1.msra.mxu0 %v1295
    %1488 = vmatprep.subr.mxu0 0.0
    %1489 = vmatpush2.msra.mxu0 0.0
    %1490 = vmatprep.subr.mxu0 0.0
    %1491 = vmatpush2.msra.mxu0 0.0
    %1492 = vmatprep.subr.mxu0 0.0
    %1493 = vmatpush2.msra.mxu0 0.0
    %1494 = vmatprep.subr.mxu0 0.0
    %1495 = vmatpush2.msra.mxu0 0.0
    %1496 = vmatprep.subr.mxu0 0.0
    %1497 = vmatpush2.msra.mxu0 0.0
    %1498 = vmatprep.subr.mxu0 0.0
    %1499 = vmatpush2.msra.mxu0 0.0
    %1500 = vmatprep.subr.mxu0 0.0
    %1501 = vmatpush2.msra.mxu0 0.0
    %1502 = vmatprep.subr.mxu0 0.0
    %1503 = vmatpush2.msra.mxu0 0.0
    %1504 = vmatprep.subr.mxu0 0.0
    %1505 = vmatpush2.msra.mxu0 0.0
    %1506 = vmatprep.subr.mxu0 0.0
    %1507 = vmatpush2.msra.mxu0 0.0
    %1508 = vmatprep.subr.mxu0 0.0
    %1509 = vmatpush2.msra.mxu0 0.0
    %1510 = vmatprep.subr.mxu0 0.0
    %1511 = vmatpush2.msra.mxu0 0.0
    %1512 = vmatprep.subr.mxu0 0.0
    %1513 = vmatpush2.msra.mxu0 0.0
    %1514 = vmatprep.subr.mxu0 0.0
    %1515 = vmatpush2.msra.mxu0 0.0
    %1516 = vmatprep.subr.mxu0 0.0
    %1517 = vmatpush2.msra.mxu0 0.0
    %1518 = vmatprep.subr.mxu0 0.0
    %1519 = vmatpush2.msra.mxu0 0.0
    %1520 = vmatprep.mubr.f32.mxu0 0.0
    %1521 = vmatmul.mubr.f32.gmra.mxu0 %v1356
    %v1522 = vpop.f32.mrf.mxu0
    %v1523 = vadd.f32 %v1338, %v1522
    %v1524 = vpop.f32.mrf.mxu0
    %v1525 = vadd.f32 %v1338, %v1524
    %1526 = vmatprep.mubr.f32.mxu0 0.0
    %1527 = vmatmul.mubr.f32.gmra.mxu0 %v1359
    %v1528 = vpop.f32.mrf.mxu0
    %v1529 = vadd.f32 %v1343, %v1528
    %v1530 = vpop.f32.mrf.mxu0
    %v1531 = vadd.f32 %v1343, %v1530
    %1532 = vmatprep.mubr.f32.mxu0 0.0
    %1533 = vmatmul.mubr.f32.gmra.mxu0 %v1362
    %v1534 = vpop.f32.mrf.mxu0
    %v1535 = vadd.f32 %v1348, %v1534
    %v1536 = vpop.f32.mrf.mxu0
    %v1537 = vadd.f32 %v1348, %v1536
    %1538 = vmatprep.mubr.f32.mxu0 0.0
    %1539 = vmatmul.mubr.f32.gmra.mxu0 %v1365
    %v1540 = vpop.f32.mrf.mxu0
    %v1541 = vadd.f32 %v1353, %v1540
    %v1542 = vpop.f32.mrf.mxu0
    %v1543 = vadd.f32 %v1353, %v1542
    %1544 = vdwg.mxu0
    %1545 = vmatprep.subr.mxu0 0.0
    %1546 = vmatpush1.msra.mxu0 0.0
    %1547 = vmatprep.subr.mxu0 0.0
    %1548 = vmatpush1.msra.mxu0 0.0
    %1549 = vmatprep.subr.mxu0 0.0
    %1550 = vmatpush1.msra.mxu0 0.0
    %1551 = vmatprep.subr.mxu0 0.0
    %1552 = vmatpush1.msra.mxu0 0.0
    %1553 = vmatprep.subr.mxu0 0.0
    %1554 = vmatpush1.msra.mxu0 0.0
    %1555 = vmatprep.subr.mxu0 0.0
    %1556 = vmatpush1.msra.mxu0 0.0
    %1557 = vmatprep.subr.mxu0 0.0
    %1558 = vmatpush1.msra.mxu0 0.0
    %1559 = vmatprep.subr.mxu0 0.0
    %1560 = vmatpush1.msra.mxu0 0.0
    %1561 = vmatprep.subr.mxu0 0.0
    %1562 = vmatpush1.msra.mxu0 0.0
    %1563 = vmatprep.subr.mxu0 0.0
    %1564 = vmatpush1.msra.mxu0 0.0
    %1565 = vmatprep.subr.mxu0 0.0
    %1566 = vmatpush1.msra.mxu0 0.0
    %1567 = vmatprep.subr.mxu0 0.0
    %1568 = vmatpush1.msra.mxu0 0.0
    %1569 = vmatprep.subr.mxu0 %v1322
    %1570 = vmatpush1.msra.mxu0 %v1321
    %1571 = vmatprep.subr.mxu0 %v1314
    %1572 = vmatpush1.msra.mxu0 %v1313
    %1573 = vmatprep.subr.mxu0 %v1306
    %1574 = vmatpush1.msra.mxu0 %v1305
    %1575 = vmatprep.subr.mxu0 %v1298
    %1576 = vmatpush1.msra.mxu0 %v1297
    %1577 = vmatprep.subr.mxu0 0.0
    %1578 = vmatpush2.msra.mxu0 0.0
    %1579 = vmatprep.subr.mxu0 0.0
    %1580 = vmatpush2.msra.mxu0 0.0
    %1581 = vmatprep.subr.mxu0 0.0
    %1582 = vmatpush2.msra.mxu0 0.0
    %1583 = vmatprep.subr.mxu0 0.0
    %1584 = vmatpush2.msra.mxu0 0.0
    %1585 = vmatprep.subr.mxu0 0.0
    %1586 = vmatpush2.msra.mxu0 0.0
    %1587 = vmatprep.subr.mxu0 0.0
    %1588 = vmatpush2.msra.mxu0 0.0
    %1589 = vmatprep.subr.mxu0 0.0
    %1590 = vmatpush2.msra.mxu0 0.0
    %1591 = vmatprep.subr.mxu0 0.0
    %1592 = vmatpush2.msra.mxu0 0.0
    %1593 = vmatprep.subr.mxu0 0.0
    %1594 = vmatpush2.msra.mxu0 0.0
    %1595 = vmatprep.subr.mxu0 0.0
    %1596 = vmatpush2.msra.mxu0 0.0
    %1597 = vmatprep.subr.mxu0 0.0
    %1598 = vmatpush2.msra.mxu0 0.0
    %1599 = vmatprep.subr.mxu0 0.0
    %1600 = vmatpush2.msra.mxu0 0.0
    %1601 = vmatprep.subr.mxu0 0.0
    %1602 = vmatpush2.msra.mxu0 0.0
    %1603 = vmatprep.subr.mxu0 0.0
    %1604 = vmatpush2.msra.mxu0 0.0
    %1605 = vmatprep.subr.mxu0 0.0
    %1606 = vmatpush2.msra.mxu0 0.0
    %1607 = vmatprep.subr.mxu0 0.0
    %1608 = vmatpush2.msra.mxu0 0.0
    %1609 = vmatprep.mubr.f32.mxu0 0.0
    %1610 = vmatmul.mubr.f32.gmra.mxu0 %v1356
    %v1611 = vpop.f32.mrf.mxu0
    %v1612 = vadd.f32 %v1338, %v1611
    %v1613 = vpop.f32.mrf.mxu0
    %v1614 = vadd.f32 %v1338, %v1613
    %1615 = vmatprep.mubr.f32.mxu0 0.0
    %1616 = vmatmul.mubr.f32.gmra.mxu0 %v1359
    %v1617 = vpop.f32.mrf.mxu0
    %v1618 = vadd.f32 %v1343, %v1617
    %v1619 = vpop.f32.mrf.mxu0
    %v1620 = vadd.f32 %v1343, %v1619
    %1621 = vmatprep.mubr.f32.mxu0 0.0
    %1622 = vmatmul.mubr.f32.gmra.mxu0 %v1362
    %v1623 = vpop.f32.mrf.mxu0
    %v1624 = vadd.f32 %v1348, %v1623
    %v1625 = vpop.f32.mrf.mxu0
    %v1626 = vadd.f32 %v1348, %v1625
    %1627 = vmatprep.mubr.f32.mxu0 0.0
    %1628 = vmatmul.mubr.f32.gmra.mxu0 %v1365
    %v1629 = vpop.f32.mrf.mxu0
    %v1630 = vadd.f32 %v1353, %v1629
    %v1631 = vpop.f32.mrf.mxu0
    %v1632 = vadd.f32 %v1353, %v1631
    %1633 = vdwg.mxu0
    %1634 = vmatprep.subr.mxu0 0.0
    %1635 = vmatpush1.msra.mxu0 0.0
    %1636 = vmatprep.subr.mxu0 0.0
    %1637 = vmatpush1.msra.mxu0 0.0
    %1638 = vmatprep.subr.mxu0 0.0
    %1639 = vmatpush1.msra.mxu0 0.0
    %1640 = vmatprep.subr.mxu0 0.0
    %1641 = vmatpush1.msra.mxu0 0.0
    %1642 = vmatprep.subr.mxu0 0.0
    %1643 = vmatpush1.msra.mxu0 0.0
    %1644 = vmatprep.subr.mxu0 0.0
    %1645 = vmatpush1.msra.mxu0 0.0
    %1646 = vmatprep.subr.mxu0 0.0
    %1647 = vmatpush1.msra.mxu0 0.0
    %1648 = vmatprep.subr.mxu0 0.0
    %1649 = vmatpush1.msra.mxu0 0.0
    %1650 = vmatprep.subr.mxu0 0.0
    %1651 = vmatpush1.msra.mxu0 0.0
    %1652 = vmatprep.subr.mxu0 0.0
    %1653 = vmatpush1.msra.mxu0 0.0
    %1654 = vmatprep.subr.mxu0 0.0
    %1655 = vmatpush1.msra.mxu0 0.0
    %1656 = vmatprep.subr.mxu0 0.0
    %1657 = vmatpush1.msra.mxu0 0.0
    %1658 = vmatprep.subr.mxu0 %v1324
    %1659 = vmatpush1.msra.mxu0 %v1323
    %1660 = vmatprep.subr.mxu0 %v1316
    %1661 = vmatpush1.msra.mxu0 %v1315
    %1662 = vmatprep.subr.mxu0 %v1308
    %1663 = vmatpush1.msra.mxu0 %v1307
    %1664 = vmatprep.subr.mxu0 %v1300
    %1665 = vmatpush1.msra.mxu0 %v1299
    %1666 = vmatprep.subr.mxu0 0.0
    %1667 = vmatpush2.msra.mxu0 0.0
    %1668 = vmatprep.subr.mxu0 0.0
    %1669 = vmatpush2.msra.mxu0 0.0
    %1670 = vmatprep.subr.mxu0 0.0
    %1671 = vmatpush2.msra.mxu0 0.0
    %1672 = vmatprep.subr.mxu0 0.0
    %1673 = vmatpush2.msra.mxu0 0.0
    %1674 = vmatprep.subr.mxu0 0.0
    %1675 = vmatpush2.msra.mxu0 0.0
    %1676 = vmatprep.subr.mxu0 0.0
    %1677 = vmatpush2.msra.mxu0 0.0
    %1678 = vmatprep.subr.mxu0 0.0
    %1679 = vmatpush2.msra.mxu0 0.0
    %1680 = vmatprep.subr.mxu0 0.0
    %1681 = vmatpush2.msra.mxu0 0.0
    %1682 = vmatprep.subr.mxu0 0.0
    %1683 = vmatpush2.msra.mxu0 0.0
    %1684 = vmatprep.subr.mxu0 0.0
    %1685 = vmatpush2.msra.mxu0 0.0
    %1686 = vmatprep.subr.mxu0 0.0
    %1687 = vmatpush2.msra.mxu0 0.0
    %1688 = vmatprep.subr.mxu0 0.0
    %1689 = vmatpush2.msra.mxu0 0.0
    %1690 = vmatprep.subr.mxu0 0.0
    %1691 = vmatpush2.msra.mxu0 0.0
    %1692 = vmatprep.subr.mxu0 0.0
    %1693 = vmatpush2.msra.mxu0 0.0
    %1694 = vmatprep.subr.mxu0 0.0
    %1695 = vmatpush2.msra.mxu0 0.0
    %1696 = vmatprep.subr.mxu0 0.0
    %1697 = vmatpush2.msra.mxu0 0.0
    %1698 = vmatprep.mubr.f32.mxu0 0.0
    %1699 = vmatmul.mubr.f32.gmra.mxu0 %v1356
    %v1700 = vpop.f32.mrf.mxu0
    %v1701 = vadd.f32 %v1338, %v1700
    %v1702 = vpop.f32.mrf.mxu0
    %v1703 = vadd.f32 %v1338, %v1702
    %1704 = vmatprep.mubr.f32.mxu0 0.0
    %1705 = vmatmul.mubr.f32.gmra.mxu0 %v1359
    %v1706 = vpop.f32.mrf.mxu0
    %v1707 = vadd.f32 %v1343, %v1706
    %v1708 = vpop.f32.mrf.mxu0
    %v1709 = vadd.f32 %v1343, %v1708
    %1710 = vmatprep.mubr.f32.mxu0 0.0
    %1711 = vmatmul.mubr.f32.gmra.mxu0 %v1362
    %v1712 = vpop.f32.mrf.mxu0
    %v1713 = vadd.f32 %v1348, %v1712
    %v1714 = vpop.f32.mrf.mxu0
    %v1715 = vadd.f32 %v1348, %v1714
    %1716 = vmatprep.mubr.f32.mxu0 0.0
    %1717 = vmatmul.mubr.f32.gmra.mxu0 %v1365
    %v1718 = vpop.f32.mrf.mxu0
    %v1719 = vadd.f32 %v1353, %v1718
    %v1720 = vpop.f32.mrf.mxu0
    %v1721 = vadd.f32 %v1353, %v1720
    %1722 = vdwg.mxu0
    %v1723 = vtanh.pop %v1434
    %v1724 = vtanh.pop %v1436
    %v1725 = vtanh.pop %v1523
    %v1726 = vtanh.pop %v1525
    %v1727 = vtanh.pop %v1612
    %v1728 = vtanh.pop %v1614
    %v1729 = vtanh.pop %v1701
    %v1730 = vtanh.pop %v1703
    %v1731 = vtanh.pop %v1440
    %v1732 = vtanh.pop %v1442
    %v1733 = vtanh.pop %v1529
    %v1734 = vtanh.pop %v1531
    %v1735 = vtanh.pop %v1618
    %v1736 = vtanh.pop %v1620
    %v1737 = vtanh.pop %v1707
    %v1738 = vtanh.pop %v1709
    %v1739 = vtanh.pop %v1446
    %v1740 = vtanh.pop %v1448
    %v1741 = vtanh.pop %v1535
    %v1742 = vtanh.pop %v1537
    %v1743 = vtanh.pop %v1624
    %v1744 = vtanh.pop %v1626
    %v1745 = vtanh.pop %v1713
    %v1746 = vtanh.pop %v1715
    %v1747 = vtanh.pop %v1452
    %v1748 = vtanh.pop %v1454
    %v1749 = vtanh.pop %v1541
    %v1750 = vtanh.pop %v1543
    %v1751 = vtanh.pop %v1630
    %v1752 = vtanh.pop %v1632
    %v1753 = vtanh.pop %v1719
    %v1754 = vtanh.pop %v1721
    %s1755 = scalar_lea.vmem %s1, 128
    %v1756 = vld [vmem:[%s1755] sm:$0xff]
    %v1757 = vld [vmem:[%s1755 + $0x8] sm:$0xff]
    %v1758 = vld [vmem:[%s1755 + $0x10] sm:$0xff]
    %v1759 = vld [vmem:[%s1755 + $0x18] sm:$0xff]
    %s1760 = scalar_lea.vmem %s2, 128
    %v1761 = vld [vmem:[%s1760] sm:$0xff]
    %v1762 = vld [vmem:[%s1760 + $0x8] sm:$0xff]
    %v1763 = vld [vmem:[%s1760 + $0x10] sm:$0xff]
    %v1764 = vld [vmem:[%s1760 + $0x18] sm:$0xff]
    %1766 = vset.pattern.permute.xlu0 0
    %1767 = vperm.xlu0 %1766, %v1761
    %v1768 = vpop.permute.xlu0 %1767
    %1771 = vset.pattern.permute.xlu0 0
    %1772 = vperm.xlu0 %1771, %v1762
    %v1773 = vpop.permute.xlu0 %1772
    %1776 = vset.pattern.permute.xlu0 0
    %1777 = vperm.xlu0 %1776, %v1763
    %v1778 = vpop.permute.xlu0 %1777
    %1781 = vset.pattern.permute.xlu0 0
    %1782 = vperm.xlu0 %1781, %v1764
    %v1783 = vpop.permute.xlu0 %1782
    %v1786 = vsel %vm494, %v1756, 0
    %v1789 = vsel %vm494, %v1757, 0
    %v1792 = vsel %vm494, %v1758, 0
    %v1795 = vsel %vm494, %v1759, 0
    %1797 = vmatprep.subr.mxu0 0.0
    %1798 = vmatpush1.msra.mxu0 0.0
    %1799 = vmatprep.subr.mxu0 0.0
    %1800 = vmatpush1.msra.mxu0 0.0
    %1801 = vmatprep.subr.mxu0 0.0
    %1802 = vmatpush1.msra.mxu0 0.0
    %1803 = vmatprep.subr.mxu0 0.0
    %1804 = vmatpush1.msra.mxu0 0.0
    %1805 = vmatprep.subr.mxu0 0.0
    %1806 = vmatpush1.msra.mxu0 0.0
    %1807 = vmatprep.subr.mxu0 0.0
    %1808 = vmatpush1.msra.mxu0 0.0
    %1809 = vmatprep.subr.mxu0 0.0
    %1810 = vmatpush1.msra.mxu0 0.0
    %1811 = vmatprep.subr.mxu0 0.0
    %1812 = vmatpush1.msra.mxu0 0.0
    %1813 = vmatprep.subr.mxu0 0.0
    %1814 = vmatpush1.msra.mxu0 0.0
    %1815 = vmatprep.subr.mxu0 0.0
    %1816 = vmatpush1.msra.mxu0 0.0
    %1817 = vmatprep.subr.mxu0 0.0
    %1818 = vmatpush1.msra.mxu0 0.0
    %1819 = vmatprep.subr.mxu0 0.0
    %1820 = vmatpush1.msra.mxu0 0.0
    %1821 = vmatprep.subr.mxu0 %v1748
    %1822 = vmatpush1.msra.mxu0 %v1747
    %1823 = vmatprep.subr.mxu0 %v1740
    %1824 = vmatpush1.msra.mxu0 %v1739
    %1825 = vmatprep.subr.mxu0 %v1732
    %1826 = vmatpush1.msra.mxu0 %v1731
    %1827 = vmatprep.subr.mxu0 %v1724
    %1828 = vmatpush1.msra.mxu0 %v1723
    %1829 = vmatprep.subr.mxu0 0.0
    %1830 = vmatpush2.msra.mxu0 0.0
    %1831 = vmatprep.subr.mxu0 0.0
    %1832 = vmatpush2.msra.mxu0 0.0
    %1833 = vmatprep.subr.mxu0 0.0
    %1834 = vmatpush2.msra.mxu0 0.0
    %1835 = vmatprep.subr.mxu0 0.0
    %1836 = vmatpush2.msra.mxu0 0.0
    %1837 = vmatprep.subr.mxu0 0.0
    %1838 = vmatpush2.msra.mxu0 0.0
    %1839 = vmatprep.subr.mxu0 0.0
    %1840 = vmatpush2.msra.mxu0 0.0
    %1841 = vmatprep.subr.mxu0 0.0
    %1842 = vmatpush2.msra.mxu0 0.0
    %1843 = vmatprep.subr.mxu0 0.0
    %1844 = vmatpush2.msra.mxu0 0.0
    %1845 = vmatprep.subr.mxu0 0.0
    %1846 = vmatpush2.msra.mxu0 0.0
    %1847 = vmatprep.subr.mxu0 0.0
    %1848 = vmatpush2.msra.mxu0 0.0
    %1849 = vmatprep.subr.mxu0 0.0
    %1850 = vmatpush2.msra.mxu0 0.0
    %1851 = vmatprep.subr.mxu0 0.0
    %1852 = vmatpush2.msra.mxu0 0.0
    %1853 = vmatprep.subr.mxu0 0.0
    %1854 = vmatpush2.msra.mxu0 0.0
    %1855 = vmatprep.subr.mxu0 0.0
    %1856 = vmatpush2.msra.mxu0 0.0
    %1857 = vmatprep.subr.mxu0 0.0
    %1858 = vmatpush2.msra.mxu0 0.0
    %1859 = vmatprep.subr.mxu0 0.0
    %1860 = vmatpush2.msra.mxu0 0.0
    %1861 = vmatprep.mubr.f32.mxu0 0.0
    %1862 = vmatmul.mubr.f32.gmra.mxu0 %v1786
    %v1863 = vpop.f32.mrf.mxu0
    %v1864 = vadd.f32 %v1768, %v1863
    %v1865 = vpop.f32.mrf.mxu0
    %v1866 = vadd.f32 %v1768, %v1865
    %1867 = vmatprep.mubr.f32.mxu0 0.0
    %1868 = vmatmul.mubr.f32.gmra.mxu0 %v1789
    %v1869 = vpop.f32.mrf.mxu0
    %v1870 = vadd.f32 %v1773, %v1869
    %v1871 = vpop.f32.mrf.mxu0
    %v1872 = vadd.f32 %v1773, %v1871
    %1873 = vmatprep.mubr.f32.mxu0 0.0
    %1874 = vmatmul.mubr.f32.gmra.mxu0 %v1792
    %v1875 = vpop.f32.mrf.mxu0
    %v1876 = vadd.f32 %v1778, %v1875
    %v1877 = vpop.f32.mrf.mxu0
    %v1878 = vadd.f32 %v1778, %v1877
    %1879 = vmatprep.mubr.f32.mxu0 0.0
    %1880 = vmatmul.mubr.f32.gmra.mxu0 %v1795
    %v1881 = vpop.f32.mrf.mxu0
    %v1882 = vadd.f32 %v1783, %v1881
    %v1883 = vpop.f32.mrf.mxu0
    %v1884 = vadd.f32 %v1783, %v1883
    %1885 = vdwg.mxu0
    %1886 = vmatprep.subr.mxu0 0.0
    %1887 = vmatpush1.msra.mxu0 0.0
    %1888 = vmatprep.subr.mxu0 0.0
    %1889 = vmatpush1.msra.mxu0 0.0
    %1890 = vmatprep.subr.mxu0 0.0
    %1891 = vmatpush1.msra.mxu0 0.0
    %1892 = vmatprep.subr.mxu0 0.0
    %1893 = vmatpush1.msra.mxu0 0.0
    %1894 = vmatprep.subr.mxu0 0.0
    %1895 = vmatpush1.msra.mxu0 0.0
    %1896 = vmatprep.subr.mxu0 0.0
    %1897 = vmatpush1.msra.mxu0 0.0
    %1898 = vmatprep.subr.mxu0 0.0
    %1899 = vmatpush1.msra.mxu0 0.0
    %1900 = vmatprep.subr.mxu0 0.0
    %1901 = vmatpush1.msra.mxu0 0.0
    %1902 = vmatprep.subr.mxu0 0.0
    %1903 = vmatpush1.msra.mxu0 0.0
    %1904 = vmatprep.subr.mxu0 0.0
    %1905 = vmatpush1.msra.mxu0 0.0
    %1906 = vmatprep.subr.mxu0 0.0
    %1907 = vmatpush1.msra.mxu0 0.0
    %1908 = vmatprep.subr.mxu0 0.0
    %1909 = vmatpush1.msra.mxu0 0.0
    %1910 = vmatprep.subr.mxu0 %v1750
    %1911 = vmatpush1.msra.mxu0 %v1749
    %1912 = vmatprep.subr.mxu0 %v1742
    %1913 = vmatpush1.msra.mxu0 %v1741
    %1914 = vmatprep.subr.mxu0 %v1734
    %1915 = vmatpush1.msra.mxu0 %v1733
    %1916 = vmatprep.subr.mxu0 %v1726
    %1917 = vmatpush1.msra.mxu0 %v1725
    %1918 = vmatprep.subr.mxu0 0.0
    %1919 = vmatpush2.msra.mxu0 0.0
    %1920 = vmatprep.subr.mxu0 0.0
    %1921 = vmatpush2.msra.mxu0 0.0
    %1922 = vmatprep.subr.mxu0 0.0
    %1923 = vmatpush2.msra.mxu0 0.0
    %1924 = vmatprep.subr.mxu0 0.0
    %1925 = vmatpush2.msra.mxu0 0.0
    %1926 = vmatprep.subr.mxu0 0.0
    %1927 = vmatpush2.msra.mxu0 0.0
    %1928 = vmatprep.subr.mxu0 0.0
    %1929 = vmatpush2.msra.mxu0 0.0
    %1930 = vmatprep.subr.mxu0 0.0
    %1931 = vmatpush2.msra.mxu0 0.0
    %1932 = vmatprep.subr.mxu0 0.0
    %1933 = vmatpush2.msra.mxu0 0.0
    %1934 = vmatprep.subr.mxu0 0.0
    %1935 = vmatpush2.msra.mxu0 0.0
    %1936 = vmatprep.subr.mxu0 0.0
    %1937 = vmatpush2.msra.mxu0 0.0
    %1938 = vmatprep.subr.mxu0 0.0
    %1939 = vmatpush2.msra.mxu0 0.0
    %1940 = vmatprep.subr.mxu0 0.0
    %1941 = vmatpush2.msra.mxu0 0.0
    %1942 = vmatprep.subr.mxu0 0.0
    %1943 = vmatpush2.msra.mxu0 0.0
    %1944 = vmatprep.subr.mxu0 0.0
    %1945 = vmatpush2.msra.mxu0 0.0
    %1946 = vmatprep.subr.mxu0 0.0
    %1947 = vmatpush2.msra.mxu0 0.0
    %1948 = vmatprep.subr.mxu0 0.0
    %1949 = vmatpush2.msra.mxu0 0.0
    %1950 = vmatprep.mubr.f32.mxu0 0.0
    %1951 = vmatmul.mubr.f32.gmra.mxu0 %v1786
    %v1952 = vpop.f32.mrf.mxu0
    %v1953 = vadd.f32 %v1768, %v1952
    %v1954 = vpop.f32.mrf.mxu0
    %v1955 = vadd.f32 %v1768, %v1954
    %1956 = vmatprep.mubr.f32.mxu0 0.0
    %1957 = vmatmul.mubr.f32.gmra.mxu0 %v1789
    %v1958 = vpop.f32.mrf.mxu0
    %v1959 = vadd.f32 %v1773, %v1958
    %v1960 = vpop.f32.mrf.mxu0
    %v1961 = vadd.f32 %v1773, %v1960
    %1962 = vmatprep.mubr.f32.mxu0 0.0
    %1963 = vmatmul.mubr.f32.gmra.mxu0 %v1792
    %v1964 = vpop.f32.mrf.mxu0
    %v1965 = vadd.f32 %v1778, %v1964
    %v1966 = vpop.f32.mrf.mxu0
    %v1967 = vadd.f32 %v1778, %v1966
    %1968 = vmatprep.mubr.f32.mxu0 0.0
    %1969 = vmatmul.mubr.f32.gmra.mxu0 %v1795
    %v1970 = vpop.f32.mrf.mxu0
    %v1971 = vadd.f32 %v1783, %v1970
    %v1972 = vpop.f32.mrf.mxu0
    %v1973 = vadd.f32 %v1783, %v1972
    %1974 = vdwg.mxu0
    %1975 = vmatprep.subr.mxu0 0.0
    %1976 = vmatpush1.msra.mxu0 0.0
    %1977 = vmatprep.subr.mxu0 0.0
    %1978 = vmatpush1.msra.mxu0 0.0
    %1979 = vmatprep.subr.mxu0 0.0
    %1980 = vmatpush1.msra.mxu0 0.0
    %1981 = vmatprep.subr.mxu0 0.0
    %1982 = vmatpush1.msra.mxu0 0.0
    %1983 = vmatprep.subr.mxu0 0.0
    %1984 = vmatpush1.msra.mxu0 0.0
    %1985 = vmatprep.subr.mxu0 0.0
    %1986 = vmatpush1.msra.mxu0 0.0
    %1987 = vmatprep.subr.mxu0 0.0
    %1988 = vmatpush1.msra.mxu0 0.0
    %1989 = vmatprep.subr.mxu0 0.0
    %1990 = vmatpush1.msra.mxu0 0.0
    %1991 = vmatprep.subr.mxu0 0.0
    %1992 = vmatpush1.msra.mxu0 0.0
    %1993 = vmatprep.subr.mxu0 0.0
    %1994 = vmatpush1.msra.mxu0 0.0
    %1995 = vmatprep.subr.mxu0 0.0
    %1996 = vmatpush1.msra.mxu0 0.0
    %1997 = vmatprep.subr.mxu0 0.0
    %1998 = vmatpush1.msra.mxu0 0.0
    %1999 = vmatprep.subr.mxu0 %v1752
    %2000 = vmatpush1.msra.mxu0 %v1751
    %2001 = vmatprep.subr.mxu0 %v1744
    %2002 = vmatpush1.msra.mxu0 %v1743
    %2003 = vmatprep.subr.mxu0 %v1736
    %2004 = vmatpush1.msra.mxu0 %v1735
    %2005 = vmatprep.subr.mxu0 %v1728
    %2006 = vmatpush1.msra.mxu0 %v1727
    %2007 = vmatprep.subr.mxu0 0.0
    %2008 = vmatpush2.msra.mxu0 0.0
    %2009 = vmatprep.subr.mxu0 0.0
    %2010 = vmatpush2.msra.mxu0 0.0
    %2011 = vmatprep.subr.mxu0 0.0
    %2012 = vmatpush2.msra.mxu0 0.0
    %2013 = vmatprep.subr.mxu0 0.0
    %2014 = vmatpush2.msra.mxu0 0.0
    %2015 = vmatprep.subr.mxu0 0.0
    %2016 = vmatpush2.msra.mxu0 0.0
    %2017 = vmatprep.subr.mxu0 0.0
    %2018 = vmatpush2.msra.mxu0 0.0
    %2019 = vmatprep.subr.mxu0 0.0
    %2020 = vmatpush2.msra.mxu0 0.0
    %2021 = vmatprep.subr.mxu0 0.0
    %2022 = vmatpush2.msra.mxu0 0.0
    %2023 = vmatprep.subr.mxu0 0.0
    %2024 = vmatpush2.msra.mxu0 0.0
    %2025 = vmatprep.subr.mxu0 0.0
    %2026 = vmatpush2.msra.mxu0 0.0
    %2027 = vmatprep.subr.mxu0 0.0
    %2028 = vmatpush2.msra.mxu0 0.0
    %2029 = vmatprep.subr.mxu0 0.0
    %2030 = vmatpush2.msra.mxu0 0.0
    %2031 = vmatprep.subr.mxu0 0.0
    %2032 = vmatpush2.msra.mxu0 0.0
    %2033 = vmatprep.subr.mxu0 0.0
    %2034 = vmatpush2.msra.mxu0 0.0
    %2035 = vmatprep.subr.mxu0 0.0
    %2036 = vmatpush2.msra.mxu0 0.0
    %2037 = vmatprep.subr.mxu0 0.0
    %2038 = vmatpush2.msra.mxu0 0.0
    %2039 = vmatprep.mubr.f32.mxu0 0.0
    %2040 = vmatmul.mubr.f32.gmra.mxu0 %v1786
    %v2041 = vpop.f32.mrf.mxu0
    %v2042 = vadd.f32 %v1768, %v2041
    %v2043 = vpop.f32.mrf.mxu0
    %v2044 = vadd.f32 %v1768, %v2043
    %2045 = vmatprep.mubr.f32.mxu0 0.0
    %2046 = vmatmul.mubr.f32.gmra.mxu0 %v1789
    %v2047 = vpop.f32.mrf.mxu0
    %v2048 = vadd.f32 %v1773, %v2047
    %v2049 = vpop.f32.mrf.mxu0
    %v2050 = vadd.f32 %v1773, %v2049
    %2051 = vmatprep.mubr.f32.mxu0 0.0
    %2052 = vmatmul.mubr.f32.gmra.mxu0 %v1792
    %v2053 = vpop.f32.mrf.mxu0
    %v2054 = vadd.f32 %v1778, %v2053
    %v2055 = vpop.f32.mrf.mxu0
    %v2056 = vadd.f32 %v1778, %v2055
    %2057 = vmatprep.mubr.f32.mxu0 0.0
    %2058 = vmatmul.mubr.f32.gmra.mxu0 %v1795
    %v2059 = vpop.f32.mrf.mxu0
    %v2060 = vadd.f32 %v1783, %v2059
    %v2061 = vpop.f32.mrf.mxu0
    %v2062 = vadd.f32 %v1783, %v2061
    %2063 = vdwg.mxu0
    %2064 = vmatprep.subr.mxu0 0.0
    %2065 = vmatpush1.msra.mxu0 0.0
    %2066 = vmatprep.subr.mxu0 0.0
    %2067 = vmatpush1.msra.mxu0 0.0
    %2068 = vmatprep.subr.mxu0 0.0
    %2069 = vmatpush1.msra.mxu0 0.0
    %2070 = vmatprep.subr.mxu0 0.0
    %2071 = vmatpush1.msra.mxu0 0.0
    %2072 = vmatprep.subr.mxu0 0.0
    %2073 = vmatpush1.msra.mxu0 0.0
    %2074 = vmatprep.subr.mxu0 0.0
    %2075 = vmatpush1.msra.mxu0 0.0
    %2076 = vmatprep.subr.mxu0 0.0
    %2077 = vmatpush1.msra.mxu0 0.0
    %2078 = vmatprep.subr.mxu0 0.0
    %2079 = vmatpush1.msra.mxu0 0.0
    %2080 = vmatprep.subr.mxu0 0.0
    %2081 = vmatpush1.msra.mxu0 0.0
    %2082 = vmatprep.subr.mxu0 0.0
    %2083 = vmatpush1.msra.mxu0 0.0
    %2084 = vmatprep.subr.mxu0 0.0
    %2085 = vmatpush1.msra.mxu0 0.0
    %2086 = vmatprep.subr.mxu0 0.0
    %2087 = vmatpush1.msra.mxu0 0.0
    %2088 = vmatprep.subr.mxu0 %v1754
    %2089 = vmatpush1.msra.mxu0 %v1753
    %2090 = vmatprep.subr.mxu0 %v1746
    %2091 = vmatpush1.msra.mxu0 %v1745
    %2092 = vmatprep.subr.mxu0 %v1738
    %2093 = vmatpush1.msra.mxu0 %v1737
    %2094 = vmatprep.subr.mxu0 %v1730
    %2095 = vmatpush1.msra.mxu0 %v1729
    %2096 = vmatprep.subr.mxu0 0.0
    %2097 = vmatpush2.msra.mxu0 0.0
    %2098 = vmatprep.subr.mxu0 0.0
    %2099 = vmatpush2.msra.mxu0 0.0
    %2100 = vmatprep.subr.mxu0 0.0
    %2101 = vmatpush2.msra.mxu0 0.0
    %2102 = vmatprep.subr.mxu0 0.0
    %2103 = vmatpush2.msra.mxu0 0.0
    %2104 = vmatprep.subr.mxu0 0.0
    %2105 = vmatpush2.msra.mxu0 0.0
    %2106 = vmatprep.subr.mxu0 0.0
    %2107 = vmatpush2.msra.mxu0 0.0
    %2108 = vmatprep.subr.mxu0 0.0
    %2109 = vmatpush2.msra.mxu0 0.0
    %2110 = vmatprep.subr.mxu0 0.0
    %2111 = vmatpush2.msra.mxu0 0.0
    %2112 = vmatprep.subr.mxu0 0.0
    %2113 = vmatpush2.msra.mxu0 0.0
    %2114 = vmatprep.subr.mxu0 0.0
    %2115 = vmatpush2.msra.mxu0 0.0
    %2116 = vmatprep.subr.mxu0 0.0
    %2117 = vmatpush2.msra.mxu0 0.0
    %2118 = vmatprep.subr.mxu0 0.0
    %2119 = vmatpush2.msra.mxu0 0.0
    %2120 = vmatprep.subr.mxu0 0.0
    %2121 = vmatpush2.msra.mxu0 0.0
    %2122 = vmatprep.subr.mxu0 0.0
    %2123 = vmatpush2.msra.mxu0 0.0
    %2124 = vmatprep.subr.mxu0 0.0
    %2125 = vmatpush2.msra.mxu0 0.0
    %2126 = vmatprep.subr.mxu0 0.0
    %2127 = vmatpush2.msra.mxu0 0.0
    %2128 = vmatprep.mubr.f32.mxu0 0.0
    %2129 = vmatmul.mubr.f32.gmra.mxu0 %v1786
    %v2130 = vpop.f32.mrf.mxu0
    %v2131 = vadd.f32 %v1768, %v2130
    %v2132 = vpop.f32.mrf.mxu0
    %v2133 = vadd.f32 %v1768, %v2132
    %2134 = vmatprep.mubr.f32.mxu0 0.0
    %2135 = vmatmul.mubr.f32.gmra.mxu0 %v1789
    %v2136 = vpop.f32.mrf.mxu0
    %v2137 = vadd.f32 %v1773, %v2136
    %v2138 = vpop.f32.mrf.mxu0
    %v2139 = vadd.f32 %v1773, %v2138
    %2140 = vmatprep.mubr.f32.mxu0 0.0
    %2141 = vmatmul.mubr.f32.gmra.mxu0 %v1792
    %v2142 = vpop.f32.mrf.mxu0
    %v2143 = vadd.f32 %v1778, %v2142
    %v2144 = vpop.f32.mrf.mxu0
    %v2145 = vadd.f32 %v1778, %v2144
    %2146 = vmatprep.mubr.f32.mxu0 0.0
    %2147 = vmatmul.mubr.f32.gmra.mxu0 %v1795
    %v2148 = vpop.f32.mrf.mxu0
    %v2149 = vadd.f32 %v1783, %v2148
    %v2150 = vpop.f32.mrf.mxu0
    %v2151 = vadd.f32 %v1783, %v2150
    %2152 = vdwg.mxu0
    %v2153 = vtanh.pop %v1864
    %v2154 = vtanh.pop %v1866
    %v2155 = vtanh.pop %v1953
    %v2156 = vtanh.pop %v1955
    %v2157 = vtanh.pop %v2042
    %v2158 = vtanh.pop %v2044
    %v2159 = vtanh.pop %v2131
    %v2160 = vtanh.pop %v2133
    %v2161 = vtanh.pop %v1870
    %v2162 = vtanh.pop %v1872
    %v2163 = vtanh.pop %v1959
    %v2164 = vtanh.pop %v1961
    %v2165 = vtanh.pop %v2048
    %v2166 = vtanh.pop %v2050
    %v2167 = vtanh.pop %v2137
    %v2168 = vtanh.pop %v2139
    %v2169 = vtanh.pop %v1876
    %v2170 = vtanh.pop %v1878
    %v2171 = vtanh.pop %v1965
    %v2172 = vtanh.pop %v1967
    %v2173 = vtanh.pop %v2054
    %v2174 = vtanh.pop %v2056
    %v2175 = vtanh.pop %v2143
    %v2176 = vtanh.pop %v2145
    %v2177 = vtanh.pop %v1882
    %v2178 = vtanh.pop %v1884
    %v2179 = vtanh.pop %v1971
    %v2180 = vtanh.pop %v1973
    %v2181 = vtanh.pop %v2060
    %v2182 = vtanh.pop %v2062
    %v2183 = vtanh.pop %v2149
    %v2184 = vtanh.pop %v2151
    %s2185 = scalar_lea.vmem %s1, 160
    %v2186 = vld [vmem:[%s2185] sm:$0xff]
    %v2187 = vld [vmem:[%s2185 + $0x8] sm:$0xff]
    %v2188 = vld [vmem:[%s2185 + $0x10] sm:$0xff]
    %v2189 = vld [vmem:[%s2185 + $0x18] sm:$0xff]
    %s2190 = scalar_lea.vmem %s2, 160
    %v2191 = vld [vmem:[%s2190] sm:$0xff]
    %v2192 = vld [vmem:[%s2190 + $0x8] sm:$0xff]
    %v2193 = vld [vmem:[%s2190 + $0x10] sm:$0xff]
    %v2194 = vld [vmem:[%s2190 + $0x18] sm:$0xff]
    %2196 = vset.pattern.permute.xlu0 0
    %2197 = vperm.xlu0 %2196, %v2191
    %v2198 = vpop.permute.xlu0 %2197
    %2201 = vset.pattern.permute.xlu0 0
    %2202 = vperm.xlu0 %2201, %v2192
    %v2203 = vpop.permute.xlu0 %2202
    %2206 = vset.pattern.permute.xlu0 0
    %2207 = vperm.xlu0 %2206, %v2193
    %v2208 = vpop.permute.xlu0 %2207
    %2211 = vset.pattern.permute.xlu0 0
    %2212 = vperm.xlu0 %2211, %v2194
    %v2213 = vpop.permute.xlu0 %2212
    %v2216 = vsel %vm494, %v2186, 0
    %v2219 = vsel %vm494, %v2187, 0
    %v2222 = vsel %vm494, %v2188, 0
    %v2225 = vsel %vm494, %v2189, 0
    %2227 = vmatprep.subr.mxu0 0.0
    %2228 = vmatpush1.msra.mxu0 0.0
    %2229 = vmatprep.subr.mxu0 0.0
    %2230 = vmatpush1.msra.mxu0 0.0
    %2231 = vmatprep.subr.mxu0 0.0
    %2232 = vmatpush1.msra.mxu0 0.0
    %2233 = vmatprep.subr.mxu0 0.0
    %2234 = vmatpush1.msra.mxu0 0.0
    %2235 = vmatprep.subr.mxu0 0.0
    %2236 = vmatpush1.msra.mxu0 0.0
    %2237 = vmatprep.subr.mxu0 0.0
    %2238 = vmatpush1.msra.mxu0 0.0
    %2239 = vmatprep.subr.mxu0 0.0
    %2240 = vmatpush1.msra.mxu0 0.0
    %2241 = vmatprep.subr.mxu0 0.0
    %2242 = vmatpush1.msra.mxu0 0.0
    %2243 = vmatprep.subr.mxu0 0.0
    %2244 = vmatpush1.msra.mxu0 0.0
    %2245 = vmatprep.subr.mxu0 0.0
    %2246 = vmatpush1.msra.mxu0 0.0
    %2247 = vmatprep.subr.mxu0 0.0
    %2248 = vmatpush1.msra.mxu0 0.0
    %2249 = vmatprep.subr.mxu0 0.0
    %2250 = vmatpush1.msra.mxu0 0.0
    %2251 = vmatprep.subr.mxu0 %v2178
    %2252 = vmatpush1.msra.mxu0 %v2177
    %2253 = vmatprep.subr.mxu0 %v2170
    %2254 = vmatpush1.msra.mxu0 %v2169
    %2255 = vmatprep.subr.mxu0 %v2162
    %2256 = vmatpush1.msra.mxu0 %v2161
    %2257 = vmatprep.subr.mxu0 %v2154
    %2258 = vmatpush1.msra.mxu0 %v2153
    %2259 = vmatprep.subr.mxu0 0.0
    %2260 = vmatpush2.msra.mxu0 0.0
    %2261 = vmatprep.subr.mxu0 0.0
    %2262 = vmatpush2.msra.mxu0 0.0
    %2263 = vmatprep.subr.mxu0 0.0
    %2264 = vmatpush2.msra.mxu0 0.0
    %2265 = vmatprep.subr.mxu0 0.0
    %2266 = vmatpush2.msra.mxu0 0.0
    %2267 = vmatprep.subr.mxu0 0.0
    %2268 = vmatpush2.msra.mxu0 0.0
    %2269 = vmatprep.subr.mxu0 0.0
    %2270 = vmatpush2.msra.mxu0 0.0
    %2271 = vmatprep.subr.mxu0 0.0
    %2272 = vmatpush2.msra.mxu0 0.0
    %2273 = vmatprep.subr.mxu0 0.0
    %2274 = vmatpush2.msra.mxu0 0.0
    %2275 = vmatprep.subr.mxu0 0.0
    %2276 = vmatpush2.msra.mxu0 0.0
    %2277 = vmatprep.subr.mxu0 0.0
    %2278 = vmatpush2.msra.mxu0 0.0
    %2279 = vmatprep.subr.mxu0 0.0
    %2280 = vmatpush2.msra.mxu0 0.0
    %2281 = vmatprep.subr.mxu0 0.0
    %2282 = vmatpush2.msra.mxu0 0.0
    %2283 = vmatprep.subr.mxu0 0.0
    %2284 = vmatpush2.msra.mxu0 0.0
    %2285 = vmatprep.subr.mxu0 0.0
    %2286 = vmatpush2.msra.mxu0 0.0
    %2287 = vmatprep.subr.mxu0 0.0
    %2288 = vmatpush2.msra.mxu0 0.0
    %2289 = vmatprep.subr.mxu0 0.0
    %2290 = vmatpush2.msra.mxu0 0.0
    %2291 = vmatprep.mubr.f32.mxu0 0.0
    %2292 = vmatmul.mubr.f32.gmra.mxu0 %v2216
    %v2293 = vpop.f32.mrf.mxu0
    %v2294 = vadd.f32 %v2198, %v2293
    %v2295 = vpop.f32.mrf.mxu0
    %v2296 = vadd.f32 %v2198, %v2295
    %2297 = vmatprep.mubr.f32.mxu0 0.0
    %2298 = vmatmul.mubr.f32.gmra.mxu0 %v2219
    %v2299 = vpop.f32.mrf.mxu0
    %v2300 = vadd.f32 %v2203, %v2299
    %v2301 = vpop.f32.mrf.mxu0
    %v2302 = vadd.f32 %v2203, %v2301
    %2303 = vmatprep.mubr.f32.mxu0 0.0
    %2304 = vmatmul.mubr.f32.gmra.mxu0 %v2222
    %v2305 = vpop.f32.mrf.mxu0
    %v2306 = vadd.f32 %v2208, %v2305
    %v2307 = vpop.f32.mrf.mxu0
    %v2308 = vadd.f32 %v2208, %v2307
    %2309 = vmatprep.mubr.f32.mxu0 0.0
    %2310 = vmatmul.mubr.f32.gmra.mxu0 %v2225
    %v2311 = vpop.f32.mrf.mxu0
    %v2312 = vadd.f32 %v2213, %v2311
    %v2313 = vpop.f32.mrf.mxu0
    %v2314 = vadd.f32 %v2213, %v2313
    %2315 = vdwg.mxu0
    %2316 = vmatprep.subr.mxu0 0.0
    %2317 = vmatpush1.msra.mxu0 0.0
    %2318 = vmatprep.subr.mxu0 0.0
    %2319 = vmatpush1.msra.mxu0 0.0
    %2320 = vmatprep.subr.mxu0 0.0
    %2321 = vmatpush1.msra.mxu0 0.0
    %2322 = vmatprep.subr.mxu0 0.0
    %2323 = vmatpush1.msra.mxu0 0.0
    %2324 = vmatprep.subr.mxu0 0.0
    %2325 = vmatpush1.msra.mxu0 0.0
    %2326 = vmatprep.subr.mxu0 0.0
    %2327 = vmatpush1.msra.mxu0 0.0
    %2328 = vmatprep.subr.mxu0 0.0
    %2329 = vmatpush1.msra.mxu0 0.0
    %2330 = vmatprep.subr.mxu0 0.0
    %2331 = vmatpush1.msra.mxu0 0.0
    %2332 = vmatprep.subr.mxu0 0.0
    %2333 = vmatpush1.msra.mxu0 0.0
    %2334 = vmatprep.subr.mxu0 0.0
    %2335 = vmatpush1.msra.mxu0 0.0
    %2336 = vmatprep.subr.mxu0 0.0
    %2337 = vmatpush1.msra.mxu0 0.0
    %2338 = vmatprep.subr.mxu0 0.0
    %2339 = vmatpush1.msra.mxu0 0.0
    %2340 = vmatprep.subr.mxu0 %v2180
    %2341 = vmatpush1.msra.mxu0 %v2179
    %2342 = vmatprep.subr.mxu0 %v2172
    %2343 = vmatpush1.msra.mxu0 %v2171
    %2344 = vmatprep.subr.mxu0 %v2164
    %2345 = vmatpush1.msra.mxu0 %v2163
    %2346 = vmatprep.subr.mxu0 %v2156
    %2347 = vmatpush1.msra.mxu0 %v2155
    %2348 = vmatprep.subr.mxu0 0.0
    %2349 = vmatpush2.msra.mxu0 0.0
    %2350 = vmatprep.subr.mxu0 0.0
    %2351 = vmatpush2.msra.mxu0 0.0
    %2352 = vmatprep.subr.mxu0 0.0
    %2353 = vmatpush2.msra.mxu0 0.0
    %2354 = vmatprep.subr.mxu0 0.0
    %2355 = vmatpush2.msra.mxu0 0.0
    %2356 = vmatprep.subr.mxu0 0.0
    %2357 = vmatpush2.msra.mxu0 0.0
    %2358 = vmatprep.subr.mxu0 0.0
    %2359 = vmatpush2.msra.mxu0 0.0
    %2360 = vmatprep.subr.mxu0 0.0
    %2361 = vmatpush2.msra.mxu0 0.0
    %2362 = vmatprep.subr.mxu0 0.0
    %2363 = vmatpush2.msra.mxu0 0.0
    %2364 = vmatprep.subr.mxu0 0.0
    %2365 = vmatpush2.msra.mxu0 0.0
    %2366 = vmatprep.subr.mxu0 0.0
    %2367 = vmatpush2.msra.mxu0 0.0
    %2368 = vmatprep.subr.mxu0 0.0
    %2369 = vmatpush2.msra.mxu0 0.0
    %2370 = vmatprep.subr.mxu0 0.0
    %2371 = vmatpush2.msra.mxu0 0.0
    %2372 = vmatprep.subr.mxu0 0.0
    %2373 = vmatpush2.msra.mxu0 0.0
    %2374 = vmatprep.subr.mxu0 0.0
    %2375 = vmatpush2.msra.mxu0 0.0
    %2376 = vmatprep.subr.mxu0 0.0
    %2377 = vmatpush2.msra.mxu0 0.0
    %2378 = vmatprep.subr.mxu0 0.0
    %2379 = vmatpush2.msra.mxu0 0.0
    %2380 = vmatprep.mubr.f32.mxu0 0.0
    %2381 = vmatmul.mubr.f32.gmra.mxu0 %v2216
    %v2382 = vpop.f32.mrf.mxu0
    %v2383 = vadd.f32 %v2198, %v2382
    %v2384 = vpop.f32.mrf.mxu0
    %v2385 = vadd.f32 %v2198, %v2384
    %2386 = vmatprep.mubr.f32.mxu0 0.0
    %2387 = vmatmul.mubr.f32.gmra.mxu0 %v2219
    %v2388 = vpop.f32.mrf.mxu0
    %v2389 = vadd.f32 %v2203, %v2388
    %v2390 = vpop.f32.mrf.mxu0
    %v2391 = vadd.f32 %v2203, %v2390
    %2392 = vmatprep.mubr.f32.mxu0 0.0
    %2393 = vmatmul.mubr.f32.gmra.mxu0 %v2222
    %v2394 = vpop.f32.mrf.mxu0
    %v2395 = vadd.f32 %v2208, %v2394
    %v2396 = vpop.f32.mrf.mxu0
    %v2397 = vadd.f32 %v2208, %v2396
    %2398 = vmatprep.mubr.f32.mxu0 0.0
    %2399 = vmatmul.mubr.f32.gmra.mxu0 %v2225
    %v2400 = vpop.f32.mrf.mxu0
    %v2401 = vadd.f32 %v2213, %v2400
    %v2402 = vpop.f32.mrf.mxu0
    %v2403 = vadd.f32 %v2213, %v2402
    %2404 = vdwg.mxu0
    %2405 = vmatprep.subr.mxu0 0.0
    %2406 = vmatpush1.msra.mxu0 0.0
    %2407 = vmatprep.subr.mxu0 0.0
    %2408 = vmatpush1.msra.mxu0 0.0
    %2409 = vmatprep.subr.mxu0 0.0
    %2410 = vmatpush1.msra.mxu0 0.0
    %2411 = vmatprep.subr.mxu0 0.0
    %2412 = vmatpush1.msra.mxu0 0.0
    %2413 = vmatprep.subr.mxu0 0.0
    %2414 = vmatpush1.msra.mxu0 0.0
    %2415 = vmatprep.subr.mxu0 0.0
    %2416 = vmatpush1.msra.mxu0 0.0
    %2417 = vmatprep.subr.mxu0 0.0
    %2418 = vmatpush1.msra.mxu0 0.0
    %2419 = vmatprep.subr.mxu0 0.0
    %2420 = vmatpush1.msra.mxu0 0.0
    %2421 = vmatprep.subr.mxu0 0.0
    %2422 = vmatpush1.msra.mxu0 0.0
    %2423 = vmatprep.subr.mxu0 0.0
    %2424 = vmatpush1.msra.mxu0 0.0
    %2425 = vmatprep.subr.mxu0 0.0
    %2426 = vmatpush1.msra.mxu0 0.0
    %2427 = vmatprep.subr.mxu0 0.0
    %2428 = vmatpush1.msra.mxu0 0.0
    %2429 = vmatprep.subr.mxu0 %v2182
    %2430 = vmatpush1.msra.mxu0 %v2181
    %2431 = vmatprep.subr.mxu0 %v2174
    %2432 = vmatpush1.msra.mxu0 %v2173
    %2433 = vmatprep.subr.mxu0 %v2166
    %2434 = vmatpush1.msra.mxu0 %v2165
    %2435 = vmatprep.subr.mxu0 %v2158
    %2436 = vmatpush1.msra.mxu0 %v2157
    %2437 = vmatprep.subr.mxu0 0.0
    %2438 = vmatpush2.msra.mxu0 0.0
    %2439 = vmatprep.subr.mxu0 0.0
    %2440 = vmatpush2.msra.mxu0 0.0
    %2441 = vmatprep.subr.mxu0 0.0
    %2442 = vmatpush2.msra.mxu0 0.0
    %2443 = vmatprep.subr.mxu0 0.0
    %2444 = vmatpush2.msra.mxu0 0.0
    %2445 = vmatprep.subr.mxu0 0.0
    %2446 = vmatpush2.msra.mxu0 0.0
    %2447 = vmatprep.subr.mxu0 0.0
    %2448 = vmatpush2.msra.mxu0 0.0
    %2449 = vmatprep.subr.mxu0 0.0
    %2450 = vmatpush2.msra.mxu0 0.0
    %2451 = vmatprep.subr.mxu0 0.0
    %2452 = vmatpush2.msra.mxu0 0.0
    %2453 = vmatprep.subr.mxu0 0.0
    %2454 = vmatpush2.msra.mxu0 0.0
    %2455 = vmatprep.subr.mxu0 0.0
    %2456 = vmatpush2.msra.mxu0 0.0
    %2457 = vmatprep.subr.mxu0 0.0
    %2458 = vmatpush2.msra.mxu0 0.0
    %2459 = vmatprep.subr.mxu0 0.0
    %2460 = vmatpush2.msra.mxu0 0.0
    %2461 = vmatprep.subr.mxu0 0.0
    %2462 = vmatpush2.msra.mxu0 0.0
    %2463 = vmatprep.subr.mxu0 0.0
    %2464 = vmatpush2.msra.mxu0 0.0
    %2465 = vmatprep.subr.mxu0 0.0
    %2466 = vmatpush2.msra.mxu0 0.0
    %2467 = vmatprep.subr.mxu0 0.0
    %2468 = vmatpush2.msra.mxu0 0.0
    %2469 = vmatprep.mubr.f32.mxu0 0.0
    %2470 = vmatmul.mubr.f32.gmra.mxu0 %v2216
    %v2471 = vpop.f32.mrf.mxu0
    %v2472 = vadd.f32 %v2198, %v2471
    %v2473 = vpop.f32.mrf.mxu0
    %v2474 = vadd.f32 %v2198, %v2473
    %2475 = vmatprep.mubr.f32.mxu0 0.0
    %2476 = vmatmul.mubr.f32.gmra.mxu0 %v2219
    %v2477 = vpop.f32.mrf.mxu0
    %v2478 = vadd.f32 %v2203, %v2477
    %v2479 = vpop.f32.mrf.mxu0
    %v2480 = vadd.f32 %v2203, %v2479
    %2481 = vmatprep.mubr.f32.mxu0 0.0
    %2482 = vmatmul.mubr.f32.gmra.mxu0 %v2222
    %v2483 = vpop.f32.mrf.mxu0
    %v2484 = vadd.f32 %v2208, %v2483
    %v2485 = vpop.f32.mrf.mxu0
    %v2486 = vadd.f32 %v2208, %v2485
    %2487 = vmatprep.mubr.f32.mxu0 0.0
    %2488 = vmatmul.mubr.f32.gmra.mxu0 %v2225
    %v2489 = vpop.f32.mrf.mxu0
    %v2490 = vadd.f32 %v2213, %v2489
    %v2491 = vpop.f32.mrf.mxu0
    %v2492 = vadd.f32 %v2213, %v2491
    %2493 = vdwg.mxu0
    %2494 = vmatprep.subr.mxu0 0.0
    %2495 = vmatpush1.msra.mxu0 0.0
    %2496 = vmatprep.subr.mxu0 0.0
    %2497 = vmatpush1.msra.mxu0 0.0
    %2498 = vmatprep.subr.mxu0 0.0
    %2499 = vmatpush1.msra.mxu0 0.0
    %2500 = vmatprep.subr.mxu0 0.0
    %2501 = vmatpush1.msra.mxu0 0.0
    %2502 = vmatprep.subr.mxu0 0.0
    %2503 = vmatpush1.msra.mxu0 0.0
    %2504 = vmatprep.subr.mxu0 0.0
    %2505 = vmatpush1.msra.mxu0 0.0
    %2506 = vmatprep.subr.mxu0 0.0
    %2507 = vmatpush1.msra.mxu0 0.0
    %2508 = vmatprep.subr.mxu0 0.0
    %2509 = vmatpush1.msra.mxu0 0.0
    %2510 = vmatprep.subr.mxu0 0.0
    %2511 = vmatpush1.msra.mxu0 0.0
    %2512 = vmatprep.subr.mxu0 0.0
    %2513 = vmatpush1.msra.mxu0 0.0
    %2514 = vmatprep.subr.mxu0 0.0
    %2515 = vmatpush1.msra.mxu0 0.0
    %2516 = vmatprep.subr.mxu0 0.0
    %2517 = vmatpush1.msra.mxu0 0.0
    %2518 = vmatprep.subr.mxu0 %v2184
    %2519 = vmatpush1.msra.mxu0 %v2183
    %2520 = vmatprep.subr.mxu0 %v2176
    %2521 = vmatpush1.msra.mxu0 %v2175
    %2522 = vmatprep.subr.mxu0 %v2168
    %2523 = vmatpush1.msra.mxu0 %v2167
    %2524 = vmatprep.subr.mxu0 %v2160
    %2525 = vmatpush1.msra.mxu0 %v2159
    %2526 = vmatprep.subr.mxu0 0.0
    %2527 = vmatpush2.msra.mxu0 0.0
    %2528 = vmatprep.subr.mxu0 0.0
    %2529 = vmatpush2.msra.mxu0 0.0
    %2530 = vmatprep.subr.mxu0 0.0
    %2531 = vmatpush2.msra.mxu0 0.0
    %2532 = vmatprep.subr.mxu0 0.0
    %2533 = vmatpush2.msra.mxu0 0.0
    %2534 = vmatprep.subr.mxu0 0.0
    %2535 = vmatpush2.msra.mxu0 0.0
    %2536 = vmatprep.subr.mxu0 0.0
    %2537 = vmatpush2.msra.mxu0 0.0
    %2538 = vmatprep.subr.mxu0 0.0
    %2539 = vmatpush2.msra.mxu0 0.0
    %2540 = vmatprep.subr.mxu0 0.0
    %2541 = vmatpush2.msra.mxu0 0.0
    %2542 = vmatprep.subr.mxu0 0.0
    %2543 = vmatpush2.msra.mxu0 0.0
    %2544 = vmatprep.subr.mxu0 0.0
    %2545 = vmatpush2.msra.mxu0 0.0
    %2546 = vmatprep.subr.mxu0 0.0
    %2547 = vmatpush2.msra.mxu0 0.0
    %2548 = vmatprep.subr.mxu0 0.0
    %2549 = vmatpush2.msra.mxu0 0.0
    %2550 = vmatprep.subr.mxu0 0.0
    %2551 = vmatpush2.msra.mxu0 0.0
    %2552 = vmatprep.subr.mxu0 0.0
    %2553 = vmatpush2.msra.mxu0 0.0
    %2554 = vmatprep.subr.mxu0 0.0
    %2555 = vmatpush2.msra.mxu0 0.0
    %2556 = vmatprep.subr.mxu0 0.0
    %2557 = vmatpush2.msra.mxu0 0.0
    %2558 = vmatprep.mubr.f32.mxu0 0.0
    %2559 = vmatmul.mubr.f32.gmra.mxu0 %v2216
    %v2560 = vpop.f32.mrf.mxu0
    %v2561 = vadd.f32 %v2198, %v2560
    %v2562 = vpop.f32.mrf.mxu0
    %v2563 = vadd.f32 %v2198, %v2562
    %2564 = vmatprep.mubr.f32.mxu0 0.0
    %2565 = vmatmul.mubr.f32.gmra.mxu0 %v2219
    %v2566 = vpop.f32.mrf.mxu0
    %v2567 = vadd.f32 %v2203, %v2566
    %v2568 = vpop.f32.mrf.mxu0
    %v2569 = vadd.f32 %v2203, %v2568
    %2570 = vmatprep.mubr.f32.mxu0 0.0
    %2571 = vmatmul.mubr.f32.gmra.mxu0 %v2222
    %v2572 = vpop.f32.mrf.mxu0
    %v2573 = vadd.f32 %v2208, %v2572
    %v2574 = vpop.f32.mrf.mxu0
    %v2575 = vadd.f32 %v2208, %v2574
    %2576 = vmatprep.mubr.f32.mxu0 0.0
    %2577 = vmatmul.mubr.f32.gmra.mxu0 %v2225
    %v2578 = vpop.f32.mrf.mxu0
    %v2579 = vadd.f32 %v2213, %v2578
    %v2580 = vpop.f32.mrf.mxu0
    %v2581 = vadd.f32 %v2213, %v2580
    %2582 = vdwg.mxu0
    %v2583 = vtanh.pop %v2294
    %v2584 = vtanh.pop %v2296
    %v2585 = vtanh.pop %v2383
    %v2586 = vtanh.pop %v2385
    %v2587 = vtanh.pop %v2472
    %v2588 = vtanh.pop %v2474
    %v2589 = vtanh.pop %v2561
    %v2590 = vtanh.pop %v2563
    %v2591 = vtanh.pop %v2300
    %v2592 = vtanh.pop %v2302
    %v2593 = vtanh.pop %v2389
    %v2594 = vtanh.pop %v2391
    %v2595 = vtanh.pop %v2478
    %v2596 = vtanh.pop %v2480
    %v2597 = vtanh.pop %v2567
    %v2598 = vtanh.pop %v2569
    %v2599 = vtanh.pop %v2306
    %v2600 = vtanh.pop %v2308
    %v2601 = vtanh.pop %v2395
    %v2602 = vtanh.pop %v2397
    %v2603 = vtanh.pop %v2484
    %v2604 = vtanh.pop %v2486
    %v2605 = vtanh.pop %v2573
    %v2606 = vtanh.pop %v2575
    %v2607 = vtanh.pop %v2312
    %v2608 = vtanh.pop %v2314
    %v2609 = vtanh.pop %v2401
    %v2610 = vtanh.pop %v2403
    %v2611 = vtanh.pop %v2490
    %v2612 = vtanh.pop %v2492
    %v2613 = vtanh.pop %v2579
    %v2614 = vtanh.pop %v2581
    %s2615 = scalar_lea.vmem %s1, 192
    %v2616 = vld [vmem:[%s2615] sm:$0xff]
    %v2617 = vld [vmem:[%s2615 + $0x8] sm:$0xff]
    %v2618 = vld [vmem:[%s2615 + $0x10] sm:$0xff]
    %v2619 = vld [vmem:[%s2615 + $0x18] sm:$0xff]
    %s2620 = scalar_lea.vmem %s2, 192
    %v2621 = vld [vmem:[%s2620] sm:$0xff]
    %v2622 = vld [vmem:[%s2620 + $0x8] sm:$0xff]
    %v2623 = vld [vmem:[%s2620 + $0x10] sm:$0xff]
    %v2624 = vld [vmem:[%s2620 + $0x18] sm:$0xff]
    %2626 = vset.pattern.permute.xlu0 0
    %2627 = vperm.xlu0 %2626, %v2621
    %v2628 = vpop.permute.xlu0 %2627
    %2631 = vset.pattern.permute.xlu0 0
    %2632 = vperm.xlu0 %2631, %v2622
    %v2633 = vpop.permute.xlu0 %2632
    %2636 = vset.pattern.permute.xlu0 0
    %2637 = vperm.xlu0 %2636, %v2623
    %v2638 = vpop.permute.xlu0 %2637
    %2641 = vset.pattern.permute.xlu0 0
    %2642 = vperm.xlu0 %2641, %v2624
    %v2643 = vpop.permute.xlu0 %2642
    %v2646 = vsel %vm494, %v2616, 0
    %v2649 = vsel %vm494, %v2617, 0
    %v2652 = vsel %vm494, %v2618, 0
    %v2655 = vsel %vm494, %v2619, 0
    %2657 = vmatprep.subr.mxu0 0.0
    %2658 = vmatpush1.msra.mxu0 0.0
    %2659 = vmatprep.subr.mxu0 0.0
    %2660 = vmatpush1.msra.mxu0 0.0
    %2661 = vmatprep.subr.mxu0 0.0
    %2662 = vmatpush1.msra.mxu0 0.0
    %2663 = vmatprep.subr.mxu0 0.0
    %2664 = vmatpush1.msra.mxu0 0.0
    %2665 = vmatprep.subr.mxu0 0.0
    %2666 = vmatpush1.msra.mxu0 0.0
    %2667 = vmatprep.subr.mxu0 0.0
    %2668 = vmatpush1.msra.mxu0 0.0
    %2669 = vmatprep.subr.mxu0 0.0
    %2670 = vmatpush1.msra.mxu0 0.0
    %2671 = vmatprep.subr.mxu0 0.0
    %2672 = vmatpush1.msra.mxu0 0.0
    %2673 = vmatprep.subr.mxu0 0.0
    %2674 = vmatpush1.msra.mxu0 0.0
    %2675 = vmatprep.subr.mxu0 0.0
    %2676 = vmatpush1.msra.mxu0 0.0
    %2677 = vmatprep.subr.mxu0 0.0
    %2678 = vmatpush1.msra.mxu0 0.0
    %2679 = vmatprep.subr.mxu0 0.0
    %2680 = vmatpush1.msra.mxu0 0.0
    %2681 = vmatprep.subr.mxu0 %v2608
    %2682 = vmatpush1.msra.mxu0 %v2607
    %2683 = vmatprep.subr.mxu0 %v2600
    %2684 = vmatpush1.msra.mxu0 %v2599
    %2685 = vmatprep.subr.mxu0 %v2592
    %2686 = vmatpush1.msra.mxu0 %v2591
    %2687 = vmatprep.subr.mxu0 %v2584
    %2688 = vmatpush1.msra.mxu0 %v2583
    %2689 = vmatprep.subr.mxu0 0.0
    %2690 = vmatpush2.msra.mxu0 0.0
    %2691 = vmatprep.subr.mxu0 0.0
    %2692 = vmatpush2.msra.mxu0 0.0
    %2693 = vmatprep.subr.mxu0 0.0
    %2694 = vmatpush2.msra.mxu0 0.0
    %2695 = vmatprep.subr.mxu0 0.0
    %2696 = vmatpush2.msra.mxu0 0.0
    %2697 = vmatprep.subr.mxu0 0.0
    %2698 = vmatpush2.msra.mxu0 0.0
    %2699 = vmatprep.subr.mxu0 0.0
    %2700 = vmatpush2.msra.mxu0 0.0
    %2701 = vmatprep.subr.mxu0 0.0
    %2702 = vmatpush2.msra.mxu0 0.0
    %2703 = vmatprep.subr.mxu0 0.0
    %2704 = vmatpush2.msra.mxu0 0.0
    %2705 = vmatprep.subr.mxu0 0.0
    %2706 = vmatpush2.msra.mxu0 0.0
    %2707 = vmatprep.subr.mxu0 0.0
    %2708 = vmatpush2.msra.mxu0 0.0
    %2709 = vmatprep.subr.mxu0 0.0
    %2710 = vmatpush2.msra.mxu0 0.0
    %2711 = vmatprep.subr.mxu0 0.0
    %2712 = vmatpush2.msra.mxu0 0.0
    %2713 = vmatprep.subr.mxu0 0.0
    %2714 = vmatpush2.msra.mxu0 0.0
    %2715 = vmatprep.subr.mxu0 0.0
    %2716 = vmatpush2.msra.mxu0 0.0
    %2717 = vmatprep.subr.mxu0 0.0
    %2718 = vmatpush2.msra.mxu0 0.0
    %2719 = vmatprep.subr.mxu0 0.0
    %2720 = vmatpush2.msra.mxu0 0.0
    %2721 = vmatprep.mubr.f32.mxu0 0.0
    %2722 = vmatmul.mubr.f32.gmra.mxu0 %v2646
    %v2723 = vpop.f32.mrf.mxu0
    %v2724 = vadd.f32 %v2628, %v2723
    %v2725 = vpop.f32.mrf.mxu0
    %v2726 = vadd.f32 %v2628, %v2725
    %2727 = vmatprep.mubr.f32.mxu0 0.0
    %2728 = vmatmul.mubr.f32.gmra.mxu0 %v2649
    %v2729 = vpop.f32.mrf.mxu0
    %v2730 = vadd.f32 %v2633, %v2729
    %v2731 = vpop.f32.mrf.mxu0
    %v2732 = vadd.f32 %v2633, %v2731
    %2733 = vmatprep.mubr.f32.mxu0 0.0
    %2734 = vmatmul.mubr.f32.gmra.mxu0 %v2652
    %v2735 = vpop.f32.mrf.mxu0
    %v2736 = vadd.f32 %v2638, %v2735
    %v2737 = vpop.f32.mrf.mxu0
    %v2738 = vadd.f32 %v2638, %v2737
    %2739 = vmatprep.mubr.f32.mxu0 0.0
    %2740 = vmatmul.mubr.f32.gmra.mxu0 %v2655
    %v2741 = vpop.f32.mrf.mxu0
    %v2742 = vadd.f32 %v2643, %v2741
    %v2743 = vpop.f32.mrf.mxu0
    %v2744 = vadd.f32 %v2643, %v2743
    %2745 = vdwg.mxu0
    %2746 = vmatprep.subr.mxu0 0.0
    %2747 = vmatpush1.msra.mxu0 0.0
    %2748 = vmatprep.subr.mxu0 0.0
    %2749 = vmatpush1.msra.mxu0 0.0
    %2750 = vmatprep.subr.mxu0 0.0
    %2751 = vmatpush1.msra.mxu0 0.0
    %2752 = vmatprep.subr.mxu0 0.0
    %2753 = vmatpush1.msra.mxu0 0.0
    %2754 = vmatprep.subr.mxu0 0.0
    %2755 = vmatpush1.msra.mxu0 0.0
    %2756 = vmatprep.subr.mxu0 0.0
    %2757 = vmatpush1.msra.mxu0 0.0
    %2758 = vmatprep.subr.mxu0 0.0
    %2759 = vmatpush1.msra.mxu0 0.0
    %2760 = vmatprep.subr.mxu0 0.0
    %2761 = vmatpush1.msra.mxu0 0.0
    %2762 = vmatprep.subr.mxu0 0.0
    %2763 = vmatpush1.msra.mxu0 0.0
    %2764 = vmatprep.subr.mxu0 0.0
    %2765 = vmatpush1.msra.mxu0 0.0
    %2766 = vmatprep.subr.mxu0 0.0
    %2767 = vmatpush1.msra.mxu0 0.0
    %2768 = vmatprep.subr.mxu0 0.0
    %2769 = vmatpush1.msra.mxu0 0.0
    %2770 = vmatprep.subr.mxu0 %v2610
    %2771 = vmatpush1.msra.mxu0 %v2609
    %2772 = vmatprep.subr.mxu0 %v2602
    %2773 = vmatpush1.msra.mxu0 %v2601
    %2774 = vmatprep.subr.mxu0 %v2594
    %2775 = vmatpush1.msra.mxu0 %v2593
    %2776 = vmatprep.subr.mxu0 %v2586
    %2777 = vmatpush1.msra.mxu0 %v2585
    %2778 = vmatprep.subr.mxu0 0.0
    %2779 = vmatpush2.msra.mxu0 0.0
    %2780 = vmatprep.subr.mxu0 0.0
    %2781 = vmatpush2.msra.mxu0 0.0
    %2782 = vmatprep.subr.mxu0 0.0
    %2783 = vmatpush2.msra.mxu0 0.0
    %2784 = vmatprep.subr.mxu0 0.0
    %2785 = vmatpush2.msra.mxu0 0.0
    %2786 = vmatprep.subr.mxu0 0.0
    %2787 = vmatpush2.msra.mxu0 0.0
    %2788 = vmatprep.subr.mxu0 0.0
    %2789 = vmatpush2.msra.mxu0 0.0
    %2790 = vmatprep.subr.mxu0 0.0
    %2791 = vmatpush2.msra.mxu0 0.0
    %2792 = vmatprep.subr.mxu0 0.0
    %2793 = vmatpush2.msra.mxu0 0.0
    %2794 = vmatprep.subr.mxu0 0.0
    %2795 = vmatpush2.msra.mxu0 0.0
    %2796 = vmatprep.subr.mxu0 0.0
    %2797 = vmatpush2.msra.mxu0 0.0
    %2798 = vmatprep.subr.mxu0 0.0
    %2799 = vmatpush2.msra.mxu0 0.0
    %2800 = vmatprep.subr.mxu0 0.0
    %2801 = vmatpush2.msra.mxu0 0.0
    %2802 = vmatprep.subr.mxu0 0.0
    %2803 = vmatpush2.msra.mxu0 0.0
    %2804 = vmatprep.subr.mxu0 0.0
    %2805 = vmatpush2.msra.mxu0 0.0
    %2806 = vmatprep.subr.mxu0 0.0
    %2807 = vmatpush2.msra.mxu0 0.0
    %2808 = vmatprep.subr.mxu0 0.0
    %2809 = vmatpush2.msra.mxu0 0.0
    %2810 = vmatprep.mubr.f32.mxu0 0.0
    %2811 = vmatmul.mubr.f32.gmra.mxu0 %v2646
    %v2812 = vpop.f32.mrf.mxu0
    %v2813 = vadd.f32 %v2628, %v2812
    %v2814 = vpop.f32.mrf.mxu0
    %v2815 = vadd.f32 %v2628, %v2814
    %2816 = vmatprep.mubr.f32.mxu0 0.0
    %2817 = vmatmul.mubr.f32.gmra.mxu0 %v2649
    %v2818 = vpop.f32.mrf.mxu0
    %v2819 = vadd.f32 %v2633, %v2818
    %v2820 = vpop.f32.mrf.mxu0
    %v2821 = vadd.f32 %v2633, %v2820
    %2822 = vmatprep.mubr.f32.mxu0 0.0
    %2823 = vmatmul.mubr.f32.gmra.mxu0 %v2652
    %v2824 = vpop.f32.mrf.mxu0
    %v2825 = vadd.f32 %v2638, %v2824
    %v2826 = vpop.f32.mrf.mxu0
    %v2827 = vadd.f32 %v2638, %v2826
    %2828 = vmatprep.mubr.f32.mxu0 0.0
    %2829 = vmatmul.mubr.f32.gmra.mxu0 %v2655
    %v2830 = vpop.f32.mrf.mxu0
    %v2831 = vadd.f32 %v2643, %v2830
    %v2832 = vpop.f32.mrf.mxu0
    %v2833 = vadd.f32 %v2643, %v2832
    %2834 = vdwg.mxu0
    %2835 = vmatprep.subr.mxu0 0.0
    %2836 = vmatpush1.msra.mxu0 0.0
    %2837 = vmatprep.subr.mxu0 0.0
    %2838 = vmatpush1.msra.mxu0 0.0
    %2839 = vmatprep.subr.mxu0 0.0
    %2840 = vmatpush1.msra.mxu0 0.0
    %2841 = vmatprep.subr.mxu0 0.0
    %2842 = vmatpush1.msra.mxu0 0.0
    %2843 = vmatprep.subr.mxu0 0.0
    %2844 = vmatpush1.msra.mxu0 0.0
    %2845 = vmatprep.subr.mxu0 0.0
    %2846 = vmatpush1.msra.mxu0 0.0
    %2847 = vmatprep.subr.mxu0 0.0
    %2848 = vmatpush1.msra.mxu0 0.0
    %2849 = vmatprep.subr.mxu0 0.0
    %2850 = vmatpush1.msra.mxu0 0.0
    %2851 = vmatprep.subr.mxu0 0.0
    %2852 = vmatpush1.msra.mxu0 0.0
    %2853 = vmatprep.subr.mxu0 0.0
    %2854 = vmatpush1.msra.mxu0 0.0
    %2855 = vmatprep.subr.mxu0 0.0
    %2856 = vmatpush1.msra.mxu0 0.0
    %2857 = vmatprep.subr.mxu0 0.0
    %2858 = vmatpush1.msra.mxu0 0.0
    %2859 = vmatprep.subr.mxu0 %v2612
    %2860 = vmatpush1.msra.mxu0 %v2611
    %2861 = vmatprep.subr.mxu0 %v2604
    %2862 = vmatpush1.msra.mxu0 %v2603
    %2863 = vmatprep.subr.mxu0 %v2596
    %2864 = vmatpush1.msra.mxu0 %v2595
    %2865 = vmatprep.subr.mxu0 %v2588
    %2866 = vmatpush1.msra.mxu0 %v2587
    %2867 = vmatprep.subr.mxu0 0.0
    %2868 = vmatpush2.msra.mxu0 0.0
    %2869 = vmatprep.subr.mxu0 0.0
    %2870 = vmatpush2.msra.mxu0 0.0
    %2871 = vmatprep.subr.mxu0 0.0
    %2872 = vmatpush2.msra.mxu0 0.0
    %2873 = vmatprep.subr.mxu0 0.0
    %2874 = vmatpush2.msra.mxu0 0.0
    %2875 = vmatprep.subr.mxu0 0.0
    %2876 = vmatpush2.msra.mxu0 0.0
    %2877 = vmatprep.subr.mxu0 0.0
    %2878 = vmatpush2.msra.mxu0 0.0
    %2879 = vmatprep.subr.mxu0 0.0
    %2880 = vmatpush2.msra.mxu0 0.0
    %2881 = vmatprep.subr.mxu0 0.0
    %2882 = vmatpush2.msra.mxu0 0.0
    %2883 = vmatprep.subr.mxu0 0.0
    %2884 = vmatpush2.msra.mxu0 0.0
    %2885 = vmatprep.subr.mxu0 0.0
    %2886 = vmatpush2.msra.mxu0 0.0
    %2887 = vmatprep.subr.mxu0 0.0
    %2888 = vmatpush2.msra.mxu0 0.0
    %2889 = vmatprep.subr.mxu0 0.0
    %2890 = vmatpush2.msra.mxu0 0.0
    %2891 = vmatprep.subr.mxu0 0.0
    %2892 = vmatpush2.msra.mxu0 0.0
    %2893 = vmatprep.subr.mxu0 0.0
    %2894 = vmatpush2.msra.mxu0 0.0
    %2895 = vmatprep.subr.mxu0 0.0
    %2896 = vmatpush2.msra.mxu0 0.0
    %2897 = vmatprep.subr.mxu0 0.0
    %2898 = vmatpush2.msra.mxu0 0.0
    %2899 = vmatprep.mubr.f32.mxu0 0.0
    %2900 = vmatmul.mubr.f32.gmra.mxu0 %v2646
    %v2901 = vpop.f32.mrf.mxu0
    %v2902 = vadd.f32 %v2628, %v2901
    %v2903 = vpop.f32.mrf.mxu0
    %v2904 = vadd.f32 %v2628, %v2903
    %2905 = vmatprep.mubr.f32.mxu0 0.0
    %2906 = vmatmul.mubr.f32.gmra.mxu0 %v2649
    %v2907 = vpop.f32.mrf.mxu0
    %v2908 = vadd.f32 %v2633, %v2907
    %v2909 = vpop.f32.mrf.mxu0
    %v2910 = vadd.f32 %v2633, %v2909
    %2911 = vmatprep.mubr.f32.mxu0 0.0
    %2912 = vmatmul.mubr.f32.gmra.mxu0 %v2652
    %v2913 = vpop.f32.mrf.mxu0
    %v2914 = vadd.f32 %v2638, %v2913
    %v2915 = vpop.f32.mrf.mxu0
    %v2916 = vadd.f32 %v2638, %v2915
    %2917 = vmatprep.mubr.f32.mxu0 0.0
    %2918 = vmatmul.mubr.f32.gmra.mxu0 %v2655
    %v2919 = vpop.f32.mrf.mxu0
    %v2920 = vadd.f32 %v2643, %v2919
    %v2921 = vpop.f32.mrf.mxu0
    %v2922 = vadd.f32 %v2643, %v2921
    %2923 = vdwg.mxu0
    %2924 = vmatprep.subr.mxu0 0.0
    %2925 = vmatpush1.msra.mxu0 0.0
    %2926 = vmatprep.subr.mxu0 0.0
    %2927 = vmatpush1.msra.mxu0 0.0
    %2928 = vmatprep.subr.mxu0 0.0
    %2929 = vmatpush1.msra.mxu0 0.0
    %2930 = vmatprep.subr.mxu0 0.0
    %2931 = vmatpush1.msra.mxu0 0.0
    %2932 = vmatprep.subr.mxu0 0.0
    %2933 = vmatpush1.msra.mxu0 0.0
    %2934 = vmatprep.subr.mxu0 0.0
    %2935 = vmatpush1.msra.mxu0 0.0
    %2936 = vmatprep.subr.mxu0 0.0
    %2937 = vmatpush1.msra.mxu0 0.0
    %2938 = vmatprep.subr.mxu0 0.0
    %2939 = vmatpush1.msra.mxu0 0.0
    %2940 = vmatprep.subr.mxu0 0.0
    %2941 = vmatpush1.msra.mxu0 0.0
    %2942 = vmatprep.subr.mxu0 0.0
    %2943 = vmatpush1.msra.mxu0 0.0
    %2944 = vmatprep.subr.mxu0 0.0
    %2945 = vmatpush1.msra.mxu0 0.0
    %2946 = vmatprep.subr.mxu0 0.0
    %2947 = vmatpush1.msra.mxu0 0.0
    %2948 = vmatprep.subr.mxu0 %v2614
    %2949 = vmatpush1.msra.mxu0 %v2613
    %2950 = vmatprep.subr.mxu0 %v2606
    %2951 = vmatpush1.msra.mxu0 %v2605
    %2952 = vmatprep.subr.mxu0 %v2598
    %2953 = vmatpush1.msra.mxu0 %v2597
    %2954 = vmatprep.subr.mxu0 %v2590
    %2955 = vmatpush1.msra.mxu0 %v2589
    %2956 = vmatprep.subr.mxu0 0.0
    %2957 = vmatpush2.msra.mxu0 0.0
    %2958 = vmatprep.subr.mxu0 0.0
    %2959 = vmatpush2.msra.mxu0 0.0
    %2960 = vmatprep.subr.mxu0 0.0
    %2961 = vmatpush2.msra.mxu0 0.0
    %2962 = vmatprep.subr.mxu0 0.0
    %2963 = vmatpush2.msra.mxu0 0.0
    %2964 = vmatprep.subr.mxu0 0.0
    %2965 = vmatpush2.msra.mxu0 0.0
    %2966 = vmatprep.subr.mxu0 0.0
    %2967 = vmatpush2.msra.mxu0 0.0
    %2968 = vmatprep.subr.mxu0 0.0
    %2969 = vmatpush2.msra.mxu0 0.0
    %2970 = vmatprep.subr.mxu0 0.0
    %2971 = vmatpush2.msra.mxu0 0.0
    %2972 = vmatprep.subr.mxu0 0.0
    %2973 = vmatpush2.msra.mxu0 0.0
    %2974 = vmatprep.subr.mxu0 0.0
    %2975 = vmatpush2.msra.mxu0 0.0
    %2976 = vmatprep.subr.mxu0 0.0
    %2977 = vmatpush2.msra.mxu0 0.0
    %2978 = vmatprep.subr.mxu0 0.0
    %2979 = vmatpush2.msra.mxu0 0.0
    %2980 = vmatprep.subr.mxu0 0.0
    %2981 = vmatpush2.msra.mxu0 0.0
    %2982 = vmatprep.subr.mxu0 0.0
    %2983 = vmatpush2.msra.mxu0 0.0
    %2984 = vmatprep.subr.mxu0 0.0
    %2985 = vmatpush2.msra.mxu0 0.0
    %2986 = vmatprep.subr.mxu0 0.0
    %2987 = vmatpush2.msra.mxu0 0.0
    %2988 = vmatprep.mubr.f32.mxu0 0.0
    %2989 = vmatmul.mubr.f32.gmra.mxu0 %v2646
    %v2990 = vpop.f32.mrf.mxu0
    %v2991 = vadd.f32 %v2628, %v2990
    %v2992 = vpop.f32.mrf.mxu0
    %v2993 = vadd.f32 %v2628, %v2992
    %2994 = vmatprep.mubr.f32.mxu0 0.0
    %2995 = vmatmul.mubr.f32.gmra.mxu0 %v2649
    %v2996 = vpop.f32.mrf.mxu0
    %v2997 = vadd.f32 %v2633, %v2996
    %v2998 = vpop.f32.mrf.mxu0
    %v2999 = vadd.f32 %v2633, %v2998
    %3000 = vmatprep.mubr.f32.mxu0 0.0
    %3001 = vmatmul.mubr.f32.gmra.mxu0 %v2652
    %v3002 = vpop.f32.mrf.mxu0
    %v3003 = vadd.f32 %v2638, %v3002
    %v3004 = vpop.f32.mrf.mxu0
    %v3005 = vadd.f32 %v2638, %v3004
    %3006 = vmatprep.mubr.f32.mxu0 0.0
    %3007 = vmatmul.mubr.f32.gmra.mxu0 %v2655
    %v3008 = vpop.f32.mrf.mxu0
    %v3009 = vadd.f32 %v2643, %v3008
    %v3010 = vpop.f32.mrf.mxu0
    %v3011 = vadd.f32 %v2643, %v3010
    %3012 = vdwg.mxu0
    %v3013 = vtanh.pop %v2724
    %v3014 = vtanh.pop %v2726
    %v3015 = vtanh.pop %v2813
    %v3016 = vtanh.pop %v2815
    %v3017 = vtanh.pop %v2902
    %v3018 = vtanh.pop %v2904
    %v3019 = vtanh.pop %v2991
    %v3020 = vtanh.pop %v2993
    %v3021 = vtanh.pop %v2730
    %v3022 = vtanh.pop %v2732
    %v3023 = vtanh.pop %v2819
    %v3024 = vtanh.pop %v2821
    %v3025 = vtanh.pop %v2908
    %v3026 = vtanh.pop %v2910
    %v3027 = vtanh.pop %v2997
    %v3028 = vtanh.pop %v2999
    %v3029 = vtanh.pop %v2736
    %v3030 = vtanh.pop %v2738
    %v3031 = vtanh.pop %v2825
    %v3032 = vtanh.pop %v2827
    %v3033 = vtanh.pop %v2914
    %v3034 = vtanh.pop %v2916
    %v3035 = vtanh.pop %v3003
    %v3036 = vtanh.pop %v3005
    %v3037 = vtanh.pop %v2742
    %v3038 = vtanh.pop %v2744
    %v3039 = vtanh.pop %v2831
    %v3040 = vtanh.pop %v2833
    %v3041 = vtanh.pop %v2920
    %v3042 = vtanh.pop %v2922
    %v3043 = vtanh.pop %v3009
    %v3044 = vtanh.pop %v3011
    %s3045 = scalar_lea.vmem %s1, 224
    %v3046 = vld [vmem:[%s3045] sm:$0xff]
    %v3047 = vld [vmem:[%s3045 + $0x8] sm:$0xff]
    %v3048 = vld [vmem:[%s3045 + $0x10] sm:$0xff]
    %v3049 = vld [vmem:[%s3045 + $0x18] sm:$0xff]
    %s3050 = scalar_lea.vmem %s2, 224
    %v3051 = vld [vmem:[%s3050] sm:$0xff]
    %v3052 = vld [vmem:[%s3050 + $0x8] sm:$0xff]
    %v3053 = vld [vmem:[%s3050 + $0x10] sm:$0xff]
    %v3054 = vld [vmem:[%s3050 + $0x18] sm:$0xff]
    %3056 = vset.pattern.permute.xlu0 0
    %3057 = vperm.xlu0 %3056, %v3051
    %v3058 = vpop.permute.xlu0 %3057
    %3061 = vset.pattern.permute.xlu0 0
    %3062 = vperm.xlu0 %3061, %v3052
    %v3063 = vpop.permute.xlu0 %3062
    %3065 = vset.pattern.permute.xlu0 0
    %3066 = vperm.xlu0 %3065, %v3053
    %v3067 = vpop.permute.xlu0 %3066
    %3069 = vset.pattern.permute.xlu0 0
    %3070 = vperm.xlu0 %3069, %v3054
    %v3071 = vpop.permute.xlu0 %3070
    %v3073 = vsel %vm494, %v3046, 0
    %v3076 = vsel %vm494, %v3047, 0
    %v3079 = vsel %vm494, %v3048, 0
    %v3082 = vsel %vm494, %v3049, 0
    %3084 = vmatprep.subr.mxu0 0.0
    %3085 = vmatpush1.msra.mxu0 0.0
    %3086 = vmatprep.subr.mxu0 0.0
    %3087 = vmatpush1.msra.mxu0 0.0
    %3088 = vmatprep.subr.mxu0 0.0
    %3089 = vmatpush1.msra.mxu0 0.0
    %3090 = vmatprep.subr.mxu0 0.0
    %3091 = vmatpush1.msra.mxu0 0.0
    %3092 = vmatprep.subr.mxu0 0.0
    %3093 = vmatpush1.msra.mxu0 0.0
    %3094 = vmatprep.subr.mxu0 0.0
    %3095 = vmatpush1.msra.mxu0 0.0
    %3096 = vmatprep.subr.mxu0 0.0
    %3097 = vmatpush1.msra.mxu0 0.0
    %3098 = vmatprep.subr.mxu0 0.0
    %3099 = vmatpush1.msra.mxu0 0.0
    %3100 = vmatprep.subr.mxu0 0.0
    %3101 = vmatpush1.msra.mxu0 0.0
    %3102 = vmatprep.subr.mxu0 0.0
    %3103 = vmatpush1.msra.mxu0 0.0
    %3104 = vmatprep.subr.mxu0 0.0
    %3105 = vmatpush1.msra.mxu0 0.0
    %3106 = vmatprep.subr.mxu0 0.0
    %3107 = vmatpush1.msra.mxu0 0.0
    %3108 = vmatprep.subr.mxu0 %v3038
    %3109 = vmatpush1.msra.mxu0 %v3037
    %3110 = vmatprep.subr.mxu0 %v3030
    %3111 = vmatpush1.msra.mxu0 %v3029
    %3112 = vmatprep.subr.mxu0 %v3022
    %3113 = vmatpush1.msra.mxu0 %v3021
    %3114 = vmatprep.subr.mxu0 %v3014
    %3115 = vmatpush1.msra.mxu0 %v3013
    %3116 = vmatprep.subr.mxu0 0.0
    %3117 = vmatpush2.msra.mxu0 0.0
    %3118 = vmatprep.subr.mxu0 0.0
    %3119 = vmatpush2.msra.mxu0 0.0
    %3120 = vmatprep.subr.mxu0 0.0
    %3121 = vmatpush2.msra.mxu0 0.0
    %3122 = vmatprep.subr.mxu0 0.0
    %3123 = vmatpush2.msra.mxu0 0.0
    %3124 = vmatprep.subr.mxu0 0.0
    %3125 = vmatpush2.msra.mxu0 0.0
    %3126 = vmatprep.subr.mxu0 0.0
    %3127 = vmatpush2.msra.mxu0 0.0
    %3128 = vmatprep.subr.mxu0 0.0
    %3129 = vmatpush2.msra.mxu0 0.0
    %3130 = vmatprep.subr.mxu0 0.0
    %3131 = vmatpush2.msra.mxu0 0.0
    %3132 = vmatprep.subr.mxu0 0.0
    %3133 = vmatpush2.msra.mxu0 0.0
    %3134 = vmatprep.subr.mxu0 0.0
    %3135 = vmatpush2.msra.mxu0 0.0
    %3136 = vmatprep.subr.mxu0 0.0
    %3137 = vmatpush2.msra.mxu0 0.0
    %3138 = vmatprep.subr.mxu0 0.0
    %3139 = vmatpush2.msra.mxu0 0.0
    %3140 = vmatprep.subr.mxu0 0.0
    %3141 = vmatpush2.msra.mxu0 0.0
    %3142 = vmatprep.subr.mxu0 0.0
    %3143 = vmatpush2.msra.mxu0 0.0
    %3144 = vmatprep.subr.mxu0 0.0
    %3145 = vmatpush2.msra.mxu0 0.0
    %3146 = vmatprep.subr.mxu0 0.0
    %3147 = vmatpush2.msra.mxu0 0.0
    %3148 = vmatprep.mubr.f32.mxu0 0.0
    %3149 = vmatmul.mubr.f32.gmra.mxu0 %v3073
    %v3150 = vpop.f32.mrf.mxu0
    %v3151 = vadd.f32 %v3058, %v3150
    %v3152 = vpop.f32.mrf.mxu0
    %v3153 = vadd.f32 %v3058, %v3152
    %3154 = vmatprep.mubr.f32.mxu0 0.0
    %3155 = vmatmul.mubr.f32.gmra.mxu0 %v3076
    %v3156 = vpop.f32.mrf.mxu0
    %v3157 = vpop.f32.mrf.mxu0
    %3158 = vmatprep.mubr.f32.mxu0 0.0
    %3159 = vmatmul.mubr.f32.gmra.mxu0 %v3079
    %v3160 = vpop.f32.mrf.mxu0
    %v3161 = vpop.f32.mrf.mxu0
    %3162 = vmatprep.mubr.f32.mxu0 0.0
    %3163 = vmatmul.mubr.f32.gmra.mxu0 %v3082
    %v3164 = vpop.f32.mrf.mxu0
    %v3165 = vpop.f32.mrf.mxu0
    %3166 = vdwg.mxu0
    %3167 = vmatprep.subr.mxu0 0.0
    %3168 = vmatpush1.msra.mxu0 0.0
    %3169 = vmatprep.subr.mxu0 0.0
    %3170 = vmatpush1.msra.mxu0 0.0
    %3171 = vmatprep.subr.mxu0 0.0
    %3172 = vmatpush1.msra.mxu0 0.0
    %3173 = vmatprep.subr.mxu0 0.0
    %3174 = vmatpush1.msra.mxu0 0.0
    %3175 = vmatprep.subr.mxu0 0.0
    %3176 = vmatpush1.msra.mxu0 0.0
    %3177 = vmatprep.subr.mxu0 0.0
    %3178 = vmatpush1.msra.mxu0 0.0
    %3179 = vmatprep.subr.mxu0 0.0
    %3180 = vmatpush1.msra.mxu0 0.0
    %3181 = vmatprep.subr.mxu0 0.0
    %3182 = vmatpush1.msra.mxu0 0.0
    %3183 = vmatprep.subr.mxu0 0.0
    %3184 = vmatpush1.msra.mxu0 0.0
    %3185 = vmatprep.subr.mxu0 0.0
    %3186 = vmatpush1.msra.mxu0 0.0
    %3187 = vmatprep.subr.mxu0 0.0
    %3188 = vmatpush1.msra.mxu0 0.0
    %3189 = vmatprep.subr.mxu0 0.0
    %3190 = vmatpush1.msra.mxu0 0.0
    %3191 = vmatprep.subr.mxu0 %v3040
    %3192 = vmatpush1.msra.mxu0 %v3039
    %3193 = vmatprep.subr.mxu0 %v3032
    %3194 = vmatpush1.msra.mxu0 %v3031
    %3195 = vmatprep.subr.mxu0 %v3024
    %3196 = vmatpush1.msra.mxu0 %v3023
    %3197 = vmatprep.subr.mxu0 %v3016
    %3198 = vmatpush1.msra.mxu0 %v3015
    %3199 = vmatprep.subr.mxu0 0.0
    %3200 = vmatpush2.msra.mxu0 0.0
    %3201 = vmatprep.subr.mxu0 0.0
    %3202 = vmatpush2.msra.mxu0 0.0
    %3203 = vmatprep.subr.mxu0 0.0
    %3204 = vmatpush2.msra.mxu0 0.0
    %3205 = vmatprep.subr.mxu0 0.0
    %3206 = vmatpush2.msra.mxu0 0.0
    %3207 = vmatprep.subr.mxu0 0.0
    %3208 = vmatpush2.msra.mxu0 0.0
    %3209 = vmatprep.subr.mxu0 0.0
    %3210 = vmatpush2.msra.mxu0 0.0
    %3211 = vmatprep.subr.mxu0 0.0
    %3212 = vmatpush2.msra.mxu0 0.0
    %3213 = vmatprep.subr.mxu0 0.0
    %3214 = vmatpush2.msra.mxu0 0.0
    %3215 = vmatprep.subr.mxu0 0.0
    %3216 = vmatpush2.msra.mxu0 0.0
    %3217 = vmatprep.subr.mxu0 0.0
    %3218 = vmatpush2.msra.mxu0 0.0
    %3219 = vmatprep.subr.mxu0 0.0
    %3220 = vmatpush2.msra.mxu0 0.0
    %3221 = vmatprep.subr.mxu0 0.0
    %3222 = vmatpush2.msra.mxu0 0.0
    %3223 = vmatprep.subr.mxu0 0.0
    %3224 = vmatpush2.msra.mxu0 0.0
    %3225 = vmatprep.subr.mxu0 0.0
    %3226 = vmatpush2.msra.mxu0 0.0
    %3227 = vmatprep.subr.mxu0 0.0
    %3228 = vmatpush2.msra.mxu0 0.0
    %3229 = vmatprep.subr.mxu0 0.0
    %3230 = vmatpush2.msra.mxu0 0.0
    %3231 = vmatprep.mubr.f32.mxu0 0.0
    %3232 = vmatmul.mubr.f32.gmra.mxu0 %v3073
    %v3233 = vpop.f32.mrf.mxu0
    %v3234 = vadd.f32 %v3058, %v3233
    %v3235 = vpop.f32.mrf.mxu0
    %v3236 = vadd.f32 %v3058, %v3235
    %3237 = vmatprep.mubr.f32.mxu0 0.0
    %3238 = vmatmul.mubr.f32.gmra.mxu0 %v3076
    %v3239 = vpop.f32.mrf.mxu0
    %v3240 = vpop.f32.mrf.mxu0
    %3241 = vmatprep.mubr.f32.mxu0 0.0
    %3242 = vmatmul.mubr.f32.gmra.mxu0 %v3079
    %v3243 = vpop.f32.mrf.mxu0
    %v3244 = vpop.f32.mrf.mxu0
    %3245 = vmatprep.mubr.f32.mxu0 0.0
    %3246 = vmatmul.mubr.f32.gmra.mxu0 %v3082
    %v3247 = vpop.f32.mrf.mxu0
    %v3248 = vpop.f32.mrf.mxu0
    %3249 = vdwg.mxu0
    %3250 = vmatprep.subr.mxu0 0.0
    %3251 = vmatpush1.msra.mxu0 0.0
    %3252 = vmatprep.subr.mxu0 0.0
    %3253 = vmatpush1.msra.mxu0 0.0
    %3254 = vmatprep.subr.mxu0 0.0
    %3255 = vmatpush1.msra.mxu0 0.0
    %3256 = vmatprep.subr.mxu0 0.0
    %3257 = vmatpush1.msra.mxu0 0.0
    %3258 = vmatprep.subr.mxu0 0.0
    %3259 = vmatpush1.msra.mxu0 0.0
    %3260 = vmatprep.subr.mxu0 0.0
    %3261 = vmatpush1.msra.mxu0 0.0
    %3262 = vmatprep.subr.mxu0 0.0
    %3263 = vmatpush1.msra.mxu0 0.0
    %3264 = vmatprep.subr.mxu0 0.0
    %3265 = vmatpush1.msra.mxu0 0.0
    %3266 = vmatprep.subr.mxu0 0.0
    %3267 = vmatpush1.msra.mxu0 0.0
    %3268 = vmatprep.subr.mxu0 0.0
    %3269 = vmatpush1.msra.mxu0 0.0
    %3270 = vmatprep.subr.mxu0 0.0
    %3271 = vmatpush1.msra.mxu0 0.0
    %3272 = vmatprep.subr.mxu0 0.0
    %3273 = vmatpush1.msra.mxu0 0.0
    %3274 = vmatprep.subr.mxu0 %v3042
    %3275 = vmatpush1.msra.mxu0 %v3041
    %3276 = vmatprep.subr.mxu0 %v3034
    %3277 = vmatpush1.msra.mxu0 %v3033
    %3278 = vmatprep.subr.mxu0 %v3026
    %3279 = vmatpush1.msra.mxu0 %v3025
    %3280 = vmatprep.subr.mxu0 %v3018
    %3281 = vmatpush1.msra.mxu0 %v3017
    %3282 = vmatprep.subr.mxu0 0.0
    %3283 = vmatpush2.msra.mxu0 0.0
    %3284 = vmatprep.subr.mxu0 0.0
    %3285 = vmatpush2.msra.mxu0 0.0
    %3286 = vmatprep.subr.mxu0 0.0
    %3287 = vmatpush2.msra.mxu0 0.0
    %3288 = vmatprep.subr.mxu0 0.0
    %3289 = vmatpush2.msra.mxu0 0.0
    %3290 = vmatprep.subr.mxu0 0.0
    %3291 = vmatpush2.msra.mxu0 0.0
    %3292 = vmatprep.subr.mxu0 0.0
    %3293 = vmatpush2.msra.mxu0 0.0
    %3294 = vmatprep.subr.mxu0 0.0
    %3295 = vmatpush2.msra.mxu0 0.0
    %3296 = vmatprep.subr.mxu0 0.0
    %3297 = vmatpush2.msra.mxu0 0.0
    %3298 = vmatprep.subr.mxu0 0.0
    %3299 = vmatpush2.msra.mxu0 0.0
    %3300 = vmatprep.subr.mxu0 0.0
    %3301 = vmatpush2.msra.mxu0 0.0
    %3302 = vmatprep.subr.mxu0 0.0
    %3303 = vmatpush2.msra.mxu0 0.0
    %3304 = vmatprep.subr.mxu0 0.0
    %3305 = vmatpush2.msra.mxu0 0.0
    %3306 = vmatprep.subr.mxu0 0.0
    %3307 = vmatpush2.msra.mxu0 0.0
    %3308 = vmatprep.subr.mxu0 0.0
    %3309 = vmatpush2.msra.mxu0 0.0
    %3310 = vmatprep.subr.mxu0 0.0
    %3311 = vmatpush2.msra.mxu0 0.0
    %3312 = vmatprep.subr.mxu0 0.0
    %3313 = vmatpush2.msra.mxu0 0.0
    %3314 = vmatprep.mubr.f32.mxu0 0.0
    %3315 = vmatmul.mubr.f32.gmra.mxu0 %v3073
    %v3316 = vpop.f32.mrf.mxu0
    %v3317 = vadd.f32 %v3058, %v3316
    %v3318 = vpop.f32.mrf.mxu0
    %v3319 = vadd.f32 %v3058, %v3318
    %3320 = vmatprep.mubr.f32.mxu0 0.0
    %3321 = vmatmul.mubr.f32.gmra.mxu0 %v3076
    %v3322 = vpop.f32.mrf.mxu0
    %v3323 = vpop.f32.mrf.mxu0
    %3324 = vmatprep.mubr.f32.mxu0 0.0
    %3325 = vmatmul.mubr.f32.gmra.mxu0 %v3079
    %v3326 = vpop.f32.mrf.mxu0
    %v3327 = vpop.f32.mrf.mxu0
    %3328 = vmatprep.mubr.f32.mxu0 0.0
    %3329 = vmatmul.mubr.f32.gmra.mxu0 %v3082
    %v3330 = vpop.f32.mrf.mxu0
    %v3331 = vpop.f32.mrf.mxu0
    %3332 = vdwg.mxu0
    %3333 = vmatprep.subr.mxu0 0.0
    %3334 = vmatpush1.msra.mxu0 0.0
    %3335 = vmatprep.subr.mxu0 0.0
    %3336 = vmatpush1.msra.mxu0 0.0
    %3337 = vmatprep.subr.mxu0 0.0
    %3338 = vmatpush1.msra.mxu0 0.0
    %3339 = vmatprep.subr.mxu0 0.0
    %3340 = vmatpush1.msra.mxu0 0.0
    %3341 = vmatprep.subr.mxu0 0.0
    %3342 = vmatpush1.msra.mxu0 0.0
    %3343 = vmatprep.subr.mxu0 0.0
    %3344 = vmatpush1.msra.mxu0 0.0
    %3345 = vmatprep.subr.mxu0 0.0
    %3346 = vmatpush1.msra.mxu0 0.0
    %3347 = vmatprep.subr.mxu0 0.0
    %3348 = vmatpush1.msra.mxu0 0.0
    %3349 = vmatprep.subr.mxu0 0.0
    %3350 = vmatpush1.msra.mxu0 0.0
    %3351 = vmatprep.subr.mxu0 0.0
    %3352 = vmatpush1.msra.mxu0 0.0
    %3353 = vmatprep.subr.mxu0 0.0
    %3354 = vmatpush1.msra.mxu0 0.0
    %3355 = vmatprep.subr.mxu0 0.0
    %3356 = vmatpush1.msra.mxu0 0.0
    %3357 = vmatprep.subr.mxu0 %v3044
    %3358 = vmatpush1.msra.mxu0 %v3043
    %3359 = vmatprep.subr.mxu0 %v3036
    %3360 = vmatpush1.msra.mxu0 %v3035
    %3361 = vmatprep.subr.mxu0 %v3028
    %3362 = vmatpush1.msra.mxu0 %v3027
    %3363 = vmatprep.subr.mxu0 %v3020
    %3364 = vmatpush1.msra.mxu0 %v3019
    %3365 = vmatprep.subr.mxu0 0.0
    %3366 = vmatpush2.msra.mxu0 0.0
    %3367 = vmatprep.subr.mxu0 0.0
    %3368 = vmatpush2.msra.mxu0 0.0
    %3369 = vmatprep.subr.mxu0 0.0
    %3370 = vmatpush2.msra.mxu0 0.0
    %3371 = vmatprep.subr.mxu0 0.0
    %3372 = vmatpush2.msra.mxu0 0.0
    %3373 = vmatprep.subr.mxu0 0.0
    %3374 = vmatpush2.msra.mxu0 0.0
    %3375 = vmatprep.subr.mxu0 0.0
    %3376 = vmatpush2.msra.mxu0 0.0
    %3377 = vmatprep.subr.mxu0 0.0
    %3378 = vmatpush2.msra.mxu0 0.0
    %3379 = vmatprep.subr.mxu0 0.0
    %3380 = vmatpush2.msra.mxu0 0.0
    %3381 = vmatprep.subr.mxu0 0.0
    %3382 = vmatpush2.msra.mxu0 0.0
    %3383 = vmatprep.subr.mxu0 0.0
    %3384 = vmatpush2.msra.mxu0 0.0
    %3385 = vmatprep.subr.mxu0 0.0
    %3386 = vmatpush2.msra.mxu0 0.0
    %3387 = vmatprep.subr.mxu0 0.0
    %3388 = vmatpush2.msra.mxu0 0.0
    %3389 = vmatprep.subr.mxu0 0.0
    %3390 = vmatpush2.msra.mxu0 0.0
    %3391 = vmatprep.subr.mxu0 0.0
    %3392 = vmatpush2.msra.mxu0 0.0
    %3393 = vmatprep.subr.mxu0 0.0
    %3394 = vmatpush2.msra.mxu0 0.0
    %3395 = vmatprep.subr.mxu0 0.0
    %3396 = vmatpush2.msra.mxu0 0.0
    %3397 = vmatprep.mubr.f32.mxu0 0.0
    %3398 = vmatmul.mubr.f32.gmra.mxu0 %v3073
    %v3399 = vpop.f32.mrf.mxu0
    %v3400 = vadd.f32 %v3058, %v3399
    %v3401 = vpop.f32.mrf.mxu0
    %v3402 = vadd.f32 %v3058, %v3401
    %3403 = vmatprep.mubr.f32.mxu0 0.0
    %3404 = vmatmul.mubr.f32.gmra.mxu0 %v3076
    %v3405 = vpop.f32.mrf.mxu0
    %v3406 = vpop.f32.mrf.mxu0
    %3407 = vmatprep.mubr.f32.mxu0 0.0
    %3408 = vmatmul.mubr.f32.gmra.mxu0 %v3079
    %v3409 = vpop.f32.mrf.mxu0
    %v3410 = vpop.f32.mrf.mxu0
    %3411 = vmatprep.mubr.f32.mxu0 0.0
    %3412 = vmatmul.mubr.f32.gmra.mxu0 %v3082
    %v3413 = vpop.f32.mrf.mxu0
    %v3414 = vpop.f32.mrf.mxu0
    %3415 = vdwg.mxu0
    %v3424 = vcombine.low %v3151, %v3153
    %v3425 = vcombine.low %v3234, %v3236
    %v3426 = vcombine.low %v3317, %v3319
    %v3427 = vcombine.low %v3400, %v3402
    %v3429 = vunpack.c.l.s4 1966171168
    %v3430 = vunpack.c.0.s8 %v3429
    %v3431 = vlaneseq
    %v3432 = vshrl.u32 %v3431, 7
    %v3433 = vsub.s32 %v3430, %v3432
    %v3434 = vrot.slane %v3424, %v3433
    %v3436 = vunpack.c.l.s4 1966171168
    %v3437 = vunpack.c.0.s8 %v3436
    %v3438 = vlaneseq
    %v3439 = vshrl.u32 %v3438, 7
    %v3440 = vsub.s32 %v3437, %v3439
    %v3441 = vrot.slane %v3425, %v3440
    %v3443 = vunpack.c.l.s4 1966171168
    %v3444 = vunpack.c.0.s8 %v3443
    %v3445 = vlaneseq
    %v3446 = vshrl.u32 %v3445, 7
    %v3447 = vsub.s32 %v3444, %v3446
    %v3448 = vrot.slane %v3426, %v3447
    %v3450 = vunpack.c.l.s4 1966171168
    %v3451 = vunpack.c.0.s8 %v3450
    %v3452 = vlaneseq
    %v3453 = vshrl.u32 %v3452, 7
    %v3454 = vsub.s32 %v3451, %v3453
    %v3455 = vrot.slane %v3427, %v3454
    %v3456 = vcombine.low %v3434, %v3441
    %v3457 = vcombine.low %v3448, %v3455
    %v3459 = vunpack.c.l.s4 1966171168
    %v3460 = vunpack.c.0.s8 %v3459
    %v3461 = vlaneseq
    %v3462 = vshrl.u32 %v3461, 7
    %v3463 = vsub.s32 %v3460, %v3462
    %v3464 = vrot.slane %v3456, %v3463
    %v3466 = vunpack.c.l.s4 1966171168
    %v3467 = vunpack.c.0.s8 %v3466
    %v3468 = vlaneseq
    %v3469 = vshrl.u32 %v3468, 7
    %v3470 = vsub.s32 %v3467, %v3469
    %v3471 = vrot.slane %v3457, %v3470
    %v3472 = vcombine.low %v3464, %v3471
    %3474 = vst [vmem:[#allocation5] sm:$0xff] %v3472
    // Predicated region
    $region18: #{_nn_u_pallas.1} parent=1 // pred_check
      _
    $region19: #{_nn_u_pallas.1} parent=1 // pred_check_branch
      %3476 = sbr.rel (0) target = $region21
    $region20: #{_nn_u_pallas.1} parent=1 // pred_region
      %s3478 = ssub.s32 128, 128
      %3479 = vsyncadd [#allocation4], %s3478
      %s3481 = sshll.u32 [#allocation5], 4
      %s3482 = int_to_ptr.vmem [resolvable:$true] %s3481
      %3484 = dma.vmem_to_hbm [thread:$0]  %s3482, 128, %s3, [#allocation4]
    $region21: #{_nn_u_pallas.1} parent=1 // pred_fallthru
      _
    // Predicated region
    $region22: #{_nn_u_pallas.1} parent=1 // pred_check
      _
    $region23: #{_nn_u_pallas.1} parent=1 // pred_check_branch
      %3486 = sbr.rel (0) target = $region25
    $region24: #{_nn_u_pallas.1} parent=1 // pred_region
      %3487 = dma.done [#allocation4], 128
    $region25: #{_nn_u_pallas.1} parent=1 // pred_fallthru
      _
    %3488 = vsyncpa [#allocation3], 1
    %3489 = vsyncpa [#allocation4], 1

</llo_original>
